<compile_context>
chip_gen: v6e
topology: v6e:2x2x1
jax: 0.10.0
libtpu: 0.0.40
codegen_flags: <defaults>
</compile_context>

<pallas_src>
import math

import jax
import jax.numpy as jnp
from jax.experimental import pallas as pl
from jax.experimental.pallas import tpu as pltpu


NUM_HEADS = 8
LN_EPS = 1e-5


def _layernorm(v, gamma, beta, eps=LN_EPS):
    mu = jnp.mean(v, axis=-1, keepdims=True)
    var = jnp.mean((v - mu) * (v - mu), axis=-1, keepdims=True)
    return (v - mu) * jax.lax.rsqrt(var + eps) * gamma + beta


def _gelu_exact(x):
    # nn.GELU() default = exact (erf-based) GELU
    return 0.5 * x * (1.0 + jax.lax.erf(x * 0.7071067811865476))


def self_attention_kernel(x_ref,
                          g1_ref, b1_ref,
                          hmask_ref,
                          wq_ref, bq_ref, wk_ref, bk_ref, wv_ref, bv_ref,
                          wo_ref, bo_ref,
                          g2_ref, b2_ref,
                          w1_ref, bb1_ref, w2_ref, bb2_ref,
                          o_ref):
    x = x_ref[0]                                   # (N, C) f32
    N, C = x.shape
    num_heads = hmask_ref.shape[0]

    # --- LayerNorm (pre-attention), f32 ---
    x_ln = _layernorm(x, g1_ref[...], b1_ref[...])
    x_ln_bf = x_ln.astype(jnp.bfloat16)

    # --- Q/K/V projections: bf16 operands, f32 accumulate on the MXU.
    #     1/sqrt(dh) is already folded into wq/bq (parameter-prep time). ---
    q = jnp.dot(x_ln_bf, wq_ref[...], preferred_element_type=jnp.float32) + bq_ref[...]
    k = jnp.dot(x_ln_bf, wk_ref[...], preferred_element_type=jnp.float32) + bk_ref[...]
    v = jnp.dot(x_ln_bf, wv_ref[...], preferred_element_type=jnp.float32) + bv_ref[...]

    # --- Head-batched attention, no per-head lane slices / lane concatenates.
    #     hmask[h, 0, c] = 1 iff channel c belongs to head h.  Masking Q (resp. V) and
    #     contracting over the full channel axis equals the per-head dh-wide contraction,
    #     using only leading-dim broadcasts + 3-D batched einsums (no relayouts). ---
    hmask = hmask_ref[...]                                            # (H, 1, C) bf16
    qm = q.astype(jnp.bfloat16)[None, :, :] * hmask                   # (H, N, C)
    vm = v.astype(jnp.bfloat16)[None, :, :] * hmask                   # (H, N, C)
    kb = jnp.broadcast_to(k.astype(jnp.bfloat16)[None, :, :], (num_heads, N, C))

    s = jnp.einsum('hnc,hmc->hnm', qm, kb,
                   preferred_element_type=jnp.float32)                # (H, N, N)
    s = s - jnp.max(s, axis=-1, keepdims=True)
    p = jnp.exp(s)
    p = p * pl.reciprocal(jnp.sum(p, axis=-1, keepdims=True), approx=True)

    ctx_h = jnp.einsum('hnm,hmc->hnc', p.astype(jnp.bfloat16), vm,
                       preferred_element_type=jnp.float32)            # (H, N, C)
    ctx = jnp.sum(ctx_h, axis=0)                                      # == concat of heads

    attn = jnp.dot(ctx.astype(jnp.bfloat16), wo_ref[...],
                   preferred_element_type=jnp.float32) + bo_ref[...]

    # residual (dropout is identity in eval mode)
    av = attn + x

    # --- feed-forward: LayerNorm -> Linear -> GELU -> Linear, + residual ---
    h_ln = _layernorm(av, g2_ref[...], b2_ref[...])
    h1 = jnp.dot(h_ln.astype(jnp.bfloat16), w1_ref[...],
                 preferred_element_type=jnp.float32) + bb1_ref[...]
    h1 = _gelu_exact(h1)
    h2 = jnp.dot(h1.astype(jnp.bfloat16), w2_ref[...],
                 preferred_element_type=jnp.float32) + bb2_ref[...]

    o_ref[0] = h2 + av


def prepare_params(params, *, channels, num_heads=NUM_HEADS):
    """One-time transform of the PyTorch-layout parameters into kernel operands:
       split the fused QKV projection, fold the 1/sqrt(dh) scale into Q, cast matmul
       weights to bf16 (MXU-native), and build the per-head channel mask."""
    (g1, b1, wqkv, bqkv, wo, bo, g2, b2, w1, bb1, w2, bb2) = params
    C = channels
    dh = C // num_heads
    scale = 1.0 / math.sqrt(dh)

    wq = (wqkv[:, 0 * C:1 * C] * scale).astype(jnp.bfloat16)
    wk = wqkv[:, 1 * C:2 * C].astype(jnp.bfloat16)
    wv = wqkv[:, 2 * C:3 * C].astype(jnp.bfloat16)
    bq = bqkv[:, 0 * C:1 * C] * scale
    bk = bqkv[:, 1 * C:2 * C]
    bv = bqkv[:, 2 * C:3 * C]

    head_of_channel = jnp.arange(C, dtype=jnp.int32) // dh
    hmask = (head_of_channel[None, :] ==
             jnp.arange(num_heads, dtype=jnp.int32)[:, None])
    hmask = hmask.astype(jnp.bfloat16).reshape(num_heads, 1, C)

    return (g1, b1, hmask,
            wq, bq, wk, bk, wv, bv,
            wo.astype(jnp.bfloat16), bo,
            g2, b2,
            w1.astype(jnp.bfloat16), bb1,
            w2.astype(jnp.bfloat16), bb2)


def self_attention_forward(x, kparams, *, channels, num_heads=NUM_HEADS):
    """x: (B, C, H, W) float32 -> (B, C, H, W) float32."""
    B, C, H, W = x.shape
    assert C == channels and C % num_heads == 0
    N = H * W

    # glue: NCHW -> (B, N, C)
    xs = x.reshape(B, C, N).swapaxes(1, 2)

    (g1, b1, hmask, wq, bq, wk, bk, wv, bv,
     wo, bo, g2, b2, w1, bb1, w2, bb2) = kparams

    # Constant-index weight specs: fetched once and revisited across grid steps.
    # (pl.Buffered(1) single-buffering would halve their VMEM residency at large C;
    #  at C=32 each is ~2 KiB so the default is kept for spec simplicity.)
    def full(shape):
        return pl.BlockSpec(shape, lambda b: (0,) * len(shape))

    out = pl.pallas_call(
        self_attention_kernel,
        out_shape=jax.ShapeDtypeStruct((B, N, C), jnp.float32),
        grid_spec=pltpu.PrefetchScalarGridSpec(
            num_scalar_prefetch=0,
            # grid=(B,), "parallel": v7x's two TensorCores split the batch; at B=2 the
            # per-step pipeline overhead (~0.35us x 2) is negligible.  For large B on
            # single-TC chips (v5e/v6e), fold several batch elements into one block
            # (Bt, N, C) while keeping >=2 parallel steps so v7x stays busy.
            grid=(B,),
            in_specs=[
                pl.BlockSpec((1, N, C), lambda b: (b, 0, 0)),   # x slab per batch
                full((1, C)), full((1, C)),                     # ln1 gamma, beta
                full((num_heads, 1, C)),                        # per-head channel mask
                full((C, C)), full((1, C)),                     # q proj (scale folded)
                full((C, C)), full((1, C)),                     # k proj
                full((C, C)), full((1, C)),                     # v proj
                full((C, C)), full((1, C)),                     # out proj
                full((1, C)), full((1, C)),                     # ln2 gamma, beta
                full((C, C)), full((1, C)),                     # ff linear 1
                full((C, C)), full((1, C)),                     # ff linear 2
            ],
            # NOTE(perf): the out block's last dim is C=32 (<128 lanes) so VMEM stores
            # are masked vst's; the per-batch HBM slab is already fully contiguous and
            # an in-kernel (N,C)->(N//4,4C) repack would cost a lane relayout comparable
            # to what it saves at 8 KiB/step, so the natural layout is kept.
            # TODO(synk): revisit lane-dense output packing when N*C grows.
            out_specs=pl.BlockSpec((1, N, C), lambda b: (b, 0, 0)),
        ),
        compiler_params=pltpu.CompilerParams(dimension_semantics=("parallel",)),
    )(xs, g1, b1, hmask, wq, bq, wk, bk, wv, bv, wo, bo, g2, b2, w1, bb1, w2, bb2)

    # glue: (B, N, C) -> NCHW
    return out.swapaxes(1, 2).reshape(B, C, H, W)


def make_params(key, channels):
    C = channels
    keys = jax.random.split(key, 8)
    s = 0.05
    g1 = jnp.ones((1, C), jnp.float32)
    b1 = jnp.zeros((1, C), jnp.float32)
    # MHA in_proj_weight is (3C, C) in torch; stored transposed (C, 3C) for x @ W
    wqkv = (s * jax.random.normal(keys[0], (C, 3 * C))).astype(jnp.float32)
    bqkv = (s * jax.random.normal(keys[1], (1, 3 * C))).astype(jnp.float32)
    wo = (s * jax.random.normal(keys[2], (C, C))).astype(jnp.float32)
    bo = (s * jax.random.normal(keys[3], (1, C))).astype(jnp.float32)
    g2 = jnp.ones((1, C), jnp.float32)
    b2 = jnp.zeros((1, C), jnp.float32)
    w1 = (s * jax.random.normal(keys[4], (C, C))).astype(jnp.float32)
    bb1 = (s * jax.random.normal(keys[5], (1, C))).astype(jnp.float32)
    w2 = (s * jax.random.normal(keys[6], (C, C))).astype(jnp.float32)
    bb2 = (s * jax.random.normal(keys[7], (1, C))).astype(jnp.float32)
    return (g1, b1, wqkv, bqkv, wo, bo, g2, b2, w1, bb1, w2, bb2)


def reference_forward(x, params, *, channels, num_heads=NUM_HEADS):
    """Pure-JAX f32 reference mirroring the PyTorch forward (eval mode)."""
    B, C, H, W = x.shape
    N = H * W
    (g1, b1, wqkv, bqkv, wo, bo, g2, b2, w1, bb1, w2, bb2) = params
    xs = x.reshape(B, C, N).swapaxes(1, 2)

    def ln(v, g, b):
        mu = v.mean(-1, keepdims=True)
        var = ((v - mu) ** 2).mean(-1, keepdims=True)
        return (v - mu) / jnp.sqrt(var + LN_EPS) * g + b

    x_ln = ln(xs, g1[0], b1[0])
    qkv = x_ln @ wqkv + bqkv[0]
    q, k, v = qkv[..., :C], qkv[..., C:2 * C], qkv[..., 2 * C:]
    dh = C // num_heads

    def split_heads(t):
        return t.reshape(B, N, num_heads, dh).transpose(0, 2, 1, 3)

    qh, kh, vh = split_heads(q), split_heads(k), split_heads(v)
    s = jnp.einsum('bhnd,bhmd->bhnm', qh, kh) / math.sqrt(dh)
    p = jax.nn.softmax(s, axis=-1)
    o = jnp.einsum('bhnm,bhmd->bhnd', p, vh).transpose(0, 2, 1, 3).reshape(B, N, C)
    attn = o @ wo + bo[0]
    av = attn + xs
    h_ln = ln(av, g2[0], b2[0])
    h1 = jax.nn.gelu(h_ln @ w1 + bb1[0], approximate=False)
    h2 = h1 @ w2 + bb2[0]
    out = h2 + av
    return out.swapaxes(1, 2).reshape(B, C, H, W)


if __name__ == "__main__":
    B, C, H, W = 2, 32, 8, 8   # channels must be divisible by 8 heads
    key = jax.random.PRNGKey(0)
    kx, kp = jax.random.split(key)
    x = jax.random.normal(kx, (B, C, H, W), jnp.float32)
    params = make_params(kp, C)
    kparams = prepare_params(params, channels=C)

    out = self_attention_forward(x, kparams, channels=C)
    out = jax.block_until_ready(out)

    ref = reference_forward(x, params, channels=C)
    assert out.shape == (B, C, H, W)
    # bf16 MXU operands + approx reciprocal introduce ~1e-3-level deviations vs. the
    # f32 reference; real bugs would show up as O(0.1+) errors.
    assert jnp.allclose(out, ref, rtol=1e-2, atol=1e-2), float(jnp.abs(out - ref).max())

    print("KERNEL_OK")
</pallas_src>

<mosaic_0001>
module attributes {stable_mosaic.version = 11 : i64} {
  func.func @self_attention_kernel(%arg0: i32, %arg1: memref<1x64x32xf32, #tpu.memory_space<vmem>>, %arg2: memref<1x32xf32, #tpu.memory_space<vmem>>, %arg3: memref<1x32xf32, #tpu.memory_space<vmem>>, %arg4: memref<8x1x32xbf16, #tpu.memory_space<vmem>>, %arg5: memref<32x32xbf16, #tpu.memory_space<vmem>>, %arg6: memref<1x32xf32, #tpu.memory_space<vmem>>, %arg7: memref<32x32xbf16, #tpu.memory_space<vmem>>, %arg8: memref<1x32xf32, #tpu.memory_space<vmem>>, %arg9: memref<32x32xbf16, #tpu.memory_space<vmem>>, %arg10: memref<1x32xf32, #tpu.memory_space<vmem>>, %arg11: memref<32x32xbf16, #tpu.memory_space<vmem>>, %arg12: memref<1x32xf32, #tpu.memory_space<vmem>>, %arg13: memref<1x32xf32, #tpu.memory_space<vmem>>, %arg14: memref<1x32xf32, #tpu.memory_space<vmem>>, %arg15: memref<32x32xbf16, #tpu.memory_space<vmem>>, %arg16: memref<1x32xf32, #tpu.memory_space<vmem>>, %arg17: memref<32x32xbf16, #tpu.memory_space<vmem>>, %arg18: memref<1x32xf32, #tpu.memory_space<vmem>>, %arg19: memref<1x64x32xf32, #tpu.memory_space<vmem>>) attributes {dimension_semantics = [#tpu.dimension_semantics<parallel>], iteration_bounds = array<i64: 2>, scalar_prefetch = 0 : i64, scratch_operands = 0 : i64, tpu.core_type = #tpu.core_type<tc>, window_params = [{transform_indices = @transform_0, window_bounds = array<i64: 1, 64, 32>}, {pipeline_mode = #tpu.pipeline_mode<synchronous>, transform_indices = @transform_1, window_bounds = array<i64: 1, 32>}, {pipeline_mode = #tpu.pipeline_mode<synchronous>, transform_indices = @transform_2, window_bounds = array<i64: 1, 32>}, {pipeline_mode = #tpu.pipeline_mode<synchronous>, transform_indices = @transform_3, window_bounds = array<i64: 8, 1, 32>}, {pipeline_mode = #tpu.pipeline_mode<synchronous>, transform_indices = @transform_4, window_bounds = array<i64: 32, 32>}, {pipeline_mode = #tpu.pipeline_mode<synchronous>, transform_indices = @transform_5, window_bounds = array<i64: 1, 32>}, {pipeline_mode = #tpu.pipeline_mode<synchronous>, transform_indices = @transform_6, window_bounds = array<i64: 32, 32>}, {pipeline_mode = #tpu.pipeline_mode<synchronous>, transform_indices = @transform_7, window_bounds = array<i64: 1, 32>}, {pipeline_mode = #tpu.pipeline_mode<synchronous>, transform_indices = @transform_8, window_bounds = array<i64: 32, 32>}, {pipeline_mode = #tpu.pipeline_mode<synchronous>, transform_indices = @transform_9, window_bounds = array<i64: 1, 32>}, {pipeline_mode = #tpu.pipeline_mode<synchronous>, transform_indices = @transform_10, window_bounds = array<i64: 32, 32>}, {pipeline_mode = #tpu.pipeline_mode<synchronous>, transform_indices = @transform_11, window_bounds = array<i64: 1, 32>}, {pipeline_mode = #tpu.pipeline_mode<synchronous>, transform_indices = @transform_12, window_bounds = array<i64: 1, 32>}, {pipeline_mode = #tpu.pipeline_mode<synchronous>, transform_indices = @transform_13, window_bounds = array<i64: 1, 32>}, {pipeline_mode = #tpu.pipeline_mode<synchronous>, transform_indices = @transform_14, window_bounds = array<i64: 32, 32>}, {pipeline_mode = #tpu.pipeline_mode<synchronous>, transform_indices = @transform_15, window_bounds = array<i64: 1, 32>}, {pipeline_mode = #tpu.pipeline_mode<synchronous>, transform_indices = @transform_16, window_bounds = array<i64: 32, 32>}, {pipeline_mode = #tpu.pipeline_mode<synchronous>, transform_indices = @transform_17, window_bounds = array<i64: 1, 32>}, {transform_indices = @transform_18, window_bounds = array<i64: 1, 64, 32>}]} {
    %c0 = arith.constant 0 : index
    %c0_0 = arith.constant 0 : index
    %c0_1 = arith.constant 0 : index
    %0 = vector.load %arg1[%c0, %c0_0, %c0_1] : memref<1x64x32xf32, #tpu.memory_space<vmem>>, vector<1x64x32xf32>
    %1 = vector.shape_cast %0 : vector<1x64x32xf32> to vector<64x32xf32>
    %c0_2 = arith.constant 0 : index
    %c0_3 = arith.constant 0 : index
    %2 = vector.load %arg2[%c0_2, %c0_3] : memref<1x32xf32, #tpu.memory_space<vmem>>, vector<1x32xf32>
    %c0_4 = arith.constant 0 : index
    %c0_5 = arith.constant 0 : index
    %3 = vector.load %arg3[%c0_4, %c0_5] : memref<1x32xf32, #tpu.memory_space<vmem>>, vector<1x32xf32>
    %cst = arith.constant dense<0.000000e+00> : vector<64xf32>
    %4 = vector.multi_reduction <add>, %1, %cst [1] : vector<64x32xf32> to vector<64xf32>
    %5 = vector.shape_cast %4 : vector<64xf32> to vector<64x1xf32>
    %cst_6 = arith.constant 3.200000e+01 : f32
    %6 = vector.broadcast %cst_6 : f32 to vector<64x1xf32>
    %7 = arith.divf %5, %6 : vector<64x1xf32>
    %8 = vector.broadcast %7 : vector<64x1xf32> to vector<64x32xf32>
    %9 = arith.subf %1, %8 : vector<64x32xf32>
    %10 = vector.broadcast %7 : vector<64x1xf32> to vector<64x32xf32>
    %11 = arith.subf %1, %10 : vector<64x32xf32>
    %12 = arith.mulf %9, %11 : vector<64x32xf32>
    %cst_7 = arith.constant dense<0.000000e+00> : vector<64xf32>
    %13 = vector.multi_reduction <add>, %12, %cst_7 [1] : vector<64x32xf32> to vector<64xf32>
    %14 = vector.shape_cast %13 : vector<64xf32> to vector<64x1xf32>
    %cst_8 = arith.constant 3.200000e+01 : f32
    %15 = vector.broadcast %cst_8 : f32 to vector<64x1xf32>
    %16 = arith.divf %14, %15 : vector<64x1xf32>
    %17 = vector.broadcast %7 : vector<64x1xf32> to vector<64x32xf32>
    %18 = arith.subf %1, %17 : vector<64x32xf32>
    %cst_9 = arith.constant 9.99999974E-6 : f32
    %19 = vector.broadcast %cst_9 : f32 to vector<64x1xf32>
    %20 = arith.addf %16, %19 : vector<64x1xf32>
    %21 = math.rsqrt %20 : vector<64x1xf32>
    %22 = vector.broadcast %21 : vector<64x1xf32> to vector<64x32xf32>
    %23 = arith.mulf %18, %22 : vector<64x32xf32>
    %24 = vector.broadcast %2 : vector<1x32xf32> to vector<64x32xf32>
    %25 = arith.mulf %23, %24 : vector<64x32xf32>
    %26 = vector.broadcast %3 : vector<1x32xf32> to vector<64x32xf32>
    %27 = arith.addf %25, %26 : vector<64x32xf32>
    %28 = arith.truncf %27 : vector<64x32xf32> to vector<64x32xbf16>
    %c0_10 = arith.constant 0 : index
    %c0_11 = arith.constant 0 : index
    %29 = vector.load %arg5[%c0_10, %c0_11] : memref<32x32xbf16, #tpu.memory_space<vmem>>, vector<32x32xbf16>
    %cst_12 = arith.constant dense<0.000000e+00> : vector<64x32xf32>
    %30 = tpu.matmul %28, %29, %cst_12 {dimension_numbers = #tpu.dot_dimension_numbers<[1], [0], [0], [1], [0, 0, 1, 1], [], []>} : vector<64x32xbf16>, vector<32x32xbf16>, vector<64x32xf32> -> vector<64x32xf32>
    %c0_13 = arith.constant 0 : index
    %c0_14 = arith.constant 0 : index
    %31 = vector.load %arg6[%c0_13, %c0_14] : memref<1x32xf32, #tpu.memory_space<vmem>>, vector<1x32xf32>
    %32 = vector.broadcast %31 : vector<1x32xf32> to vector<64x32xf32>
    %33 = arith.addf %30, %32 : vector<64x32xf32>
    %c0_15 = arith.constant 0 : index
    %c0_16 = arith.constant 0 : index
    %34 = vector.load %arg7[%c0_15, %c0_16] : memref<32x32xbf16, #tpu.memory_space<vmem>>, vector<32x32xbf16>
    %cst_17 = arith.constant dense<0.000000e+00> : vector<64x32xf32>
    %35 = tpu.matmul %28, %34, %cst_17 {dimension_numbers = #tpu.dot_dimension_numbers<[1], [0], [0], [1], [0, 0, 1, 1], [], []>} : vector<64x32xbf16>, vector<32x32xbf16>, vector<64x32xf32> -> vector<64x32xf32>
    %c0_18 = arith.constant 0 : index
    %c0_19 = arith.constant 0 : index
    %36 = vector.load %arg8[%c0_18, %c0_19] : memref<1x32xf32, #tpu.memory_space<vmem>>, vector<1x32xf32>
    %37 = vector.broadcast %36 : vector<1x32xf32> to vector<64x32xf32>
    %38 = arith.addf %35, %37 : vector<64x32xf32>
    %c0_20 = arith.constant 0 : index
    %c0_21 = arith.constant 0 : index
    %39 = vector.load %arg9[%c0_20, %c0_21] : memref<32x32xbf16, #tpu.memory_space<vmem>>, vector<32x32xbf16>
    %cst_22 = arith.constant dense<0.000000e+00> : vector<64x32xf32>
    %40 = tpu.matmul %28, %39, %cst_22 {dimension_numbers = #tpu.dot_dimension_numbers<[1], [0], [0], [1], [0, 0, 1, 1], [], []>} : vector<64x32xbf16>, vector<32x32xbf16>, vector<64x32xf32> -> vector<64x32xf32>
    %c0_23 = arith.constant 0 : index
    %c0_24 = arith.constant 0 : index
    %41 = vector.load %arg10[%c0_23, %c0_24] : memref<1x32xf32, #tpu.memory_space<vmem>>, vector<1x32xf32>
    %42 = vector.broadcast %41 : vector<1x32xf32> to vector<64x32xf32>
    %43 = arith.addf %40, %42 : vector<64x32xf32>
    %c0_25 = arith.constant 0 : index
    %c0_26 = arith.constant 0 : index
    %c0_27 = arith.constant 0 : index
    %44 = vector.load %arg4[%c0_25, %c0_26, %c0_27] : memref<8x1x32xbf16, #tpu.memory_space<vmem>>, vector<8x1x32xbf16>
    %45 = arith.truncf %33 : vector<64x32xf32> to vector<64x32xbf16>
    %46 = vector.shape_cast %45 : vector<64x32xbf16> to vector<1x64x32xbf16>
    %47 = vector.broadcast %46 : vector<1x64x32xbf16> to vector<8x64x32xbf16>
    %48 = vector.broadcast %44 : vector<8x1x32xbf16> to vector<8x64x32xbf16>
    %49 = arith.mulf %47, %48 : vector<8x64x32xbf16>
    %50 = arith.truncf %43 : vector<64x32xf32> to vector<64x32xbf16>
    %51 = vector.shape_cast %50 : vector<64x32xbf16> to vector<1x64x32xbf16>
    %52 = vector.broadcast %51 : vector<1x64x32xbf16> to vector<8x64x32xbf16>
    %53 = vector.broadcast %44 : vector<8x1x32xbf16> to vector<8x64x32xbf16>
    %54 = arith.mulf %52, %53 : vector<8x64x32xbf16>
    %55 = arith.truncf %38 : vector<64x32xf32> to vector<64x32xbf16>
    %56 = vector.shape_cast %55 : vector<64x32xbf16> to vector<1x64x32xbf16>
    %57 = vector.shape_cast %56 : vector<1x64x32xbf16> to vector<1x64x32xbf16>
    %58 = vector.broadcast %57 : vector<1x64x32xbf16> to vector<8x64x32xbf16>
    "tpu.trace_start"() <{level = 10 : i32, message = "hnc,hmc->hnm"}> : () -> ()
    %cst_28 = arith.constant dense<0.000000e+00> : vector<8x64x64xf32>
    %59 = tpu.matmul %49, %58, %cst_28 {dimension_numbers = #tpu.dot_dimension_numbers<[2], [2], [1], [1], [0, 0, 0, 1, 1, 1], [0], [0]>} : vector<8x64x32xbf16>, vector<8x64x32xbf16>, vector<8x64x64xf32> -> vector<8x64x64xf32>
    "tpu.trace_stop"() : () -> ()
    %cst_29 = arith.constant dense<0xFF800000> : vector<8x64xf32>
    %60 = vector.multi_reduction <maximumf>, %59, %cst_29 [2] : vector<8x64x64xf32> to vector<8x64xf32>
    %61 = vector.shape_cast %60 : vector<8x64xf32> to vector<8x64x1xf32>
    %62 = vector.broadcast %61 : vector<8x64x1xf32> to vector<8x64x64xf32>
    %63 = arith.subf %59, %62 : vector<8x64x64xf32>
    %64 = math.exp %63 : vector<8x64x64xf32>
    %cst_30 = arith.constant dense<0.000000e+00> : vector<8x64xf32>
    %65 = vector.multi_reduction <add>, %64, %cst_30 [2] : vector<8x64x64xf32> to vector<8x64xf32>
    %66 = vector.shape_cast %65 : vector<8x64xf32> to vector<8x64x1xf32>
    %67 = tpu.reciprocal %66 {approx = true} : vector<8x64x1xf32> -> vector<8x64x1xf32>
    %68 = vector.broadcast %67 : vector<8x64x1xf32> to vector<8x64x64xf32>
    %69 = arith.mulf %64, %68 : vector<8x64x64xf32>
    %70 = arith.truncf %69 : vector<8x64x64xf32> to vector<8x64x64xbf16>
    "tpu.trace_start"() <{level = 10 : i32, message = "hnm,hmc->hnc"}> : () -> ()
    %cst_31 = arith.constant dense<0.000000e+00> : vector<8x64x32xf32>
    %71 = tpu.matmul %70, %54, %cst_31 {dimension_numbers = #tpu.dot_dimension_numbers<[2], [1], [1], [2], [0, 0, 0, 1, 1, 2], [0], [0]>} : vector<8x64x64xbf16>, vector<8x64x32xbf16>, vector<8x64x32xf32> -> vector<8x64x32xf32>
    "tpu.trace_stop"() : () -> ()
    %cst_32 = arith.constant dense<0.000000e+00> : vector<64x32xf32>
    %72 = vector.multi_reduction <add>, %71, %cst_32 [0] : vector<8x64x32xf32> to vector<64x32xf32>
    %73 = arith.truncf %72 : vector<64x32xf32> to vector<64x32xbf16>
    %c0_33 = arith.constant 0 : index
    %c0_34 = arith.constant 0 : index
    %74 = vector.load %arg11[%c0_33, %c0_34] : memref<32x32xbf16, #tpu.memory_space<vmem>>, vector<32x32xbf16>
    %cst_35 = arith.constant dense<0.000000e+00> : vector<64x32xf32>
    %75 = tpu.matmul %73, %74, %cst_35 {dimension_numbers = #tpu.dot_dimension_numbers<[1], [0], [0], [1], [0, 0, 1, 1], [], []>} : vector<64x32xbf16>, vector<32x32xbf16>, vector<64x32xf32> -> vector<64x32xf32>
    %c0_36 = arith.constant 0 : index
    %c0_37 = arith.constant 0 : index
    %76 = vector.load %arg12[%c0_36, %c0_37] : memref<1x32xf32, #tpu.memory_space<vmem>>, vector<1x32xf32>
    %77 = vector.broadcast %76 : vector<1x32xf32> to vector<64x32xf32>
    %78 = arith.addf %75, %77 : vector<64x32xf32>
    %79 = arith.addf %78, %1 : vector<64x32xf32>
    %c0_38 = arith.constant 0 : index
    %c0_39 = arith.constant 0 : index
    %80 = vector.load %arg13[%c0_38, %c0_39] : memref<1x32xf32, #tpu.memory_space<vmem>>, vector<1x32xf32>
    %c0_40 = arith.constant 0 : index
    %c0_41 = arith.constant 0 : index
    %81 = vector.load %arg14[%c0_40, %c0_41] : memref<1x32xf32, #tpu.memory_space<vmem>>, vector<1x32xf32>
    %cst_42 = arith.constant dense<0.000000e+00> : vector<64xf32>
    %82 = vector.multi_reduction <add>, %79, %cst_42 [1] : vector<64x32xf32> to vector<64xf32>
    %83 = vector.shape_cast %82 : vector<64xf32> to vector<64x1xf32>
    %cst_43 = arith.constant 3.200000e+01 : f32
    %84 = vector.broadcast %cst_43 : f32 to vector<64x1xf32>
    %85 = arith.divf %83, %84 : vector<64x1xf32>
    %86 = vector.broadcast %85 : vector<64x1xf32> to vector<64x32xf32>
    %87 = arith.subf %79, %86 : vector<64x32xf32>
    %88 = vector.broadcast %85 : vector<64x1xf32> to vector<64x32xf32>
    %89 = arith.subf %79, %88 : vector<64x32xf32>
    %90 = arith.mulf %87, %89 : vector<64x32xf32>
    %cst_44 = arith.constant dense<0.000000e+00> : vector<64xf32>
    %91 = vector.multi_reduction <add>, %90, %cst_44 [1] : vector<64x32xf32> to vector<64xf32>
    %92 = vector.shape_cast %91 : vector<64xf32> to vector<64x1xf32>
    %cst_45 = arith.constant 3.200000e+01 : f32
    %93 = vector.broadcast %cst_45 : f32 to vector<64x1xf32>
    %94 = arith.divf %92, %93 : vector<64x1xf32>
    %95 = vector.broadcast %85 : vector<64x1xf32> to vector<64x32xf32>
    %96 = arith.subf %79, %95 : vector<64x32xf32>
    %cst_46 = arith.constant 9.99999974E-6 : f32
    %97 = vector.broadcast %cst_46 : f32 to vector<64x1xf32>
    %98 = arith.addf %94, %97 : vector<64x1xf32>
    %99 = math.rsqrt %98 : vector<64x1xf32>
    %100 = vector.broadcast %99 : vector<64x1xf32> to vector<64x32xf32>
    %101 = arith.mulf %96, %100 : vector<64x32xf32>
    %102 = vector.broadcast %80 : vector<1x32xf32> to vector<64x32xf32>
    %103 = arith.mulf %101, %102 : vector<64x32xf32>
    %104 = vector.broadcast %81 : vector<1x32xf32> to vector<64x32xf32>
    %105 = arith.addf %103, %104 : vector<64x32xf32>
    %106 = arith.truncf %105 : vector<64x32xf32> to vector<64x32xbf16>
    %c0_47 = arith.constant 0 : index
    %c0_48 = arith.constant 0 : index
    %107 = vector.load %arg15[%c0_47, %c0_48] : memref<32x32xbf16, #tpu.memory_space<vmem>>, vector<32x32xbf16>
    %cst_49 = arith.constant dense<0.000000e+00> : vector<64x32xf32>
    %108 = tpu.matmul %106, %107, %cst_49 {dimension_numbers = #tpu.dot_dimension_numbers<[1], [0], [0], [1], [0, 0, 1, 1], [], []>} : vector<64x32xbf16>, vector<32x32xbf16>, vector<64x32xf32> -> vector<64x32xf32>
    %c0_50 = arith.constant 0 : index
    %c0_51 = arith.constant 0 : index
    %109 = vector.load %arg16[%c0_50, %c0_51] : memref<1x32xf32, #tpu.memory_space<vmem>>, vector<1x32xf32>
    %110 = vector.broadcast %109 : vector<1x32xf32> to vector<64x32xf32>
    %111 = arith.addf %108, %110 : vector<64x32xf32>
    %cst_52 = arith.constant 5.000000e-01 : f32
    %112 = vector.broadcast %cst_52 : f32 to vector<64x32xf32>
    %113 = arith.mulf %112, %111 : vector<64x32xf32>
    %cst_53 = arith.constant 0.707106769 : f32
    %114 = vector.broadcast %cst_53 : f32 to vector<64x32xf32>
    %115 = arith.mulf %111, %114 : vector<64x32xf32>
    %116 = math.erf %115 : vector<64x32xf32>
    %cst_54 = arith.constant 1.000000e+00 : f32
    %117 = vector.broadcast %cst_54 : f32 to vector<64x32xf32>
    %118 = arith.addf %117, %116 : vector<64x32xf32>
    %119 = arith.mulf %113, %118 : vector<64x32xf32>
    %120 = arith.truncf %119 : vector<64x32xf32> to vector<64x32xbf16>
    %c0_55 = arith.constant 0 : index
    %c0_56 = arith.constant 0 : index
    %121 = vector.load %arg17[%c0_55, %c0_56] : memref<32x32xbf16, #tpu.memory_space<vmem>>, vector<32x32xbf16>
    %cst_57 = arith.constant dense<0.000000e+00> : vector<64x32xf32>
    %122 = tpu.matmul %120, %121, %cst_57 {dimension_numbers = #tpu.dot_dimension_numbers<[1], [0], [0], [1], [0, 0, 1, 1], [], []>} : vector<64x32xbf16>, vector<32x32xbf16>, vector<64x32xf32> -> vector<64x32xf32>
    %c0_58 = arith.constant 0 : index
    %c0_59 = arith.constant 0 : index
    %123 = vector.load %arg18[%c0_58, %c0_59] : memref<1x32xf32, #tpu.memory_space<vmem>>, vector<1x32xf32>
    %124 = vector.broadcast %123 : vector<1x32xf32> to vector<64x32xf32>
    %125 = arith.addf %122, %124 : vector<64x32xf32>
    %126 = arith.addf %125, %79 : vector<64x32xf32>
    %c0_60 = arith.constant 0 : index
    %c0_61 = arith.constant 0 : index
    %c0_62 = arith.constant 0 : index
    %127 = vector.load %arg19[%c0_60, %c0_61, %c0_62] : memref<1x64x32xf32, #tpu.memory_space<vmem>>, vector<1x64x32xf32>
    %128 = vector.shape_cast %127 : vector<1x64x32xf32> to vector<64x32xf32>
    %129 = vector.shape_cast %126 : vector<64x32xf32> to vector<1x64x32xf32>
    tpu.vector_store %arg19[%c0_60, %c0_61, %c0_62], %129 {strides = array<i32>} : memref<1x64x32xf32, #tpu.memory_space<vmem>>, vector<1x64x32xf32>,
    return
  }
  func.func @transform_0(%arg0: i32) -> (i32, i32, i32) {
    %c0_i32 = arith.constant 0 : i32
    %c0_i32_0 = arith.constant 0 : i32
    %c0_i32_1 = arith.constant 0 : i32
    return %arg0, %c0_i32, %c0_i32_0 : i32, i32, i32
  }
  func.func @transform_1(%arg0: i32) -> (i32, i32) {
    %c0_i32 = arith.constant 0 : i32
    %c0_i32_0 = arith.constant 0 : i32
    %c0_i32_1 = arith.constant 0 : i32
    return %c0_i32, %c0_i32_0 : i32, i32
  }
  func.func @transform_2(%arg0: i32) -> (i32, i32) {
    %c0_i32 = arith.constant 0 : i32
    %c0_i32_0 = arith.constant 0 : i32
    %c0_i32_1 = arith.constant 0 : i32
    return %c0_i32, %c0_i32_0 : i32, i32
  }
  func.func @transform_3(%arg0: i32) -> (i32, i32, i32) {
    %c0_i32 = arith.constant 0 : i32
    %c0_i32_0 = arith.constant 0 : i32
    %c0_i32_1 = arith.constant 0 : i32
    %c0_i32_2 = arith.constant 0 : i32
    return %c0_i32, %c0_i32_0, %c0_i32_1 : i32, i32, i32
  }
  func.func @transform_4(%arg0: i32) -> (i32, i32) {
    %c0_i32 = arith.constant 0 : i32
    %c0_i32_0 = arith.constant 0 : i32
    %c0_i32_1 = arith.constant 0 : i32
    return %c0_i32, %c0_i32_0 : i32, i32
  }
  func.func @transform_5(%arg0: i32) -> (i32, i32) {
    %c0_i32 = arith.constant 0 : i32
    %c0_i32_0 = arith.constant 0 : i32
    %c0_i32_1 = arith.constant 0 : i32
    return %c0_i32, %c0_i32_0 : i32, i32
  }
  func.func @transform_6(%arg0: i32) -> (i32, i32) {
    %c0_i32 = arith.constant 0 : i32
    %c0_i32_0 = arith.constant 0 : i32
    %c0_i32_1 = arith.constant 0 : i32
    return %c0_i32, %c0_i32_0 : i32, i32
  }
  func.func @transform_7(%arg0: i32) -> (i32, i32) {
    %c0_i32 = arith.constant 0 : i32
    %c0_i32_0 = arith.constant 0 : i32
    %c0_i32_1 = arith.constant 0 : i32
    return %c0_i32, %c0_i32_0 : i32, i32
  }
  func.func @transform_8(%arg0: i32) -> (i32, i32) {
    %c0_i32 = arith.constant 0 : i32
    %c0_i32_0 = arith.constant 0 : i32
    %c0_i32_1 = arith.constant 0 : i32
    return %c0_i32, %c0_i32_0 : i32, i32
  }
  func.func @transform_9(%arg0: i32) -> (i32, i32) {
    %c0_i32 = arith.constant 0 : i32
    %c0_i32_0 = arith.constant 0 : i32
    %c0_i32_1 = arith.constant 0 : i32
    return %c0_i32, %c0_i32_0 : i32, i32
  }
  func.func @transform_10(%arg0: i32) -> (i32, i32) {
    %c0_i32 = arith.constant 0 : i32
    %c0_i32_0 = arith.constant 0 : i32
    %c0_i32_1 = arith.constant 0 : i32
    return %c0_i32, %c0_i32_0 : i32, i32
  }
  func.func @transform_11(%arg0: i32) -> (i32, i32) {
    %c0_i32 = arith.constant 0 : i32
    %c0_i32_0 = arith.constant 0 : i32
    %c0_i32_1 = arith.constant 0 : i32
    return %c0_i32, %c0_i32_0 : i32, i32
  }
  func.func @transform_12(%arg0: i32) -> (i32, i32) {
    %c0_i32 = arith.constant 0 : i32
    %c0_i32_0 = arith.constant 0 : i32
    %c0_i32_1 = arith.constant 0 : i32
    return %c0_i32, %c0_i32_0 : i32, i32
  }
  func.func @transform_13(%arg0: i32) -> (i32, i32) {
    %c0_i32 = arith.constant 0 : i32
    %c0_i32_0 = arith.constant 0 : i32
    %c0_i32_1 = arith.constant 0 : i32
    return %c0_i32, %c0_i32_0 : i32, i32
  }
  func.func @transform_14(%arg0: i32) -> (i32, i32) {
    %c0_i32 = arith.constant 0 : i32
    %c0_i32_0 = arith.constant 0 : i32
    %c0_i32_1 = arith.constant 0 : i32
    return %c0_i32, %c0_i32_0 : i32, i32
  }
  func.func @transform_15(%arg0: i32) -> (i32, i32) {
    %c0_i32 = arith.constant 0 : i32
    %c0_i32_0 = arith.constant 0 : i32
    %c0_i32_1 = arith.constant 0 : i32
    return %c0_i32, %c0_i32_0 : i32, i32
  }
  func.func @transform_16(%arg0: i32) -> (i32, i32) {
    %c0_i32 = arith.constant 0 : i32
    %c0_i32_0 = arith.constant 0 : i32
    %c0_i32_1 = arith.constant 0 : i32
    return %c0_i32, %c0_i32_0 : i32, i32
  }
  func.func @transform_17(%arg0: i32) -> (i32, i32) {
    %c0_i32 = arith.constant 0 : i32
    %c0_i32_0 = arith.constant 0 : i32
    %c0_i32_1 = arith.constant 0 : i32
    return %c0_i32, %c0_i32_0 : i32, i32
  }
  func.func @transform_18(%arg0: i32) -> (i32, i32, i32) {
    %c0_i32 = arith.constant 0 : i32
    %c0_i32_0 = arith.constant 0 : i32
    %c0_i32_1 = arith.constant 0 : i32
    return %arg0, %c0_i32, %c0_i32_0 : i32, i32, i32
  }
}

</mosaic_0001>

<llo_original>
// kernel: tpu_custom_call.1
$region0: #{tpu_custom_call.1}
  #allocation0 [shape = 'u32[]', space=smem, size = 0x4, offset = 0x4, fixed_abs, tag = 'smem constant byte address 0x4 - core index']
  #allocation1 [shape = 'u32[144,128]{1,0:T(1,128)}', space=vmem, size = 0x12000, scoped, tag = 'internal scratch']
  %s0 = inlined_call_operand.vmem [shape: f32[2,64,32], index: 0, kind: input, shape index: {}]
  %s1 = inlined_call_operand.vmem [shape: f32[1,32], index: 1, kind: input, shape index: {}]
  %s2 = inlined_call_operand.vmem [shape: f32[1,32], index: 2, kind: input, shape index: {}]
  %s3 = inlined_call_operand.vmem [shape: bf16[8,1,32], index: 3, kind: input, shape index: {}]
  %s4 = inlined_call_operand.vmem [shape: bf16[32,32], index: 4, kind: input, shape index: {}]
  %s5 = inlined_call_operand.vmem [shape: f32[1,32], index: 5, kind: input, shape index: {}]
  %s6 = inlined_call_operand.vmem [shape: bf16[32,32], index: 6, kind: input, shape index: {}]
  %s7 = inlined_call_operand.vmem [shape: f32[1,32], index: 7, kind: input, shape index: {}]
  %s8 = inlined_call_operand.vmem [shape: bf16[32,32], index: 8, kind: input, shape index: {}]
  %s9 = inlined_call_operand.vmem [shape: f32[1,32], index: 9, kind: input, shape index: {}]
  %s10 = inlined_call_operand.vmem [shape: bf16[32,32], index: 10, kind: input, shape index: {}]
  %s11 = inlined_call_operand.vmem [shape: f32[1,32], index: 11, kind: input, shape index: {}]
  %s12 = inlined_call_operand.vmem [shape: f32[1,32], index: 12, kind: input, shape index: {}]
  %s13 = inlined_call_operand.vmem [shape: f32[1,32], index: 13, kind: input, shape index: {}]
  %s14 = inlined_call_operand.vmem [shape: bf16[32,32], index: 14, kind: input, shape index: {}]
  %s15 = inlined_call_operand.vmem [shape: f32[1,32], index: 15, kind: input, shape index: {}]
  %s16 = inlined_call_operand.vmem [shape: bf16[32,32], index: 16, kind: input, shape index: {}]
  %s17 = inlined_call_operand.vmem [shape: f32[1,32], index: 17, kind: input, shape index: {}]
  %s18 = inlined_call_operand.vmem [shape: f32[2,64,32], index: 18, kind: output, shape index: {}]
  %s19 = sld [smem:[#allocation0]]
  $region105: #{tpu_custom_call.1} parent=0
    _
  %s21 = ssub.s32 1, %s19
  %s22 = scalar_select 0, %s21, %s19
  loop: start=0, step=1, limit=4
  $region2: #{tpu_custom_call.1} parent=0 // loop_pre_header
    _
  $region3: #{tpu_custom_call.1} parent=0 // loop_header
    %s24 = sphi 0, %s28
    %p25 = scmp.ge.s32.totalorder %s24, 4
    %s34 = sphi 0, %s36
    %s37 = sphi 0, %s34
    %s38 = sphi 0, %s37
    %s54 = sphi 0, %s38
    %s58 = sphi 0, %s58
    %s60 = sphi 0, %s58
    %s61 = sphi 0, %s60
    %s75 = sphi 0, %s61
    %s79 = sphi 0, %s79
    %s81 = sphi 0, %s79
    %s82 = sphi 0, %s81
    %s96 = sphi 0, %s82
    %s100 = sphi 0, %s100
    %s102 = sphi 0, %s100
    %s103 = sphi 0, %s102
    %s117 = sphi 0, %s103
    %s121 = sphi 0, %s121
    %s123 = sphi 0, %s121
    %s124 = sphi 0, %s123
    %s138 = sphi 0, %s124
    %s142 = sphi 0, %s142
    %s144 = sphi 0, %s142
    %s145 = sphi 0, %s144
    %s159 = sphi 0, %s145
    %s163 = sphi 0, %s163
    %s165 = sphi 0, %s163
    %s166 = sphi 0, %s165
    %s180 = sphi 0, %s166
    %s184 = sphi 0, %s184
    %s186 = sphi 0, %s184
    %s187 = sphi 0, %s186
    %s201 = sphi 0, %s187
    %s205 = sphi 0, %s205
    %s207 = sphi 0, %s205
    %s208 = sphi 0, %s207
    %s222 = sphi 0, %s208
    %s226 = sphi 0, %s226
    %s228 = sphi 0, %s226
    %s229 = sphi 0, %s228
    %s243 = sphi 0, %s229
    %s247 = sphi 0, %s247
    %s249 = sphi 0, %s247
    %s250 = sphi 0, %s249
    %s264 = sphi 0, %s250
    %s268 = sphi 0, %s268
    %s270 = sphi 0, %s268
    %s271 = sphi 0, %s270
    %s285 = sphi 0, %s271
    %s289 = sphi 0, %s289
    %s291 = sphi 0, %s289
    %s292 = sphi 0, %s291
    %s306 = sphi 0, %s292
    %s310 = sphi 0, %s310
    %s312 = sphi 0, %s310
    %s313 = sphi 0, %s312
    %s327 = sphi 0, %s313
    %s331 = sphi 0, %s331
    %s333 = sphi 0, %s331
    %s334 = sphi 0, %s333
    %s348 = sphi 0, %s334
    %s352 = sphi 0, %s352
    %s354 = sphi 0, %s352
    %s355 = sphi 0, %s354
    %s369 = sphi 0, %s355
    %s373 = sphi 0, %s373
    %s375 = sphi 0, %s373
    %s376 = sphi 0, %s375
    %s390 = sphi 0, %s376
    %s394 = sphi 0, %s394
    %s396 = sphi 0, %s394
    %s397 = sphi 0, %s396
    %s411 = sphi 0, %s397
    %s417 = sphi 0, %s419
    %s420 = sphi 0, %s417
    %s421 = sphi 0, %s420
    %s437 = sphi 0, %s421
  $region4: #{tpu_custom_call.1} parent=0 // loop_header_branch
    %27 = sbr.rel (%p25) target = $region8
  $region5: #{tpu_custom_call.1} parent=0 // loop_body
    %s29 = ssub.s32 %s24, 1
    %s30 = ssub.s32 %s24, 2
    %s31 = sadd.s32 %s24, 1
    %s32 = ssub.s32 %s24, %s31
    %p33 = scmp.eq.s32.totalorder %s32, 0
    %s35 = sadd.s32 %s34, 1
    %s36 = scalar_select %p33, %s34, %s35
    %p39 = pneg %p33
    %p40 = scmp.eq.s32.totalorder %s24, 1
    %p41 = por %p39, %p40
    %p42 = scmp.ne.s32.totalorder %s34, %s37
    %p43 = scmp.eq.s32.totalorder %s24, 0
    %p44 = por %p42, %p43
    %p45 = scmp.ne.s32.totalorder %s34, %s37
    %p46 = scmp.eq.s32.totalorder %s29, 1
    %p47 = por %p45, %p46
    %p48 = scmp.ne.s32.totalorder %s37, %s38
    %p49 = scmp.eq.s32.totalorder %s29, 0
    %p50 = por %p48, %p49
    %p51 = scmp.ne.s32.totalorder %s37, %s38
    %p52 = scmp.eq.s32.totalorder %s30, 1
    %p53 = por %p51, %p52
    %p55 = scmp.ne.s32.totalorder %s38, %s54
    %p56 = scmp.eq.s32.totalorder %s30, 0
    %p57 = por %p55, %p56
    %s59 = sadd.s32 %s58, 1
    %p62 = scmp.eq.s32.totalorder %s24, 1
    %p63 = scmp.ne.s32.totalorder %s58, %s60
    %p64 = scmp.eq.s32.totalorder %s24, 0
    %p65 = por %p63, %p64
    %p66 = scmp.ne.s32.totalorder %s58, %s60
    %p67 = scmp.eq.s32.totalorder %s29, 1
    %p68 = por %p66, %p67
    %p69 = scmp.ne.s32.totalorder %s60, %s61
    %p70 = scmp.eq.s32.totalorder %s29, 0
    %p71 = por %p69, %p70
    %p72 = scmp.ne.s32.totalorder %s60, %s61
    %p73 = scmp.eq.s32.totalorder %s30, 1
    %p74 = por %p72, %p73
    %p76 = scmp.ne.s32.totalorder %s61, %s75
    %p77 = scmp.eq.s32.totalorder %s30, 0
    %p78 = por %p76, %p77
    %s80 = sadd.s32 %s79, 1
    %p83 = scmp.eq.s32.totalorder %s24, 1
    %p84 = scmp.ne.s32.totalorder %s79, %s81
    %p85 = scmp.eq.s32.totalorder %s24, 0
    %p86 = por %p84, %p85
    %p87 = scmp.ne.s32.totalorder %s79, %s81
    %p88 = scmp.eq.s32.totalorder %s29, 1
    %p89 = por %p87, %p88
    %p90 = scmp.ne.s32.totalorder %s81, %s82
    %p91 = scmp.eq.s32.totalorder %s29, 0
    %p92 = por %p90, %p91
    %p93 = scmp.ne.s32.totalorder %s81, %s82
    %p94 = scmp.eq.s32.totalorder %s30, 1
    %p95 = por %p93, %p94
    %p97 = scmp.ne.s32.totalorder %s82, %s96
    %p98 = scmp.eq.s32.totalorder %s30, 0
    %p99 = por %p97, %p98
    %s101 = sadd.s32 %s100, 1
    %p104 = scmp.eq.s32.totalorder %s24, 1
    %p105 = scmp.ne.s32.totalorder %s100, %s102
    %p106 = scmp.eq.s32.totalorder %s24, 0
    %p107 = por %p105, %p106
    %p108 = scmp.ne.s32.totalorder %s100, %s102
    %p109 = scmp.eq.s32.totalorder %s29, 1
    %p110 = por %p108, %p109
    %p111 = scmp.ne.s32.totalorder %s102, %s103
    %p112 = scmp.eq.s32.totalorder %s29, 0
    %p113 = por %p111, %p112
    %p114 = scmp.ne.s32.totalorder %s102, %s103
    %p115 = scmp.eq.s32.totalorder %s30, 1
    %p116 = por %p114, %p115
    %p118 = scmp.ne.s32.totalorder %s103, %s117
    %p119 = scmp.eq.s32.totalorder %s30, 0
    %p120 = por %p118, %p119
    %s122 = sadd.s32 %s121, 1
    %p125 = scmp.eq.s32.totalorder %s24, 1
    %p126 = scmp.ne.s32.totalorder %s121, %s123
    %p127 = scmp.eq.s32.totalorder %s24, 0
    %p128 = por %p126, %p127
    %p129 = scmp.ne.s32.totalorder %s121, %s123
    %p130 = scmp.eq.s32.totalorder %s29, 1
    %p131 = por %p129, %p130
    %p132 = scmp.ne.s32.totalorder %s123, %s124
    %p133 = scmp.eq.s32.totalorder %s29, 0
    %p134 = por %p132, %p133
    %p135 = scmp.ne.s32.totalorder %s123, %s124
    %p136 = scmp.eq.s32.totalorder %s30, 1
    %p137 = por %p135, %p136
    %p139 = scmp.ne.s32.totalorder %s124, %s138
    %p140 = scmp.eq.s32.totalorder %s30, 0
    %p141 = por %p139, %p140
    %s143 = sadd.s32 %s142, 1
    %p146 = scmp.eq.s32.totalorder %s24, 1
    %p147 = scmp.ne.s32.totalorder %s142, %s144
    %p148 = scmp.eq.s32.totalorder %s24, 0
    %p149 = por %p147, %p148
    %p150 = scmp.ne.s32.totalorder %s142, %s144
    %p151 = scmp.eq.s32.totalorder %s29, 1
    %p152 = por %p150, %p151
    %p153 = scmp.ne.s32.totalorder %s144, %s145
    %p154 = scmp.eq.s32.totalorder %s29, 0
    %p155 = por %p153, %p154
    %p156 = scmp.ne.s32.totalorder %s144, %s145
    %p157 = scmp.eq.s32.totalorder %s30, 1
    %p158 = por %p156, %p157
    %p160 = scmp.ne.s32.totalorder %s145, %s159
    %p161 = scmp.eq.s32.totalorder %s30, 0
    %p162 = por %p160, %p161
    %s164 = sadd.s32 %s163, 1
    %p167 = scmp.eq.s32.totalorder %s24, 1
    %p168 = scmp.ne.s32.totalorder %s163, %s165
    %p169 = scmp.eq.s32.totalorder %s24, 0
    %p170 = por %p168, %p169
    %p171 = scmp.ne.s32.totalorder %s163, %s165
    %p172 = scmp.eq.s32.totalorder %s29, 1
    %p173 = por %p171, %p172
    %p174 = scmp.ne.s32.totalorder %s165, %s166
    %p175 = scmp.eq.s32.totalorder %s29, 0
    %p176 = por %p174, %p175
    %p177 = scmp.ne.s32.totalorder %s165, %s166
    %p178 = scmp.eq.s32.totalorder %s30, 1
    %p179 = por %p177, %p178
    %p181 = scmp.ne.s32.totalorder %s166, %s180
    %p182 = scmp.eq.s32.totalorder %s30, 0
    %p183 = por %p181, %p182
    %s185 = sadd.s32 %s184, 1
    %p188 = scmp.eq.s32.totalorder %s24, 1
    %p189 = scmp.ne.s32.totalorder %s184, %s186
    %p190 = scmp.eq.s32.totalorder %s24, 0
    %p191 = por %p189, %p190
    %p192 = scmp.ne.s32.totalorder %s184, %s186
    %p193 = scmp.eq.s32.totalorder %s29, 1
    %p194 = por %p192, %p193
    %p195 = scmp.ne.s32.totalorder %s186, %s187
    %p196 = scmp.eq.s32.totalorder %s29, 0
    %p197 = por %p195, %p196
    %p198 = scmp.ne.s32.totalorder %s186, %s187
    %p199 = scmp.eq.s32.totalorder %s30, 1
    %p200 = por %p198, %p199
    %p202 = scmp.ne.s32.totalorder %s187, %s201
    %p203 = scmp.eq.s32.totalorder %s30, 0
    %p204 = por %p202, %p203
    %s206 = sadd.s32 %s205, 1
    %p209 = scmp.eq.s32.totalorder %s24, 1
    %p210 = scmp.ne.s32.totalorder %s205, %s207
    %p211 = scmp.eq.s32.totalorder %s24, 0
    %p212 = por %p210, %p211
    %p213 = scmp.ne.s32.totalorder %s205, %s207
    %p214 = scmp.eq.s32.totalorder %s29, 1
    %p215 = por %p213, %p214
    %p216 = scmp.ne.s32.totalorder %s207, %s208
    %p217 = scmp.eq.s32.totalorder %s29, 0
    %p218 = por %p216, %p217
    %p219 = scmp.ne.s32.totalorder %s207, %s208
    %p220 = scmp.eq.s32.totalorder %s30, 1
    %p221 = por %p219, %p220
    %p223 = scmp.ne.s32.totalorder %s208, %s222
    %p224 = scmp.eq.s32.totalorder %s30, 0
    %p225 = por %p223, %p224
    %s227 = sadd.s32 %s226, 1
    %p230 = scmp.eq.s32.totalorder %s24, 1
    %p231 = scmp.ne.s32.totalorder %s226, %s228
    %p232 = scmp.eq.s32.totalorder %s24, 0
    %p233 = por %p231, %p232
    %p234 = scmp.ne.s32.totalorder %s226, %s228
    %p235 = scmp.eq.s32.totalorder %s29, 1
    %p236 = por %p234, %p235
    %p237 = scmp.ne.s32.totalorder %s228, %s229
    %p238 = scmp.eq.s32.totalorder %s29, 0
    %p239 = por %p237, %p238
    %p240 = scmp.ne.s32.totalorder %s228, %s229
    %p241 = scmp.eq.s32.totalorder %s30, 1
    %p242 = por %p240, %p241
    %p244 = scmp.ne.s32.totalorder %s229, %s243
    %p245 = scmp.eq.s32.totalorder %s30, 0
    %p246 = por %p244, %p245
    %s248 = sadd.s32 %s247, 1
    %p251 = scmp.eq.s32.totalorder %s24, 1
    %p252 = scmp.ne.s32.totalorder %s247, %s249
    %p253 = scmp.eq.s32.totalorder %s24, 0
    %p254 = por %p252, %p253
    %p255 = scmp.ne.s32.totalorder %s247, %s249
    %p256 = scmp.eq.s32.totalorder %s29, 1
    %p257 = por %p255, %p256
    %p258 = scmp.ne.s32.totalorder %s249, %s250
    %p259 = scmp.eq.s32.totalorder %s29, 0
    %p260 = por %p258, %p259
    %p261 = scmp.ne.s32.totalorder %s249, %s250
    %p262 = scmp.eq.s32.totalorder %s30, 1
    %p263 = por %p261, %p262
    %p265 = scmp.ne.s32.totalorder %s250, %s264
    %p266 = scmp.eq.s32.totalorder %s30, 0
    %p267 = por %p265, %p266
    %s269 = sadd.s32 %s268, 1
    %p272 = scmp.eq.s32.totalorder %s24, 1
    %p273 = scmp.ne.s32.totalorder %s268, %s270
    %p274 = scmp.eq.s32.totalorder %s24, 0
    %p275 = por %p273, %p274
    %p276 = scmp.ne.s32.totalorder %s268, %s270
    %p277 = scmp.eq.s32.totalorder %s29, 1
    %p278 = por %p276, %p277
    %p279 = scmp.ne.s32.totalorder %s270, %s271
    %p280 = scmp.eq.s32.totalorder %s29, 0
    %p281 = por %p279, %p280
    %p282 = scmp.ne.s32.totalorder %s270, %s271
    %p283 = scmp.eq.s32.totalorder %s30, 1
    %p284 = por %p282, %p283
    %p286 = scmp.ne.s32.totalorder %s271, %s285
    %p287 = scmp.eq.s32.totalorder %s30, 0
    %p288 = por %p286, %p287
    %s290 = sadd.s32 %s289, 1
    %p293 = scmp.eq.s32.totalorder %s24, 1
    %p294 = scmp.ne.s32.totalorder %s289, %s291
    %p295 = scmp.eq.s32.totalorder %s24, 0
    %p296 = por %p294, %p295
    %p297 = scmp.ne.s32.totalorder %s289, %s291
    %p298 = scmp.eq.s32.totalorder %s29, 1
    %p299 = por %p297, %p298
    %p300 = scmp.ne.s32.totalorder %s291, %s292
    %p301 = scmp.eq.s32.totalorder %s29, 0
    %p302 = por %p300, %p301
    %p303 = scmp.ne.s32.totalorder %s291, %s292
    %p304 = scmp.eq.s32.totalorder %s30, 1
    %p305 = por %p303, %p304
    %p307 = scmp.ne.s32.totalorder %s292, %s306
    %p308 = scmp.eq.s32.totalorder %s30, 0
    %p309 = por %p307, %p308
    %s311 = sadd.s32 %s310, 1
    %p314 = scmp.eq.s32.totalorder %s24, 1
    %p315 = scmp.ne.s32.totalorder %s310, %s312
    %p316 = scmp.eq.s32.totalorder %s24, 0
    %p317 = por %p315, %p316
    %p318 = scmp.ne.s32.totalorder %s310, %s312
    %p319 = scmp.eq.s32.totalorder %s29, 1
    %p320 = por %p318, %p319
    %p321 = scmp.ne.s32.totalorder %s312, %s313
    %p322 = scmp.eq.s32.totalorder %s29, 0
    %p323 = por %p321, %p322
    %p324 = scmp.ne.s32.totalorder %s312, %s313
    %p325 = scmp.eq.s32.totalorder %s30, 1
    %p326 = por %p324, %p325
    %p328 = scmp.ne.s32.totalorder %s313, %s327
    %p329 = scmp.eq.s32.totalorder %s30, 0
    %p330 = por %p328, %p329
    %s332 = sadd.s32 %s331, 1
    %p335 = scmp.eq.s32.totalorder %s24, 1
    %p336 = scmp.ne.s32.totalorder %s331, %s333
    %p337 = scmp.eq.s32.totalorder %s24, 0
    %p338 = por %p336, %p337
    %p339 = scmp.ne.s32.totalorder %s331, %s333
    %p340 = scmp.eq.s32.totalorder %s29, 1
    %p341 = por %p339, %p340
    %p342 = scmp.ne.s32.totalorder %s333, %s334
    %p343 = scmp.eq.s32.totalorder %s29, 0
    %p344 = por %p342, %p343
    %p345 = scmp.ne.s32.totalorder %s333, %s334
    %p346 = scmp.eq.s32.totalorder %s30, 1
    %p347 = por %p345, %p346
    %p349 = scmp.ne.s32.totalorder %s334, %s348
    %p350 = scmp.eq.s32.totalorder %s30, 0
    %p351 = por %p349, %p350
    %s353 = sadd.s32 %s352, 1
    %p356 = scmp.eq.s32.totalorder %s24, 1
    %p357 = scmp.ne.s32.totalorder %s352, %s354
    %p358 = scmp.eq.s32.totalorder %s24, 0
    %p359 = por %p357, %p358
    %p360 = scmp.ne.s32.totalorder %s352, %s354
    %p361 = scmp.eq.s32.totalorder %s29, 1
    %p362 = por %p360, %p361
    %p363 = scmp.ne.s32.totalorder %s354, %s355
    %p364 = scmp.eq.s32.totalorder %s29, 0
    %p365 = por %p363, %p364
    %p366 = scmp.ne.s32.totalorder %s354, %s355
    %p367 = scmp.eq.s32.totalorder %s30, 1
    %p368 = por %p366, %p367
    %p370 = scmp.ne.s32.totalorder %s355, %s369
    %p371 = scmp.eq.s32.totalorder %s30, 0
    %p372 = por %p370, %p371
    %s374 = sadd.s32 %s373, 1
    %p377 = scmp.eq.s32.totalorder %s24, 1
    %p378 = scmp.ne.s32.totalorder %s373, %s375
    %p379 = scmp.eq.s32.totalorder %s24, 0
    %p380 = por %p378, %p379
    %p381 = scmp.ne.s32.totalorder %s373, %s375
    %p382 = scmp.eq.s32.totalorder %s29, 1
    %p383 = por %p381, %p382
    %p384 = scmp.ne.s32.totalorder %s375, %s376
    %p385 = scmp.eq.s32.totalorder %s29, 0
    %p386 = por %p384, %p385
    %p387 = scmp.ne.s32.totalorder %s375, %s376
    %p388 = scmp.eq.s32.totalorder %s30, 1
    %p389 = por %p387, %p388
    %p391 = scmp.ne.s32.totalorder %s376, %s390
    %p392 = scmp.eq.s32.totalorder %s30, 0
    %p393 = por %p391, %p392
    %s395 = sadd.s32 %s394, 1
    %p398 = scmp.eq.s32.totalorder %s24, 1
    %p399 = scmp.ne.s32.totalorder %s394, %s396
    %p400 = scmp.eq.s32.totalorder %s24, 0
    %p401 = por %p399, %p400
    %p402 = scmp.ne.s32.totalorder %s394, %s396
    %p403 = scmp.eq.s32.totalorder %s29, 1
    %p404 = por %p402, %p403
    %p405 = scmp.ne.s32.totalorder %s396, %s397
    %p406 = scmp.eq.s32.totalorder %s29, 0
    %p407 = por %p405, %p406
    %p408 = scmp.ne.s32.totalorder %s396, %s397
    %p409 = scmp.eq.s32.totalorder %s30, 1
    %p410 = por %p408, %p409
    %p412 = scmp.ne.s32.totalorder %s397, %s411
    %p413 = scmp.eq.s32.totalorder %s30, 0
    %p414 = por %p412, %p413
    %s415 = ssub.s32 %s24, %s31
    %p416 = scmp.eq.s32.totalorder %s415, 0
    %s418 = sadd.s32 %s417, 1
    %s419 = scalar_select %p416, %s417, %s418
    %p422 = pneg %p416
    %p423 = scmp.eq.s32.totalorder %s24, 1
    %p424 = por %p422, %p423
    %p425 = scmp.ne.s32.totalorder %s417, %s420
    %p426 = scmp.eq.s32.totalorder %s24, 0
    %p427 = por %p425, %p426
    %p428 = scmp.ne.s32.totalorder %s417, %s420
    %p429 = scmp.eq.s32.totalorder %s29, 1
    %p430 = por %p428, %p429
    %p431 = scmp.ne.s32.totalorder %s420, %s421
    %p432 = scmp.eq.s32.totalorder %s29, 0
    %p433 = por %p431, %p432
    %p434 = scmp.ne.s32.totalorder %s420, %s421
    %p435 = scmp.eq.s32.totalorder %s30, 1
    %p436 = por %p434, %p435
    %p438 = scmp.ne.s32.totalorder %s421, %s437
    %p439 = scmp.eq.s32.totalorder %s30, 0
    %p440 = por %p438, %p439
    %p441 = scmp.le.s32.totalorder 1, %s24
    %p442 = scmp.lt.s32.totalorder %s24, 3
    %p443 = pnand %p441, %p442
    %p444 = pneg %p443
    // Predicated region
    $region9: #{tpu_custom_call.1} parent=5 // pred_check
      _
    $region10: #{tpu_custom_call.1} parent=5 // pred_check_branch
      %446 = sbr.rel (%p443) target = $region12
    $region11: #{tpu_custom_call.1} parent=5 // pred_region
      %s447 = ssub.s32 %s24, 1
      // Predicated region
      $region13: #{tpu_custom_call.1} parent=11 // pred_check
        %p448 = pneg %p71
      $region14: #{tpu_custom_call.1} parent=11 // pred_check_branch
        %450 = sbr.rel (%p448) target = $region16
      $region15: #{tpu_custom_call.1} parent=11 // pred_region
        _
      $region16: #{tpu_custom_call.1} parent=11 // pred_fallthru
        _
      // Predicated region
      $region17: #{tpu_custom_call.1} parent=11 // pred_check
        %p451 = pneg %p92
      $region18: #{tpu_custom_call.1} parent=11 // pred_check_branch
        %453 = sbr.rel (%p451) target = $region20
      $region19: #{tpu_custom_call.1} parent=11 // pred_region
        _
      $region20: #{tpu_custom_call.1} parent=11 // pred_fallthru
        _
      // Predicated region
      $region21: #{tpu_custom_call.1} parent=11 // pred_check
        %p454 = pneg %p113
      $region22: #{tpu_custom_call.1} parent=11 // pred_check_branch
        %456 = sbr.rel (%p454) target = $region24
      $region23: #{tpu_custom_call.1} parent=11 // pred_region
        _
      $region24: #{tpu_custom_call.1} parent=11 // pred_fallthru
        _
      // Predicated region
      $region25: #{tpu_custom_call.1} parent=11 // pred_check
        %p457 = pneg %p134
      $region26: #{tpu_custom_call.1} parent=11 // pred_check_branch
        %459 = sbr.rel (%p457) target = $region28
      $region27: #{tpu_custom_call.1} parent=11 // pred_region
        _
      $region28: #{tpu_custom_call.1} parent=11 // pred_fallthru
        _
      // Predicated region
      $region29: #{tpu_custom_call.1} parent=11 // pred_check
        %p460 = pneg %p155
      $region30: #{tpu_custom_call.1} parent=11 // pred_check_branch
        %462 = sbr.rel (%p460) target = $region32
      $region31: #{tpu_custom_call.1} parent=11 // pred_region
        _
      $region32: #{tpu_custom_call.1} parent=11 // pred_fallthru
        _
      // Predicated region
      $region33: #{tpu_custom_call.1} parent=11 // pred_check
        %p463 = pneg %p176
      $region34: #{tpu_custom_call.1} parent=11 // pred_check_branch
        %465 = sbr.rel (%p463) target = $region36
      $region35: #{tpu_custom_call.1} parent=11 // pred_region
        _
      $region36: #{tpu_custom_call.1} parent=11 // pred_fallthru
        _
      // Predicated region
      $region37: #{tpu_custom_call.1} parent=11 // pred_check
        %p466 = pneg %p197
      $region38: #{tpu_custom_call.1} parent=11 // pred_check_branch
        %468 = sbr.rel (%p466) target = $region40
      $region39: #{tpu_custom_call.1} parent=11 // pred_region
        _
      $region40: #{tpu_custom_call.1} parent=11 // pred_fallthru
        _
      // Predicated region
      $region41: #{tpu_custom_call.1} parent=11 // pred_check
        %p469 = pneg %p218
      $region42: #{tpu_custom_call.1} parent=11 // pred_check_branch
        %471 = sbr.rel (%p469) target = $region44
      $region43: #{tpu_custom_call.1} parent=11 // pred_region
        _
      $region44: #{tpu_custom_call.1} parent=11 // pred_fallthru
        _
      // Predicated region
      $region45: #{tpu_custom_call.1} parent=11 // pred_check
        %p472 = pneg %p239
      $region46: #{tpu_custom_call.1} parent=11 // pred_check_branch
        %474 = sbr.rel (%p472) target = $region48
      $region47: #{tpu_custom_call.1} parent=11 // pred_region
        _
      $region48: #{tpu_custom_call.1} parent=11 // pred_fallthru
        _
      // Predicated region
      $region49: #{tpu_custom_call.1} parent=11 // pred_check
        %p475 = pneg %p260
      $region50: #{tpu_custom_call.1} parent=11 // pred_check_branch
        %477 = sbr.rel (%p475) target = $region52
      $region51: #{tpu_custom_call.1} parent=11 // pred_region
        _
      $region52: #{tpu_custom_call.1} parent=11 // pred_fallthru
        _
      // Predicated region
      $region53: #{tpu_custom_call.1} parent=11 // pred_check
        %p478 = pneg %p281
      $region54: #{tpu_custom_call.1} parent=11 // pred_check_branch
        %480 = sbr.rel (%p478) target = $region56
      $region55: #{tpu_custom_call.1} parent=11 // pred_region
        _
      $region56: #{tpu_custom_call.1} parent=11 // pred_fallthru
        _
      // Predicated region
      $region57: #{tpu_custom_call.1} parent=11 // pred_check
        %p481 = pneg %p302
      $region58: #{tpu_custom_call.1} parent=11 // pred_check_branch
        %483 = sbr.rel (%p481) target = $region60
      $region59: #{tpu_custom_call.1} parent=11 // pred_region
        _
      $region60: #{tpu_custom_call.1} parent=11 // pred_fallthru
        _
      // Predicated region
      $region61: #{tpu_custom_call.1} parent=11 // pred_check
        %p484 = pneg %p323
      $region62: #{tpu_custom_call.1} parent=11 // pred_check_branch
        %486 = sbr.rel (%p484) target = $region64
      $region63: #{tpu_custom_call.1} parent=11 // pred_region
        _
      $region64: #{tpu_custom_call.1} parent=11 // pred_fallthru
        _
      // Predicated region
      $region65: #{tpu_custom_call.1} parent=11 // pred_check
        %p487 = pneg %p344
      $region66: #{tpu_custom_call.1} parent=11 // pred_check_branch
        %489 = sbr.rel (%p487) target = $region68
      $region67: #{tpu_custom_call.1} parent=11 // pred_region
        _
      $region68: #{tpu_custom_call.1} parent=11 // pred_fallthru
        _
      // Predicated region
      $region69: #{tpu_custom_call.1} parent=11 // pred_check
        %p490 = pneg %p365
      $region70: #{tpu_custom_call.1} parent=11 // pred_check_branch
        %492 = sbr.rel (%p490) target = $region72
      $region71: #{tpu_custom_call.1} parent=11 // pred_region
        _
      $region72: #{tpu_custom_call.1} parent=11 // pred_fallthru
        _
      // Predicated region
      $region73: #{tpu_custom_call.1} parent=11 // pred_check
        %p493 = pneg %p386
      $region74: #{tpu_custom_call.1} parent=11 // pred_check_branch
        %495 = sbr.rel (%p493) target = $region76
      $region75: #{tpu_custom_call.1} parent=11 // pred_region
        _
      $region76: #{tpu_custom_call.1} parent=11 // pred_fallthru
        _
      // Predicated region
      $region77: #{tpu_custom_call.1} parent=11 // pred_check
        %p496 = pneg %p407
      $region78: #{tpu_custom_call.1} parent=11 // pred_check_branch
        %498 = sbr.rel (%p496) target = $region80
      $region79: #{tpu_custom_call.1} parent=11 // pred_region
        _
      $region80: #{tpu_custom_call.1} parent=11 // pred_fallthru
        _
    $region12: #{tpu_custom_call.1} parent=5 // pred_fallthru
      _
    %p499 = scmp.lt.s32.totalorder %s24, 2
    // Predicated region
    $region81: #{tpu_custom_call.1} parent=5 // pred_check
      %p500 = pneg %p499
    $region82: #{tpu_custom_call.1} parent=5 // pred_check_branch
      %502 = sbr.rel (%p500) target = $region84
    $region83: #{tpu_custom_call.1} parent=5 // pred_region
      // Predicated region
      $region85: #{tpu_custom_call.1} parent=83 // pred_check
        %p503 = pneg %p44
      $region86: #{tpu_custom_call.1} parent=83 // pred_check_branch
        %505 = sbr.rel (%p503) target = $region88
      $region87: #{tpu_custom_call.1} parent=83 // pred_region
        %p506 = scmp.lt.s32.totalorder %s24, 1
        %s507 = scalar_select %p506, %s24, 1
        %s508 = smul.addr %s507, 8
        %s509 = smul.addr %s508, 8
        %s510 = scalar_lea.vmem %s0, %s509
      $region88: #{tpu_custom_call.1} parent=83 // pred_fallthru
        _
    $region84: #{tpu_custom_call.1} parent=5 // pred_fallthru
      _
    %p511 = scmp.le.s32.totalorder 1, %s24
    %p512 = scmp.lt.s32.totalorder %s24, 3
    %p513 = pnand %p511, %p512
    %p514 = pneg %p513
    // Predicated region
    $region89: #{tpu_custom_call.1} parent=5 // pred_check
      _
    $region90: #{tpu_custom_call.1} parent=5 // pred_check_branch
      %516 = sbr.rel (%p513) target = $region92
    $region91: #{tpu_custom_call.1} parent=5 // pred_region
      %s517 = ssub.s32 %s24, 1
      %p518 = scmp.lt.s32.totalorder %s29, 1
      %s519 = scalar_select %p518, %s29, 1
      %s520 = smul.addr %s519, 8
      %s521 = smul.addr %s520, 8
      %s522 = scalar_lea.vmem %s0, %s521
      %p523 = pneg %p50
      %p524 = pneg %p47
      %p525 = pneg %p71
      %p526 = pneg %p68
      %p527 = pneg %p92
      %p528 = pneg %p89
      %p529 = pneg %p113
      %p530 = pneg %p110
      %p531 = pneg %p134
      %p532 = pneg %p131
      %p533 = pneg %p155
      %p534 = pneg %p152
      %p535 = pneg %p176
      %p536 = pneg %p173
      %p537 = pneg %p197
      %p538 = pneg %p194
      %p539 = pneg %p218
      %p540 = pneg %p215
      %p541 = pneg %p239
      %p542 = pneg %p236
      %p543 = pneg %p260
      %p544 = pneg %p257
      %p545 = pneg %p281
      %p546 = pneg %p278
      %p547 = pneg %p302
      %p548 = pneg %p299
      %p549 = pneg %p323
      %p550 = pneg %p320
      %p551 = pneg %p344
      %p552 = pneg %p341
      %p553 = pneg %p365
      %p554 = pneg %p362
      %p555 = pneg %p386
      %p556 = pneg %p383
      %p557 = pneg %p407
      %p558 = pneg %p404
      %p559 = pneg %p433
      %p560 = pneg %p430
      %p561 = scmp.lt.s32.totalorder %s29, 1
      %s562 = scalar_select %p561, %s29, 1
      %s563 = smul.addr %s562, 8
      %s564 = smul.addr %s563, 8
      %s565 = scalar_lea.vmem %s18, %s564
      %p566 = scmp.lt.s32.totalorder %s29, 1
      %s567 = scalar_select %p566, %s29, 1
      %s568 = smul.addr %s567, 8
      %s569 = smul.addr %s568, 8
      %s570 = scalar_lea.vmem %s0, %s569
      %p571 = scmp.lt.s32.totalorder %s29, 1
      %s572 = scalar_select %p571, %s29, 1
      %s573 = smul.addr %s572, 8
      %s574 = smul.addr %s573, 8
      %s575 = scalar_lea.vmem %s18, %s574
      %v577 = vld [vmem:[%s570] sm:$0xff]
      %v578 = vld [vmem:[%s570 + $0x8] sm:$0xff]
      %v579 = vld [vmem:[%s570 + $0x10] sm:$0xff]
      %v580 = vld [vmem:[%s570 + $0x18] sm:$0xff]
      %v581 = vld [vmem:[%s570 + $0x20] sm:$0xff]
      %v582 = vld [vmem:[%s570 + $0x28] sm:$0xff]
      %v583 = vld [vmem:[%s570 + $0x30] sm:$0xff]
      %v584 = vld [vmem:[%s570 + $0x38] sm:$0xff]
      %v585 = vld [vmem:[%s1] sm:$0x1]
      %v586 = vld [vmem:[%s2] sm:$0x1]
      %vm587 = vcmask 261120
      %v588 = vsel %vm587, %v577, 0.0
      %589 = vadd.xlane.f32.xlu0 %v588
      %v590 = vpop.xlane.xlu0 %589
      %v591 = vsel %vm587, %v578, 0.0
      %592 = vadd.xlane.f32.xlu0 %v591
      %v593 = vpop.xlane.xlu0 %592
      %v594 = vsel %vm587, %v579, 0.0
      %595 = vadd.xlane.f32.xlu0 %v594
      %v596 = vpop.xlane.xlu0 %595
      %v597 = vsel %vm587, %v580, 0.0
      %598 = vadd.xlane.f32.xlu0 %v597
      %v599 = vpop.xlane.xlu0 %598
      %v600 = vsel %vm587, %v581, 0.0
      %601 = vadd.xlane.f32.xlu0 %v600
      %v602 = vpop.xlane.xlu0 %601
      %v603 = vsel %vm587, %v582, 0.0
      %604 = vadd.xlane.f32.xlu0 %v603
      %v605 = vpop.xlane.xlu0 %604
      %v606 = vsel %vm587, %v583, 0.0
      %607 = vadd.xlane.f32.xlu0 %v606
      %v608 = vpop.xlane.xlu0 %607
      %v609 = vsel %vm587, %v584, 0.0
      %610 = vadd.xlane.f32.xlu0 %v609
      %v611 = vpop.xlane.xlu0 %610
      %v612 = vrcp.pop 32.0
      %v613 = vmul.f32 %v590, %v612
      %v614 = vmul.f32 %v593, %v612
      %v615 = vmul.f32 %v596, %v612
      %v616 = vmul.f32 %v599, %v612
      %v617 = vmul.f32 %v602, %v612
      %v618 = vmul.f32 %v605, %v612
      %v619 = vmul.f32 %v608, %v612
      %v620 = vmul.f32 %v611, %v612
      %v621 = vsub.f32 %v577, %v613
      %v622 = vsub.f32 %v578, %v614
      %v623 = vsub.f32 %v579, %v615
      %v624 = vsub.f32 %v580, %v616
      %v625 = vsub.f32 %v581, %v617
      %v626 = vsub.f32 %v582, %v618
      %v627 = vsub.f32 %v583, %v619
      %v628 = vsub.f32 %v584, %v620
      %v629 = vmul.f32 %v621, %v621
      %v630 = vmul.f32 %v622, %v622
      %v631 = vmul.f32 %v623, %v623
      %v632 = vmul.f32 %v624, %v624
      %v633 = vmul.f32 %v625, %v625
      %v634 = vmul.f32 %v626, %v626
      %v635 = vmul.f32 %v627, %v627
      %v636 = vmul.f32 %v628, %v628
      %v637 = vsel %vm587, %v629, 0.0
      %638 = vadd.xlane.f32.xlu0 %v637
      %v639 = vpop.xlane.xlu0 %638
      %v640 = vsel %vm587, %v630, 0.0
      %641 = vadd.xlane.f32.xlu0 %v640
      %v642 = vpop.xlane.xlu0 %641
      %v643 = vsel %vm587, %v631, 0.0
      %644 = vadd.xlane.f32.xlu0 %v643
      %v645 = vpop.xlane.xlu0 %644
      %v646 = vsel %vm587, %v632, 0.0
      %647 = vadd.xlane.f32.xlu0 %v646
      %v648 = vpop.xlane.xlu0 %647
      %v649 = vsel %vm587, %v633, 0.0
      %650 = vadd.xlane.f32.xlu0 %v649
      %v651 = vpop.xlane.xlu0 %650
      %v652 = vsel %vm587, %v634, 0.0
      %653 = vadd.xlane.f32.xlu0 %v652
      %v654 = vpop.xlane.xlu0 %653
      %v655 = vsel %vm587, %v635, 0.0
      %656 = vadd.xlane.f32.xlu0 %v655
      %v657 = vpop.xlane.xlu0 %656
      %v658 = vsel %vm587, %v636, 0.0
      %659 = vadd.xlane.f32.xlu0 %v658
      %v660 = vpop.xlane.xlu0 %659
      %v661 = vmul.f32 %v639, %v612
      %v662 = vmul.f32 %v642, %v612
      %v663 = vmul.f32 %v645, %v612
      %v664 = vmul.f32 %v648, %v612
      %v665 = vmul.f32 %v651, %v612
      %v666 = vmul.f32 %v654, %v612
      %v667 = vmul.f32 %v657, %v612
      %v668 = vmul.f32 %v660, %v612
      %v669 = vadd.f32 %v661, 1e-05
      %v670 = vadd.f32 %v662, 1e-05
      %v671 = vadd.f32 %v663, 1e-05
      %v672 = vadd.f32 %v664, 1e-05
      %v673 = vadd.f32 %v665, 1e-05
      %v674 = vadd.f32 %v666, 1e-05
      %v675 = vadd.f32 %v667, 1e-05
      %v676 = vadd.f32 %v668, 1e-05
      %v677 = vrsqrt.pop %v669
      %v678 = vrsqrt.pop %v670
      %v679 = vrsqrt.pop %v671
      %v680 = vrsqrt.pop %v672
      %v681 = vrsqrt.pop %v673
      %v682 = vrsqrt.pop %v674
      %v683 = vrsqrt.pop %v675
      %v684 = vrsqrt.pop %v676
      %v685 = vmul.f32 %v621, %v677
      %v686 = vmul.f32 %v622, %v678
      %v687 = vmul.f32 %v623, %v679
      %v688 = vmul.f32 %v624, %v680
      %v689 = vmul.f32 %v625, %v681
      %v690 = vmul.f32 %v626, %v682
      %v691 = vmul.f32 %v627, %v683
      %v692 = vmul.f32 %v628, %v684
      %v694 = vlaneseq
      %v695 = vshrl.u32 %v694, 7
      %v696 = vsub.s32 0, %v695
      %v697 = vrot.slane %v585, %v696
      %v699 = vmul.f32 %v685, %v697
      %v700 = vmul.f32 %v686, %v697
      %v701 = vmul.f32 %v687, %v697
      %v702 = vmul.f32 %v688, %v697
      %v703 = vmul.f32 %v689, %v697
      %v704 = vmul.f32 %v690, %v697
      %v705 = vmul.f32 %v691, %v697
      %v706 = vmul.f32 %v692, %v697
      %v708 = vlaneseq
      %v709 = vshrl.u32 %v708, 7
      %v710 = vsub.s32 0, %v709
      %v711 = vrot.slane %v586, %v710
      %v713 = vadd.f32 %v699, %v711
      %v714 = vadd.f32 %v700, %v711
      %v715 = vadd.f32 %v701, %v711
      %v716 = vadd.f32 %v702, %v711
      %v717 = vadd.f32 %v703, %v711
      %v718 = vadd.f32 %v704, %v711
      %v719 = vadd.f32 %v705, %v711
      %v720 = vadd.f32 %v706, %v711
      %v721 = vpack.c.bf16 %v714, %v713
      %v722 = vpack.c.bf16 %v716, %v715
      %v723 = vpack.c.bf16 %v718, %v717
      %v724 = vpack.c.bf16 %v720, %v719
      %v725 = vld [vmem:[%s4] sm:$0xf]
      %v726 = vld [vmem:[%s4 + $0x4] sm:$0xf]
      %v727 = vld [vmem:[%s4 + $0x8] sm:$0xf]
      %v728 = vld [vmem:[%s4 + $0xc] sm:$0xf]
      %v729 = vld [vmem:[%s5] sm:$0x1]
      %v731 = vlaneseq
      %v732 = vshrl.u32 %v731, 7
      %v733 = vsub.s32 0, %v732
      %v734 = vrot.slane %v729, %v733
      %v740 = vunpack.c.l.b16 %v725
      %v741 = vunpack.c.l.b16 %v726
      %v742 = vunpack.c.l.b16 %v727
      %v743 = vunpack.c.l.b16 %v728
      %v744 = vpack.c.b16 %v741, %v740
      %v745 = vpack.c.b16 %v743, %v742
      %v749 = vsel %vm587, %v721, 0
      %v752 = vsel %vm587, %v722, 0
      %v755 = vsel %vm587, %v723, 0
      %v758 = vsel %vm587, %v724, 0
      %760 = vmatprep.subr.bf16.mxu0 0
      %761 = vmatpush1.bf16.msra.mxu0 0
      %762 = vmatprep.subr.bf16.mxu0 0
      %763 = vmatpush1.bf16.msra.mxu0 0
      %764 = vmatprep.subr.bf16.mxu0 0
      %765 = vmatpush1.bf16.msra.mxu0 0
      %766 = vmatprep.subr.bf16.mxu0 0
      %767 = vmatpush1.bf16.msra.mxu0 0
      %768 = vmatprep.subr.bf16.mxu0 0
      %769 = vmatpush1.bf16.msra.mxu0 0
      %770 = vmatprep.subr.bf16.mxu0 0
      %771 = vmatpush1.bf16.msra.mxu0 0
      %772 = vmatprep.subr.bf16.mxu0 0
      %773 = vmatpush1.bf16.msra.mxu0 %v745
      %774 = vmatprep.subr.bf16.mxu0 0
      %775 = vmatpush1.bf16.msra.mxu0 %v744
      %776 = vmatprep.subr.bf16.mxu0 0
      %777 = vmatpush2.bf16.msra.mxu0 0
      %778 = vmatprep.subr.bf16.mxu0 0
      %779 = vmatpush2.bf16.msra.mxu0 0
      %780 = vmatprep.subr.bf16.mxu0 0
      %781 = vmatpush2.bf16.msra.mxu0 0
      %782 = vmatprep.subr.bf16.mxu0 0
      %783 = vmatpush2.bf16.msra.mxu0 0
      %784 = vmatprep.subr.bf16.mxu0 0
      %785 = vmatpush2.bf16.msra.mxu0 0
      %786 = vmatprep.subr.bf16.mxu0 0
      %787 = vmatpush2.bf16.msra.mxu0 0
      %788 = vmatprep.subr.bf16.mxu0 0
      %789 = vmatpush2.bf16.msra.mxu0 0
      %790 = vmatprep.subr.bf16.mxu0 0
      %791 = vmatpush2.bf16.msra.mxu0 0
      %792 = vmatprep.mubr.bf16.mxu0 0
      %793 = vmatmul.mubr.bf16.gmra.mxu0 %v749
      %v794 = vpop.f32.mrf.mxu0
      %v795 = vadd.f32 %v734, %v794
      %v796 = vpop.f32.mrf.mxu0
      %v797 = vpop.f32.mrf.mxu0
      %v798 = vadd.f32 %v734, %v797
      %v799 = vpop.f32.mrf.mxu0
      %800 = vmatprep.mubr.bf16.mxu0 0
      %801 = vmatmul.mubr.bf16.gmra.mxu0 %v752
      %v802 = vpop.f32.mrf.mxu0
      %v803 = vadd.f32 %v734, %v802
      %v804 = vpop.f32.mrf.mxu0
      %v805 = vpop.f32.mrf.mxu0
      %v806 = vadd.f32 %v734, %v805
      %v807 = vpop.f32.mrf.mxu0
      %808 = vmatprep.mubr.bf16.mxu0 0
      %809 = vmatmul.mubr.bf16.gmra.mxu0 %v755
      %v810 = vpop.f32.mrf.mxu0
      %v811 = vadd.f32 %v734, %v810
      %v812 = vpop.f32.mrf.mxu0
      %v813 = vpop.f32.mrf.mxu0
      %v814 = vadd.f32 %v734, %v813
      %v815 = vpop.f32.mrf.mxu0
      %816 = vmatprep.mubr.bf16.mxu0 0
      %817 = vmatmul.mubr.bf16.gmra.mxu0 %v758
      %v818 = vpop.f32.mrf.mxu0
      %v819 = vadd.f32 %v734, %v818
      %v820 = vpop.f32.mrf.mxu0
      %v821 = vpop.f32.mrf.mxu0
      %v822 = vadd.f32 %v734, %v821
      %v823 = vpop.f32.mrf.mxu0
      %824 = vdwg.mxu0
      %v825 = vld [vmem:[%s6] sm:$0xf]
      %v826 = vld [vmem:[%s6 + $0x4] sm:$0xf]
      %v827 = vld [vmem:[%s6 + $0x8] sm:$0xf]
      %v828 = vld [vmem:[%s6 + $0xc] sm:$0xf]
      %v829 = vld [vmem:[%s7] sm:$0x1]
      %v831 = vlaneseq
      %v832 = vshrl.u32 %v831, 7
      %v833 = vsub.s32 0, %v832
      %v834 = vrot.slane %v829, %v833
      %v840 = vunpack.c.l.b16 %v825
      %v841 = vunpack.c.l.b16 %v826
      %v842 = vunpack.c.l.b16 %v827
      %v843 = vunpack.c.l.b16 %v828
      %v844 = vpack.c.b16 %v841, %v840
      %v845 = vpack.c.b16 %v843, %v842
      %848 = vmatprep.subr.bf16.mxu0 0
      %849 = vmatpush1.bf16.msra.mxu0 0
      %850 = vmatprep.subr.bf16.mxu0 0
      %851 = vmatpush1.bf16.msra.mxu0 0
      %852 = vmatprep.subr.bf16.mxu0 0
      %853 = vmatpush1.bf16.msra.mxu0 0
      %854 = vmatprep.subr.bf16.mxu0 0
      %855 = vmatpush1.bf16.msra.mxu0 0
      %856 = vmatprep.subr.bf16.mxu0 0
      %857 = vmatpush1.bf16.msra.mxu0 0
      %858 = vmatprep.subr.bf16.mxu0 0
      %859 = vmatpush1.bf16.msra.mxu0 0
      %860 = vmatprep.subr.bf16.mxu0 0
      %861 = vmatpush1.bf16.msra.mxu0 %v845
      %862 = vmatprep.subr.bf16.mxu0 0
      %863 = vmatpush1.bf16.msra.mxu0 %v844
      %864 = vmatprep.subr.bf16.mxu0 0
      %865 = vmatpush2.bf16.msra.mxu0 0
      %866 = vmatprep.subr.bf16.mxu0 0
      %867 = vmatpush2.bf16.msra.mxu0 0
      %868 = vmatprep.subr.bf16.mxu0 0
      %869 = vmatpush2.bf16.msra.mxu0 0
      %870 = vmatprep.subr.bf16.mxu0 0
      %871 = vmatpush2.bf16.msra.mxu0 0
      %872 = vmatprep.subr.bf16.mxu0 0
      %873 = vmatpush2.bf16.msra.mxu0 0
      %874 = vmatprep.subr.bf16.mxu0 0
      %875 = vmatpush2.bf16.msra.mxu0 0
      %876 = vmatprep.subr.bf16.mxu0 0
      %877 = vmatpush2.bf16.msra.mxu0 0
      %878 = vmatprep.subr.bf16.mxu0 0
      %879 = vmatpush2.bf16.msra.mxu0 0
      %880 = vmatprep.mubr.bf16.mxu0 0
      %881 = vmatmul.mubr.bf16.gmra.mxu0 %v749
      %v882 = vpop.f32.mrf.mxu0
      %v883 = vadd.f32 %v834, %v882
      %v884 = vpop.f32.mrf.mxu0
      %v885 = vpop.f32.mrf.mxu0
      %v886 = vadd.f32 %v834, %v885
      %v887 = vpop.f32.mrf.mxu0
      %888 = vmatprep.mubr.bf16.mxu0 0
      %889 = vmatmul.mubr.bf16.gmra.mxu0 %v752
      %v890 = vpop.f32.mrf.mxu0
      %v891 = vadd.f32 %v834, %v890
      %v892 = vpop.f32.mrf.mxu0
      %v893 = vpop.f32.mrf.mxu0
      %v894 = vadd.f32 %v834, %v893
      %v895 = vpop.f32.mrf.mxu0
      %896 = vmatprep.mubr.bf16.mxu0 0
      %897 = vmatmul.mubr.bf16.gmra.mxu0 %v755
      %v898 = vpop.f32.mrf.mxu0
      %v899 = vadd.f32 %v834, %v898
      %v900 = vpop.f32.mrf.mxu0
      %v901 = vpop.f32.mrf.mxu0
      %v902 = vadd.f32 %v834, %v901
      %v903 = vpop.f32.mrf.mxu0
      %904 = vmatprep.mubr.bf16.mxu0 0
      %905 = vmatmul.mubr.bf16.gmra.mxu0 %v758
      %v906 = vpop.f32.mrf.mxu0
      %v907 = vadd.f32 %v834, %v906
      %v908 = vpop.f32.mrf.mxu0
      %v909 = vpop.f32.mrf.mxu0
      %v910 = vadd.f32 %v834, %v909
      %v911 = vpop.f32.mrf.mxu0
      %912 = vdwg.mxu0
      %v913 = vld [vmem:[%s8] sm:$0xf]
      %v914 = vld [vmem:[%s8 + $0x4] sm:$0xf]
      %v915 = vld [vmem:[%s8 + $0x8] sm:$0xf]
      %v916 = vld [vmem:[%s8 + $0xc] sm:$0xf]
      %v917 = vld [vmem:[%s9] sm:$0x1]
      %v919 = vlaneseq
      %v920 = vshrl.u32 %v919, 7
      %v921 = vsub.s32 0, %v920
      %v922 = vrot.slane %v917, %v921
      %v928 = vunpack.c.l.b16 %v913
      %v929 = vunpack.c.l.b16 %v914
      %v930 = vunpack.c.l.b16 %v915
      %v931 = vunpack.c.l.b16 %v916
      %v932 = vpack.c.b16 %v929, %v928
      %v933 = vpack.c.b16 %v931, %v930
      %936 = vmatprep.subr.bf16.mxu0 0
      %937 = vmatpush1.bf16.msra.mxu0 0
      %938 = vmatprep.subr.bf16.mxu0 0
      %939 = vmatpush1.bf16.msra.mxu0 0
      %940 = vmatprep.subr.bf16.mxu0 0
      %941 = vmatpush1.bf16.msra.mxu0 0
      %942 = vmatprep.subr.bf16.mxu0 0
      %943 = vmatpush1.bf16.msra.mxu0 0
      %944 = vmatprep.subr.bf16.mxu0 0
      %945 = vmatpush1.bf16.msra.mxu0 0
      %946 = vmatprep.subr.bf16.mxu0 0
      %947 = vmatpush1.bf16.msra.mxu0 0
      %948 = vmatprep.subr.bf16.mxu0 0
      %949 = vmatpush1.bf16.msra.mxu0 %v933
      %950 = vmatprep.subr.bf16.mxu0 0
      %951 = vmatpush1.bf16.msra.mxu0 %v932
      %952 = vmatprep.subr.bf16.mxu0 0
      %953 = vmatpush2.bf16.msra.mxu0 0
      %954 = vmatprep.subr.bf16.mxu0 0
      %955 = vmatpush2.bf16.msra.mxu0 0
      %956 = vmatprep.subr.bf16.mxu0 0
      %957 = vmatpush2.bf16.msra.mxu0 0
      %958 = vmatprep.subr.bf16.mxu0 0
      %959 = vmatpush2.bf16.msra.mxu0 0
      %960 = vmatprep.subr.bf16.mxu0 0
      %961 = vmatpush2.bf16.msra.mxu0 0
      %962 = vmatprep.subr.bf16.mxu0 0
      %963 = vmatpush2.bf16.msra.mxu0 0
      %964 = vmatprep.subr.bf16.mxu0 0
      %965 = vmatpush2.bf16.msra.mxu0 0
      %966 = vmatprep.subr.bf16.mxu0 0
      %967 = vmatpush2.bf16.msra.mxu0 0
      %968 = vmatprep.mubr.bf16.mxu0 0
      %969 = vmatmul.mubr.bf16.gmra.mxu0 %v749
      %v970 = vpop.f32.mrf.mxu0
      %v971 = vadd.f32 %v922, %v970
      %v972 = vpop.f32.mrf.mxu0
      %v973 = vpop.f32.mrf.mxu0
      %v974 = vadd.f32 %v922, %v973
      %v975 = vpop.f32.mrf.mxu0
      %976 = vmatprep.mubr.bf16.mxu0 0
      %977 = vmatmul.mubr.bf16.gmra.mxu0 %v752
      %v978 = vpop.f32.mrf.mxu0
      %v979 = vadd.f32 %v922, %v978
      %v980 = vpop.f32.mrf.mxu0
      %v981 = vpop.f32.mrf.mxu0
      %v982 = vadd.f32 %v922, %v981
      %v983 = vpop.f32.mrf.mxu0
      %984 = vmatprep.mubr.bf16.mxu0 0
      %985 = vmatmul.mubr.bf16.gmra.mxu0 %v755
      %v986 = vpop.f32.mrf.mxu0
      %v987 = vadd.f32 %v922, %v986
      %v988 = vpop.f32.mrf.mxu0
      %v989 = vpop.f32.mrf.mxu0
      %v990 = vadd.f32 %v922, %v989
      %v991 = vpop.f32.mrf.mxu0
      %992 = vmatprep.mubr.bf16.mxu0 0
      %993 = vmatmul.mubr.bf16.gmra.mxu0 %v758
      %v994 = vpop.f32.mrf.mxu0
      %v995 = vadd.f32 %v922, %v994
      %v996 = vpop.f32.mrf.mxu0
      %v997 = vpop.f32.mrf.mxu0
      %v998 = vadd.f32 %v922, %v997
      %v999 = vpop.f32.mrf.mxu0
      %1000 = vdwg.mxu0
      %v1001 = vld [vmem:[%s3] sm:$0x1]
      %v1002 = vld [vmem:[%s3 + $0x1] sm:$0x1]
      %v1003 = vld [vmem:[%s3 + $0x2] sm:$0x1]
      %v1004 = vld [vmem:[%s3 + $0x3] sm:$0x1]
      %v1005 = vld [vmem:[%s3 + $0x4] sm:$0x1]
      %v1006 = vld [vmem:[%s3 + $0x5] sm:$0x1]
      %v1007 = vld [vmem:[%s3 + $0x6] sm:$0x1]
      %v1008 = vld [vmem:[%s3 + $0x7] sm:$0x1]
      %v1009 = vpack.c.bf16 %v798, %v795
      %v1010 = vpack.c.bf16 %v806, %v803
      %v1011 = vpack.c.bf16 %v814, %v811
      %v1012 = vpack.c.bf16 %v822, %v819
      %v1014 = vpack.i.b16 %v1001, %v1001
      %v1016 = vlaneseq
      %v1017 = vshrl.u32 %v1016, 7
      %v1018 = vsub.s32 0, %v1017
      %v1019 = vrot.slane %v1014, %v1018
      %v1021 = vpack.i.b16 %v1002, %v1002
      %v1023 = vlaneseq
      %v1024 = vshrl.u32 %v1023, 7
      %v1025 = vsub.s32 0, %v1024
      %v1026 = vrot.slane %v1021, %v1025
      %v1028 = vpack.i.b16 %v1003, %v1003
      %v1030 = vlaneseq
      %v1031 = vshrl.u32 %v1030, 7
      %v1032 = vsub.s32 0, %v1031
      %v1033 = vrot.slane %v1028, %v1032
      %v1035 = vpack.i.b16 %v1004, %v1004
      %v1037 = vlaneseq
      %v1038 = vshrl.u32 %v1037, 7
      %v1039 = vsub.s32 0, %v1038
      %v1040 = vrot.slane %v1035, %v1039
      %v1042 = vpack.i.b16 %v1005, %v1005
      %v1044 = vlaneseq
      %v1045 = vshrl.u32 %v1044, 7
      %v1046 = vsub.s32 0, %v1045
      %v1047 = vrot.slane %v1042, %v1046
      %v1049 = vpack.i.b16 %v1006, %v1006
      %v1051 = vlaneseq
      %v1052 = vshrl.u32 %v1051, 7
      %v1053 = vsub.s32 0, %v1052
      %v1054 = vrot.slane %v1049, %v1053
      %v1056 = vpack.i.b16 %v1007, %v1007
      %v1058 = vlaneseq
      %v1059 = vshrl.u32 %v1058, 7
      %v1060 = vsub.s32 0, %v1059
      %v1061 = vrot.slane %v1056, %v1060
      %v1063 = vpack.i.b16 %v1008, %v1008
      %v1065 = vlaneseq
      %v1066 = vshrl.u32 %v1065, 7
      %v1067 = vsub.s32 0, %v1066
      %v1068 = vrot.slane %v1063, %v1067
      %v1069 = vmul.bf16 %v1009, %v1019
      %v1070 = vmul.bf16 %v1010, %v1019
      %v1071 = vmul.bf16 %v1011, %v1019
      %v1072 = vmul.bf16 %v1012, %v1019
      %v1073 = vmul.bf16 %v1009, %v1026
      %v1074 = vmul.bf16 %v1010, %v1026
      %v1075 = vmul.bf16 %v1011, %v1026
      %v1076 = vmul.bf16 %v1012, %v1026
      %v1077 = vmul.bf16 %v1009, %v1033
      %v1078 = vmul.bf16 %v1010, %v1033
      %v1079 = vmul.bf16 %v1011, %v1033
      %v1080 = vmul.bf16 %v1012, %v1033
      %v1081 = vmul.bf16 %v1009, %v1040
      %v1082 = vmul.bf16 %v1010, %v1040
      %v1083 = vmul.bf16 %v1011, %v1040
      %v1084 = vmul.bf16 %v1012, %v1040
      %v1085 = vmul.bf16 %v1009, %v1047
      %v1086 = vmul.bf16 %v1010, %v1047
      %v1087 = vmul.bf16 %v1011, %v1047
      %v1088 = vmul.bf16 %v1012, %v1047
      %v1089 = vmul.bf16 %v1009, %v1054
      %v1090 = vmul.bf16 %v1010, %v1054
      %v1091 = vmul.bf16 %v1011, %v1054
      %v1092 = vmul.bf16 %v1012, %v1054
      %v1093 = vmul.bf16 %v1009, %v1061
      %v1094 = vmul.bf16 %v1010, %v1061
      %v1095 = vmul.bf16 %v1011, %v1061
      %v1096 = vmul.bf16 %v1012, %v1061
      %v1097 = vmul.bf16 %v1009, %v1068
      %v1098 = vmul.bf16 %v1010, %v1068
      %v1099 = vmul.bf16 %v1011, %v1068
      %v1100 = vmul.bf16 %v1012, %v1068
      %v1101 = vpack.c.bf16 %v974, %v971
      %v1102 = vpack.c.bf16 %v982, %v979
      %v1103 = vpack.c.bf16 %v990, %v987
      %v1104 = vpack.c.bf16 %v998, %v995
      %v1105 = vmul.bf16 %v1101, %v1019
      %v1106 = vmul.bf16 %v1102, %v1019
      %v1107 = vmul.bf16 %v1103, %v1019
      %v1108 = vmul.bf16 %v1104, %v1019
      %v1109 = vmul.bf16 %v1101, %v1026
      %v1110 = vmul.bf16 %v1102, %v1026
      %v1111 = vmul.bf16 %v1103, %v1026
      %v1112 = vmul.bf16 %v1104, %v1026
      %v1113 = vmul.bf16 %v1101, %v1033
      %v1114 = vmul.bf16 %v1102, %v1033
      %v1115 = vmul.bf16 %v1103, %v1033
      %v1116 = vmul.bf16 %v1104, %v1033
      %v1117 = vmul.bf16 %v1101, %v1040
      %v1118 = vmul.bf16 %v1102, %v1040
      %v1119 = vmul.bf16 %v1103, %v1040
      %v1120 = vmul.bf16 %v1104, %v1040
      %v1121 = vmul.bf16 %v1101, %v1047
      %v1122 = vmul.bf16 %v1102, %v1047
      %v1123 = vmul.bf16 %v1103, %v1047
      %v1124 = vmul.bf16 %v1104, %v1047
      %v1125 = vmul.bf16 %v1101, %v1054
      %v1126 = vmul.bf16 %v1102, %v1054
      %v1127 = vmul.bf16 %v1103, %v1054
      %v1128 = vmul.bf16 %v1104, %v1054
      %v1129 = vmul.bf16 %v1101, %v1061
      %v1130 = vmul.bf16 %v1102, %v1061
      %v1131 = vmul.bf16 %v1103, %v1061
      %v1132 = vmul.bf16 %v1104, %v1061
      %v1133 = vmul.bf16 %v1101, %v1068
      %v1134 = vmul.bf16 %v1102, %v1068
      %v1135 = vmul.bf16 %v1103, %v1068
      %v1136 = vmul.bf16 %v1104, %v1068
      %v1137 = vpack.c.bf16 %v886, %v883
      %v1138 = vpack.c.bf16 %v894, %v891
      %v1139 = vpack.c.bf16 %v902, %v899
      %v1140 = vpack.c.bf16 %v910, %v907
      %v1142 = vsel %vm587, %v1069, 0
      %v1145 = vsel %vm587, %v1070, 0
      %v1148 = vsel %vm587, %v1071, 0
      %v1151 = vsel %vm587, %v1072, 0
      %v1154 = vsel %vm587, %v1137, 0
      %v1157 = vsel %vm587, %v1138, 0
      %v1160 = vsel %vm587, %v1139, 0
      %v1163 = vsel %vm587, %v1140, 0
      %1165 = vmatprep.subr.bf16.mxu0 0
      %1166 = vmatpush1.bf16.xpose.msra.mxu0 0
      %1167 = vmatprep.subr.bf16.mxu0 0
      %1168 = vmatpush1.bf16.xpose.msra.mxu0 0
      %1169 = vmatprep.subr.bf16.mxu0 0
      %1170 = vmatpush1.bf16.xpose.msra.mxu0 0
      %1171 = vmatprep.subr.bf16.mxu0 0
      %1172 = vmatpush1.bf16.xpose.msra.mxu0 0
      %1173 = vmatprep.subr.bf16.mxu0 0
      %1174 = vmatpush1.bf16.xpose.msra.mxu0 %v1163
      %1175 = vmatprep.subr.bf16.mxu0 0
      %1176 = vmatpush1.bf16.xpose.msra.mxu0 %v1160
      %1177 = vmatprep.subr.bf16.mxu0 0
      %1178 = vmatpush1.bf16.xpose.msra.mxu0 %v1157
      %1179 = vmatprep.subr.bf16.mxu0 0
      %1180 = vmatpush1.bf16.xpose.msra.mxu0 %v1154
      %1181 = vmatprep.subr.bf16.mxu0 0
      %1182 = vmatpush2.bf16.xpose.msra.mxu0 0
      %1183 = vmatprep.subr.bf16.mxu0 0
      %1184 = vmatpush2.bf16.xpose.msra.mxu0 0
      %1185 = vmatprep.subr.bf16.mxu0 0
      %1186 = vmatpush2.bf16.xpose.msra.mxu0 0
      %1187 = vmatprep.subr.bf16.mxu0 0
      %1188 = vmatpush2.bf16.xpose.msra.mxu0 0
      %1189 = vmatprep.subr.bf16.mxu0 0
      %1190 = vmatpush2.bf16.xpose.msra.mxu0 0
      %1191 = vmatprep.subr.bf16.mxu0 0
      %1192 = vmatpush2.bf16.xpose.msra.mxu0 0
      %1193 = vmatprep.subr.bf16.mxu0 0
      %1194 = vmatpush2.bf16.xpose.msra.mxu0 0
      %1195 = vmatprep.subr.bf16.mxu0 0
      %1196 = vmatpush2.bf16.xpose.msra.mxu0 0
      %1197 = vmatprep.mubr.bf16.mxu0 0
      %1198 = vmatmul.mubr.bf16.gmra.mxu0 %v1142
      %v1199 = vpop.f32.mrf.mxu0
      %v1200 = vadd.f32 0.0, %v1199
      %v1201 = vpop.f32.mrf.mxu0
      %v1202 = vpop.f32.mrf.mxu0
      %v1203 = vadd.f32 0.0, %v1202
      %v1204 = vpop.f32.mrf.mxu0
      %1205 = vmatprep.mubr.bf16.mxu0 0
      %1206 = vmatmul.mubr.bf16.gmra.mxu0 %v1145
      %v1207 = vpop.f32.mrf.mxu0
      %v1208 = vadd.f32 0.0, %v1207
      %v1209 = vpop.f32.mrf.mxu0
      %v1210 = vpop.f32.mrf.mxu0
      %v1211 = vadd.f32 0.0, %v1210
      %v1212 = vpop.f32.mrf.mxu0
      %1213 = vmatprep.mubr.bf16.mxu0 0
      %1214 = vmatmul.mubr.bf16.gmra.mxu0 %v1148
      %v1215 = vpop.f32.mrf.mxu0
      %v1216 = vadd.f32 0.0, %v1215
      %v1217 = vpop.f32.mrf.mxu0
      %v1218 = vpop.f32.mrf.mxu0
      %v1219 = vadd.f32 0.0, %v1218
      %v1220 = vpop.f32.mrf.mxu0
      %1221 = vmatprep.mubr.bf16.mxu0 0
      %1222 = vmatmul.mubr.bf16.gmra.mxu0 %v1151
      %v1223 = vpop.f32.mrf.mxu0
      %v1224 = vadd.f32 0.0, %v1223
      %v1225 = vpop.f32.mrf.mxu0
      %v1226 = vpop.f32.mrf.mxu0
      %v1227 = vadd.f32 0.0, %v1226
      %v1228 = vpop.f32.mrf.mxu0
      %1229 = vdwg.mxu0
      %v1231 = vsel %vm587, %v1073, 0
      %v1234 = vsel %vm587, %v1074, 0
      %v1237 = vsel %vm587, %v1075, 0
      %v1240 = vsel %vm587, %v1076, 0
      %1242 = vmatprep.subr.bf16.mxu0 0
      %1243 = vmatpush1.bf16.xpose.msra.mxu0 0
      %1244 = vmatprep.subr.bf16.mxu0 0
      %1245 = vmatpush1.bf16.xpose.msra.mxu0 0
      %1246 = vmatprep.subr.bf16.mxu0 0
      %1247 = vmatpush1.bf16.xpose.msra.mxu0 0
      %1248 = vmatprep.subr.bf16.mxu0 0
      %1249 = vmatpush1.bf16.xpose.msra.mxu0 0
      %1250 = vmatprep.subr.bf16.mxu0 0
      %1251 = vmatpush1.bf16.xpose.msra.mxu0 %v1163
      %1252 = vmatprep.subr.bf16.mxu0 0
      %1253 = vmatpush1.bf16.xpose.msra.mxu0 %v1160
      %1254 = vmatprep.subr.bf16.mxu0 0
      %1255 = vmatpush1.bf16.xpose.msra.mxu0 %v1157
      %1256 = vmatprep.subr.bf16.mxu0 0
      %1257 = vmatpush1.bf16.xpose.msra.mxu0 %v1154
      %1258 = vmatprep.subr.bf16.mxu0 0
      %1259 = vmatpush2.bf16.xpose.msra.mxu0 0
      %1260 = vmatprep.subr.bf16.mxu0 0
      %1261 = vmatpush2.bf16.xpose.msra.mxu0 0
      %1262 = vmatprep.subr.bf16.mxu0 0
      %1263 = vmatpush2.bf16.xpose.msra.mxu0 0
      %1264 = vmatprep.subr.bf16.mxu0 0
      %1265 = vmatpush2.bf16.xpose.msra.mxu0 0
      %1266 = vmatprep.subr.bf16.mxu0 0
      %1267 = vmatpush2.bf16.xpose.msra.mxu0 0
      %1268 = vmatprep.subr.bf16.mxu0 0
      %1269 = vmatpush2.bf16.xpose.msra.mxu0 0
      %1270 = vmatprep.subr.bf16.mxu0 0
      %1271 = vmatpush2.bf16.xpose.msra.mxu0 0
      %1272 = vmatprep.subr.bf16.mxu0 0
      %1273 = vmatpush2.bf16.xpose.msra.mxu0 0
      %1274 = vmatprep.mubr.bf16.mxu0 0
      %1275 = vmatmul.mubr.bf16.gmra.mxu0 %v1231
      %v1276 = vpop.f32.mrf.mxu0
      %v1277 = vadd.f32 0.0, %v1276
      %v1278 = vpop.f32.mrf.mxu0
      %v1279 = vpop.f32.mrf.mxu0
      %v1280 = vadd.f32 0.0, %v1279
      %v1281 = vpop.f32.mrf.mxu0
      %1282 = vmatprep.mubr.bf16.mxu0 0
      %1283 = vmatmul.mubr.bf16.gmra.mxu0 %v1234
      %v1284 = vpop.f32.mrf.mxu0
      %v1285 = vadd.f32 0.0, %v1284
      %v1286 = vpop.f32.mrf.mxu0
      %v1287 = vpop.f32.mrf.mxu0
      %v1288 = vadd.f32 0.0, %v1287
      %v1289 = vpop.f32.mrf.mxu0
      %1290 = vmatprep.mubr.bf16.mxu0 0
      %1291 = vmatmul.mubr.bf16.gmra.mxu0 %v1237
      %v1292 = vpop.f32.mrf.mxu0
      %v1293 = vadd.f32 0.0, %v1292
      %v1294 = vpop.f32.mrf.mxu0
      %v1295 = vpop.f32.mrf.mxu0
      %v1296 = vadd.f32 0.0, %v1295
      %v1297 = vpop.f32.mrf.mxu0
      %1298 = vmatprep.mubr.bf16.mxu0 0
      %1299 = vmatmul.mubr.bf16.gmra.mxu0 %v1240
      %v1300 = vpop.f32.mrf.mxu0
      %v1301 = vadd.f32 0.0, %v1300
      %v1302 = vpop.f32.mrf.mxu0
      %v1303 = vpop.f32.mrf.mxu0
      %v1304 = vadd.f32 0.0, %v1303
      %v1305 = vpop.f32.mrf.mxu0
      %1306 = vdwg.mxu0
      %v1308 = vsel %vm587, %v1077, 0
      %v1311 = vsel %vm587, %v1078, 0
      %v1314 = vsel %vm587, %v1079, 0
      %v1317 = vsel %vm587, %v1080, 0
      %1319 = vmatprep.subr.bf16.mxu0 0
      %1320 = vmatpush1.bf16.xpose.msra.mxu0 0
      %1321 = vmatprep.subr.bf16.mxu0 0
      %1322 = vmatpush1.bf16.xpose.msra.mxu0 0
      %1323 = vmatprep.subr.bf16.mxu0 0
      %1324 = vmatpush1.bf16.xpose.msra.mxu0 0
      %1325 = vmatprep.subr.bf16.mxu0 0
      %1326 = vmatpush1.bf16.xpose.msra.mxu0 0
      %1327 = vmatprep.subr.bf16.mxu0 0
      %1328 = vmatpush1.bf16.xpose.msra.mxu0 %v1163
      %1329 = vmatprep.subr.bf16.mxu0 0
      %1330 = vmatpush1.bf16.xpose.msra.mxu0 %v1160
      %1331 = vmatprep.subr.bf16.mxu0 0
      %1332 = vmatpush1.bf16.xpose.msra.mxu0 %v1157
      %1333 = vmatprep.subr.bf16.mxu0 0
      %1334 = vmatpush1.bf16.xpose.msra.mxu0 %v1154
      %1335 = vmatprep.subr.bf16.mxu0 0
      %1336 = vmatpush2.bf16.xpose.msra.mxu0 0
      %1337 = vmatprep.subr.bf16.mxu0 0
      %1338 = vmatpush2.bf16.xpose.msra.mxu0 0
      %1339 = vmatprep.subr.bf16.mxu0 0
      %1340 = vmatpush2.bf16.xpose.msra.mxu0 0
      %1341 = vmatprep.subr.bf16.mxu0 0
      %1342 = vmatpush2.bf16.xpose.msra.mxu0 0
      %1343 = vmatprep.subr.bf16.mxu0 0
      %1344 = vmatpush2.bf16.xpose.msra.mxu0 0
      %1345 = vmatprep.subr.bf16.mxu0 0
      %1346 = vmatpush2.bf16.xpose.msra.mxu0 0
      %1347 = vmatprep.subr.bf16.mxu0 0
      %1348 = vmatpush2.bf16.xpose.msra.mxu0 0
      %1349 = vmatprep.subr.bf16.mxu0 0
      %1350 = vmatpush2.bf16.xpose.msra.mxu0 0
      %1351 = vmatprep.mubr.bf16.mxu0 0
      %1352 = vmatmul.mubr.bf16.gmra.mxu0 %v1308
      %v1353 = vpop.f32.mrf.mxu0
      %v1354 = vadd.f32 0.0, %v1353
      %v1355 = vpop.f32.mrf.mxu0
      %v1356 = vpop.f32.mrf.mxu0
      %v1357 = vadd.f32 0.0, %v1356
      %v1358 = vpop.f32.mrf.mxu0
      %1359 = vmatprep.mubr.bf16.mxu0 0
      %1360 = vmatmul.mubr.bf16.gmra.mxu0 %v1311
      %v1361 = vpop.f32.mrf.mxu0
      %v1362 = vadd.f32 0.0, %v1361
      %v1363 = vpop.f32.mrf.mxu0
      %v1364 = vpop.f32.mrf.mxu0
      %v1365 = vadd.f32 0.0, %v1364
      %v1366 = vpop.f32.mrf.mxu0
      %1367 = vmatprep.mubr.bf16.mxu0 0
      %1368 = vmatmul.mubr.bf16.gmra.mxu0 %v1314
      %v1369 = vpop.f32.mrf.mxu0
      %v1370 = vadd.f32 0.0, %v1369
      %v1371 = vpop.f32.mrf.mxu0
      %v1372 = vpop.f32.mrf.mxu0
      %v1373 = vadd.f32 0.0, %v1372
      %v1374 = vpop.f32.mrf.mxu0
      %1375 = vmatprep.mubr.bf16.mxu0 0
      %1376 = vmatmul.mubr.bf16.gmra.mxu0 %v1317
      %v1377 = vpop.f32.mrf.mxu0
      %v1378 = vadd.f32 0.0, %v1377
      %v1379 = vpop.f32.mrf.mxu0
      %v1380 = vpop.f32.mrf.mxu0
      %v1381 = vadd.f32 0.0, %v1380
      %v1382 = vpop.f32.mrf.mxu0
      %1383 = vdwg.mxu0
      %v1385 = vsel %vm587, %v1081, 0
      %v1388 = vsel %vm587, %v1082, 0
      %v1391 = vsel %vm587, %v1083, 0
      %v1394 = vsel %vm587, %v1084, 0
      %1396 = vmatprep.subr.bf16.mxu0 0
      %1397 = vmatpush1.bf16.xpose.msra.mxu0 0
      %1398 = vmatprep.subr.bf16.mxu0 0
      %1399 = vmatpush1.bf16.xpose.msra.mxu0 0
      %1400 = vmatprep.subr.bf16.mxu0 0
      %1401 = vmatpush1.bf16.xpose.msra.mxu0 0
      %1402 = vmatprep.subr.bf16.mxu0 0
      %1403 = vmatpush1.bf16.xpose.msra.mxu0 0
      %1404 = vmatprep.subr.bf16.mxu0 0
      %1405 = vmatpush1.bf16.xpose.msra.mxu0 %v1163
      %1406 = vmatprep.subr.bf16.mxu0 0
      %1407 = vmatpush1.bf16.xpose.msra.mxu0 %v1160
      %1408 = vmatprep.subr.bf16.mxu0 0
      %1409 = vmatpush1.bf16.xpose.msra.mxu0 %v1157
      %1410 = vmatprep.subr.bf16.mxu0 0
      %1411 = vmatpush1.bf16.xpose.msra.mxu0 %v1154
      %1412 = vmatprep.subr.bf16.mxu0 0
      %1413 = vmatpush2.bf16.xpose.msra.mxu0 0
      %1414 = vmatprep.subr.bf16.mxu0 0
      %1415 = vmatpush2.bf16.xpose.msra.mxu0 0
      %1416 = vmatprep.subr.bf16.mxu0 0
      %1417 = vmatpush2.bf16.xpose.msra.mxu0 0
      %1418 = vmatprep.subr.bf16.mxu0 0
      %1419 = vmatpush2.bf16.xpose.msra.mxu0 0
      %1420 = vmatprep.subr.bf16.mxu0 0
      %1421 = vmatpush2.bf16.xpose.msra.mxu0 0
      %1422 = vmatprep.subr.bf16.mxu0 0
      %1423 = vmatpush2.bf16.xpose.msra.mxu0 0
      %1424 = vmatprep.subr.bf16.mxu0 0
      %1425 = vmatpush2.bf16.xpose.msra.mxu0 0
      %1426 = vmatprep.subr.bf16.mxu0 0
      %1427 = vmatpush2.bf16.xpose.msra.mxu0 0
      %1428 = vmatprep.mubr.bf16.mxu0 0
      %1429 = vmatmul.mubr.bf16.gmra.mxu0 %v1385
      %v1430 = vpop.f32.mrf.mxu0
      %v1431 = vadd.f32 0.0, %v1430
      %v1432 = vpop.f32.mrf.mxu0
      %v1433 = vpop.f32.mrf.mxu0
      %v1434 = vadd.f32 0.0, %v1433
      %v1435 = vpop.f32.mrf.mxu0
      %1436 = vmatprep.mubr.bf16.mxu0 0
      %1437 = vmatmul.mubr.bf16.gmra.mxu0 %v1388
      %v1438 = vpop.f32.mrf.mxu0
      %v1439 = vadd.f32 0.0, %v1438
      %v1440 = vpop.f32.mrf.mxu0
      %v1441 = vpop.f32.mrf.mxu0
      %v1442 = vadd.f32 0.0, %v1441
      %v1443 = vpop.f32.mrf.mxu0
      %1444 = vmatprep.mubr.bf16.mxu0 0
      %1445 = vmatmul.mubr.bf16.gmra.mxu0 %v1391
      %v1446 = vpop.f32.mrf.mxu0
      %v1447 = vadd.f32 0.0, %v1446
      %v1448 = vpop.f32.mrf.mxu0
      %v1449 = vpop.f32.mrf.mxu0
      %v1450 = vadd.f32 0.0, %v1449
      %v1451 = vpop.f32.mrf.mxu0
      %1452 = vmatprep.mubr.bf16.mxu0 0
      %1453 = vmatmul.mubr.bf16.gmra.mxu0 %v1394
      %v1454 = vpop.f32.mrf.mxu0
      %v1455 = vadd.f32 0.0, %v1454
      %v1456 = vpop.f32.mrf.mxu0
      %v1457 = vpop.f32.mrf.mxu0
      %v1458 = vadd.f32 0.0, %v1457
      %v1459 = vpop.f32.mrf.mxu0
      %1460 = vdwg.mxu0
      %v1462 = vsel %vm587, %v1085, 0
      %v1465 = vsel %vm587, %v1086, 0
      %v1468 = vsel %vm587, %v1087, 0
      %v1471 = vsel %vm587, %v1088, 0
      %1473 = vmatprep.subr.bf16.mxu0 0
      %1474 = vmatpush1.bf16.xpose.msra.mxu0 0
      %1475 = vmatprep.subr.bf16.mxu0 0
      %1476 = vmatpush1.bf16.xpose.msra.mxu0 0
      %1477 = vmatprep.subr.bf16.mxu0 0
      %1478 = vmatpush1.bf16.xpose.msra.mxu0 0
      %1479 = vmatprep.subr.bf16.mxu0 0
      %1480 = vmatpush1.bf16.xpose.msra.mxu0 0
      %1481 = vmatprep.subr.bf16.mxu0 0
      %1482 = vmatpush1.bf16.xpose.msra.mxu0 %v1163
      %1483 = vmatprep.subr.bf16.mxu0 0
      %1484 = vmatpush1.bf16.xpose.msra.mxu0 %v1160
      %1485 = vmatprep.subr.bf16.mxu0 0
      %1486 = vmatpush1.bf16.xpose.msra.mxu0 %v1157
      %1487 = vmatprep.subr.bf16.mxu0 0
      %1488 = vmatpush1.bf16.xpose.msra.mxu0 %v1154
      %1489 = vmatprep.subr.bf16.mxu0 0
      %1490 = vmatpush2.bf16.xpose.msra.mxu0 0
      %1491 = vmatprep.subr.bf16.mxu0 0
      %1492 = vmatpush2.bf16.xpose.msra.mxu0 0
      %1493 = vmatprep.subr.bf16.mxu0 0
      %1494 = vmatpush2.bf16.xpose.msra.mxu0 0
      %1495 = vmatprep.subr.bf16.mxu0 0
      %1496 = vmatpush2.bf16.xpose.msra.mxu0 0
      %1497 = vmatprep.subr.bf16.mxu0 0
      %1498 = vmatpush2.bf16.xpose.msra.mxu0 0
      %1499 = vmatprep.subr.bf16.mxu0 0
      %1500 = vmatpush2.bf16.xpose.msra.mxu0 0
      %1501 = vmatprep.subr.bf16.mxu0 0
      %1502 = vmatpush2.bf16.xpose.msra.mxu0 0
      %1503 = vmatprep.subr.bf16.mxu0 0
      %1504 = vmatpush2.bf16.xpose.msra.mxu0 0
      %1505 = vmatprep.mubr.bf16.mxu0 0
      %1506 = vmatmul.mubr.bf16.gmra.mxu0 %v1462
      %v1507 = vpop.f32.mrf.mxu0
      %v1508 = vadd.f32 0.0, %v1507
      %v1509 = vpop.f32.mrf.mxu0
      %v1510 = vpop.f32.mrf.mxu0
      %v1511 = vadd.f32 0.0, %v1510
      %v1512 = vpop.f32.mrf.mxu0
      %1513 = vmatprep.mubr.bf16.mxu0 0
      %1514 = vmatmul.mubr.bf16.gmra.mxu0 %v1465
      %v1515 = vpop.f32.mrf.mxu0
      %v1516 = vadd.f32 0.0, %v1515
      %v1517 = vpop.f32.mrf.mxu0
      %v1518 = vpop.f32.mrf.mxu0
      %v1519 = vadd.f32 0.0, %v1518
      %v1520 = vpop.f32.mrf.mxu0
      %1521 = vmatprep.mubr.bf16.mxu0 0
      %1522 = vmatmul.mubr.bf16.gmra.mxu0 %v1468
      %v1523 = vpop.f32.mrf.mxu0
      %v1524 = vadd.f32 0.0, %v1523
      %v1525 = vpop.f32.mrf.mxu0
      %v1526 = vpop.f32.mrf.mxu0
      %v1527 = vadd.f32 0.0, %v1526
      %v1528 = vpop.f32.mrf.mxu0
      %1529 = vmatprep.mubr.bf16.mxu0 0
      %1530 = vmatmul.mubr.bf16.gmra.mxu0 %v1471
      %v1531 = vpop.f32.mrf.mxu0
      %v1532 = vadd.f32 0.0, %v1531
      %v1533 = vpop.f32.mrf.mxu0
      %v1534 = vpop.f32.mrf.mxu0
      %v1535 = vadd.f32 0.0, %v1534
      %v1536 = vpop.f32.mrf.mxu0
      %1537 = vdwg.mxu0
      %v1539 = vsel %vm587, %v1089, 0
      %v1542 = vsel %vm587, %v1090, 0
      %v1545 = vsel %vm587, %v1091, 0
      %v1548 = vsel %vm587, %v1092, 0
      %1550 = vmatprep.subr.bf16.mxu0 0
      %1551 = vmatpush1.bf16.xpose.msra.mxu0 0
      %1552 = vmatprep.subr.bf16.mxu0 0
      %1553 = vmatpush1.bf16.xpose.msra.mxu0 0
      %1554 = vmatprep.subr.bf16.mxu0 0
      %1555 = vmatpush1.bf16.xpose.msra.mxu0 0
      %1556 = vmatprep.subr.bf16.mxu0 0
      %1557 = vmatpush1.bf16.xpose.msra.mxu0 0
      %1558 = vmatprep.subr.bf16.mxu0 0
      %1559 = vmatpush1.bf16.xpose.msra.mxu0 %v1163
      %1560 = vmatprep.subr.bf16.mxu0 0
      %1561 = vmatpush1.bf16.xpose.msra.mxu0 %v1160
      %1562 = vmatprep.subr.bf16.mxu0 0
      %1563 = vmatpush1.bf16.xpose.msra.mxu0 %v1157
      %1564 = vmatprep.subr.bf16.mxu0 0
      %1565 = vmatpush1.bf16.xpose.msra.mxu0 %v1154
      %1566 = vmatprep.subr.bf16.mxu0 0
      %1567 = vmatpush2.bf16.xpose.msra.mxu0 0
      %1568 = vmatprep.subr.bf16.mxu0 0
      %1569 = vmatpush2.bf16.xpose.msra.mxu0 0
      %1570 = vmatprep.subr.bf16.mxu0 0
      %1571 = vmatpush2.bf16.xpose.msra.mxu0 0
      %1572 = vmatprep.subr.bf16.mxu0 0
      %1573 = vmatpush2.bf16.xpose.msra.mxu0 0
      %1574 = vmatprep.subr.bf16.mxu0 0
      %1575 = vmatpush2.bf16.xpose.msra.mxu0 0
      %1576 = vmatprep.subr.bf16.mxu0 0
      %1577 = vmatpush2.bf16.xpose.msra.mxu0 0
      %1578 = vmatprep.subr.bf16.mxu0 0
      %1579 = vmatpush2.bf16.xpose.msra.mxu0 0
      %1580 = vmatprep.subr.bf16.mxu0 0
      %1581 = vmatpush2.bf16.xpose.msra.mxu0 0
      %1582 = vmatprep.mubr.bf16.mxu0 0
      %1583 = vmatmul.mubr.bf16.gmra.mxu0 %v1539
      %v1584 = vpop.f32.mrf.mxu0
      %v1585 = vadd.f32 0.0, %v1584
      %v1586 = vpop.f32.mrf.mxu0
      %v1587 = vpop.f32.mrf.mxu0
      %v1588 = vadd.f32 0.0, %v1587
      %v1589 = vpop.f32.mrf.mxu0
      %1590 = vmatprep.mubr.bf16.mxu0 0
      %1591 = vmatmul.mubr.bf16.gmra.mxu0 %v1542
      %v1592 = vpop.f32.mrf.mxu0
      %v1593 = vadd.f32 0.0, %v1592
      %v1594 = vpop.f32.mrf.mxu0
      %v1595 = vpop.f32.mrf.mxu0
      %v1596 = vadd.f32 0.0, %v1595
      %v1597 = vpop.f32.mrf.mxu0
      %1598 = vmatprep.mubr.bf16.mxu0 0
      %1599 = vmatmul.mubr.bf16.gmra.mxu0 %v1545
      %v1600 = vpop.f32.mrf.mxu0
      %v1601 = vadd.f32 0.0, %v1600
      %v1602 = vpop.f32.mrf.mxu0
      %v1603 = vpop.f32.mrf.mxu0
      %v1604 = vadd.f32 0.0, %v1603
      %v1605 = vpop.f32.mrf.mxu0
      %1606 = vmatprep.mubr.bf16.mxu0 0
      %1607 = vmatmul.mubr.bf16.gmra.mxu0 %v1548
      %v1608 = vpop.f32.mrf.mxu0
      %v1609 = vadd.f32 0.0, %v1608
      %v1610 = vpop.f32.mrf.mxu0
      %v1611 = vpop.f32.mrf.mxu0
      %v1612 = vadd.f32 0.0, %v1611
      %v1613 = vpop.f32.mrf.mxu0
      %1614 = vdwg.mxu0
      %v1616 = vsel %vm587, %v1093, 0
      %v1619 = vsel %vm587, %v1094, 0
      %v1622 = vsel %vm587, %v1095, 0
      %v1625 = vsel %vm587, %v1096, 0
      %1627 = vmatprep.subr.bf16.mxu0 0
      %1628 = vmatpush1.bf16.xpose.msra.mxu0 0
      %1629 = vmatprep.subr.bf16.mxu0 0
      %1630 = vmatpush1.bf16.xpose.msra.mxu0 0
      %1631 = vmatprep.subr.bf16.mxu0 0
      %1632 = vmatpush1.bf16.xpose.msra.mxu0 0
      %1633 = vmatprep.subr.bf16.mxu0 0
      %1634 = vmatpush1.bf16.xpose.msra.mxu0 0
      %1635 = vmatprep.subr.bf16.mxu0 0
      %1636 = vmatpush1.bf16.xpose.msra.mxu0 %v1163
      %1637 = vmatprep.subr.bf16.mxu0 0
      %1638 = vmatpush1.bf16.xpose.msra.mxu0 %v1160
      %1639 = vmatprep.subr.bf16.mxu0 0
      %1640 = vmatpush1.bf16.xpose.msra.mxu0 %v1157
      %1641 = vmatprep.subr.bf16.mxu0 0
      %1642 = vmatpush1.bf16.xpose.msra.mxu0 %v1154
      %1643 = vmatprep.subr.bf16.mxu0 0
      %1644 = vmatpush2.bf16.xpose.msra.mxu0 0
      %1645 = vmatprep.subr.bf16.mxu0 0
      %1646 = vmatpush2.bf16.xpose.msra.mxu0 0
      %1647 = vmatprep.subr.bf16.mxu0 0
      %1648 = vmatpush2.bf16.xpose.msra.mxu0 0
      %1649 = vmatprep.subr.bf16.mxu0 0
      %1650 = vmatpush2.bf16.xpose.msra.mxu0 0
      %1651 = vmatprep.subr.bf16.mxu0 0
      %1652 = vmatpush2.bf16.xpose.msra.mxu0 0
      %1653 = vmatprep.subr.bf16.mxu0 0
      %1654 = vmatpush2.bf16.xpose.msra.mxu0 0
      %1655 = vmatprep.subr.bf16.mxu0 0
      %1656 = vmatpush2.bf16.xpose.msra.mxu0 0
      %1657 = vmatprep.subr.bf16.mxu0 0
      %1658 = vmatpush2.bf16.xpose.msra.mxu0 0
      %1659 = vmatprep.mubr.bf16.mxu0 0
      %1660 = vmatmul.mubr.bf16.gmra.mxu0 %v1616
      %v1661 = vpop.f32.mrf.mxu0
      %v1662 = vadd.f32 0.0, %v1661
      %v1663 = vpop.f32.mrf.mxu0
      %v1664 = vpop.f32.mrf.mxu0
      %v1665 = vadd.f32 0.0, %v1664
      %v1666 = vpop.f32.mrf.mxu0
      %1667 = vmatprep.mubr.bf16.mxu0 0
      %1668 = vmatmul.mubr.bf16.gmra.mxu0 %v1619
      %v1669 = vpop.f32.mrf.mxu0
      %v1670 = vadd.f32 0.0, %v1669
      %v1671 = vpop.f32.mrf.mxu0
      %v1672 = vpop.f32.mrf.mxu0
      %v1673 = vadd.f32 0.0, %v1672
      %v1674 = vpop.f32.mrf.mxu0
      %1675 = vmatprep.mubr.bf16.mxu0 0
      %1676 = vmatmul.mubr.bf16.gmra.mxu0 %v1622
      %v1677 = vpop.f32.mrf.mxu0
      %v1678 = vadd.f32 0.0, %v1677
      %v1679 = vpop.f32.mrf.mxu0
      %v1680 = vpop.f32.mrf.mxu0
      %v1681 = vadd.f32 0.0, %v1680
      %v1682 = vpop.f32.mrf.mxu0
      %1683 = vmatprep.mubr.bf16.mxu0 0
      %1684 = vmatmul.mubr.bf16.gmra.mxu0 %v1625
      %v1685 = vpop.f32.mrf.mxu0
      %v1686 = vadd.f32 0.0, %v1685
      %v1687 = vpop.f32.mrf.mxu0
      %v1688 = vpop.f32.mrf.mxu0
      %v1689 = vadd.f32 0.0, %v1688
      %v1690 = vpop.f32.mrf.mxu0
      %1691 = vdwg.mxu0
      %v1693 = vsel %vm587, %v1097, 0
      %v1696 = vsel %vm587, %v1098, 0
      %v1699 = vsel %vm587, %v1099, 0
      %v1702 = vsel %vm587, %v1100, 0
      %1704 = vmatprep.subr.bf16.mxu0 0
      %1705 = vmatpush1.bf16.xpose.msra.mxu0 0
      %1706 = vmatprep.subr.bf16.mxu0 0
      %1707 = vmatpush1.bf16.xpose.msra.mxu0 0
      %1708 = vmatprep.subr.bf16.mxu0 0
      %1709 = vmatpush1.bf16.xpose.msra.mxu0 0
      %1710 = vmatprep.subr.bf16.mxu0 0
      %1711 = vmatpush1.bf16.xpose.msra.mxu0 0
      %1712 = vmatprep.subr.bf16.mxu0 0
      %1713 = vmatpush1.bf16.xpose.msra.mxu0 %v1163
      %1714 = vmatprep.subr.bf16.mxu0 0
      %1715 = vmatpush1.bf16.xpose.msra.mxu0 %v1160
      %1716 = vmatprep.subr.bf16.mxu0 0
      %1717 = vmatpush1.bf16.xpose.msra.mxu0 %v1157
      %1718 = vmatprep.subr.bf16.mxu0 0
      %1719 = vmatpush1.bf16.xpose.msra.mxu0 %v1154
      %1720 = vmatprep.subr.bf16.mxu0 0
      %1721 = vmatpush2.bf16.xpose.msra.mxu0 0
      %1722 = vmatprep.subr.bf16.mxu0 0
      %1723 = vmatpush2.bf16.xpose.msra.mxu0 0
      %1724 = vmatprep.subr.bf16.mxu0 0
      %1725 = vmatpush2.bf16.xpose.msra.mxu0 0
      %1726 = vmatprep.subr.bf16.mxu0 0
      %1727 = vmatpush2.bf16.xpose.msra.mxu0 0
      %1728 = vmatprep.subr.bf16.mxu0 0
      %1729 = vmatpush2.bf16.xpose.msra.mxu0 0
      %1730 = vmatprep.subr.bf16.mxu0 0
      %1731 = vmatpush2.bf16.xpose.msra.mxu0 0
      %1732 = vmatprep.subr.bf16.mxu0 0
      %1733 = vmatpush2.bf16.xpose.msra.mxu0 0
      %1734 = vmatprep.subr.bf16.mxu0 0
      %1735 = vmatpush2.bf16.xpose.msra.mxu0 0
      %1736 = vmatprep.mubr.bf16.mxu0 0
      %1737 = vmatmul.mubr.bf16.gmra.mxu0 %v1693
      %v1738 = vpop.f32.mrf.mxu0
      %v1739 = vadd.f32 0.0, %v1738
      %v1740 = vpop.f32.mrf.mxu0
      %v1741 = vpop.f32.mrf.mxu0
      %v1742 = vadd.f32 0.0, %v1741
      %v1743 = vpop.f32.mrf.mxu0
      %1744 = vmatprep.mubr.bf16.mxu0 0
      %1745 = vmatmul.mubr.bf16.gmra.mxu0 %v1696
      %v1746 = vpop.f32.mrf.mxu0
      %v1747 = vadd.f32 0.0, %v1746
      %v1748 = vpop.f32.mrf.mxu0
      %v1749 = vpop.f32.mrf.mxu0
      %v1750 = vadd.f32 0.0, %v1749
      %v1751 = vpop.f32.mrf.mxu0
      %1752 = vmatprep.mubr.bf16.mxu0 0
      %1753 = vmatmul.mubr.bf16.gmra.mxu0 %v1699
      %v1754 = vpop.f32.mrf.mxu0
      %v1755 = vadd.f32 0.0, %v1754
      %v1756 = vpop.f32.mrf.mxu0
      %v1757 = vpop.f32.mrf.mxu0
      %v1758 = vadd.f32 0.0, %v1757
      %v1759 = vpop.f32.mrf.mxu0
      %1760 = vmatprep.mubr.bf16.mxu0 0
      %1761 = vmatmul.mubr.bf16.gmra.mxu0 %v1702
      %v1762 = vpop.f32.mrf.mxu0
      %v1763 = vadd.f32 0.0, %v1762
      %v1764 = vpop.f32.mrf.mxu0
      %v1765 = vpop.f32.mrf.mxu0
      %v1766 = vadd.f32 0.0, %v1765
      %v1767 = vpop.f32.mrf.mxu0
      %1768 = vdwg.mxu0
      %vm1769 = vcmask 523264
      %v1770 = vsel %vm1769, %v1200, -inf
      %1771 = vmax.xlane.f32.xlu0 %v1770
      %v1772 = vpop.xlane.xlu0 %1771
      %v1773 = vsel %vm1769, %v1203, -inf
      %1774 = vmax.xlane.f32.xlu0 %v1773
      %v1775 = vpop.xlane.xlu0 %1774
      %v1776 = vsel %vm1769, %v1208, -inf
      %1777 = vmax.xlane.f32.xlu0 %v1776
      %v1778 = vpop.xlane.xlu0 %1777
      %v1779 = vsel %vm1769, %v1211, -inf
      %1780 = vmax.xlane.f32.xlu0 %v1779
      %v1781 = vpop.xlane.xlu0 %1780
      %v1782 = vsel %vm1769, %v1216, -inf
      %1783 = vmax.xlane.f32.xlu0 %v1782
      %v1784 = vpop.xlane.xlu0 %1783
      %v1785 = vsel %vm1769, %v1219, -inf
      %1786 = vmax.xlane.f32.xlu0 %v1785
      %v1787 = vpop.xlane.xlu0 %1786
      %v1788 = vsel %vm1769, %v1224, -inf
      %1789 = vmax.xlane.f32.xlu0 %v1788
      %v1790 = vpop.xlane.xlu0 %1789
      %v1791 = vsel %vm1769, %v1227, -inf
      %1792 = vmax.xlane.f32.xlu0 %v1791
      %v1793 = vpop.xlane.xlu0 %1792
      %v1794 = vsel %vm1769, %v1277, -inf
      %1795 = vmax.xlane.f32.xlu0 %v1794
      %v1796 = vpop.xlane.xlu0 %1795
      %v1797 = vsel %vm1769, %v1280, -inf
      %1798 = vmax.xlane.f32.xlu0 %v1797
      %v1799 = vpop.xlane.xlu0 %1798
      %v1800 = vsel %vm1769, %v1285, -inf
      %1801 = vmax.xlane.f32.xlu0 %v1800
      %v1802 = vpop.xlane.xlu0 %1801
      %v1803 = vsel %vm1769, %v1288, -inf
      %1804 = vmax.xlane.f32.xlu0 %v1803
      %v1805 = vpop.xlane.xlu0 %1804
      %v1806 = vsel %vm1769, %v1293, -inf
      %1807 = vmax.xlane.f32.xlu0 %v1806
      %v1808 = vpop.xlane.xlu0 %1807
      %v1809 = vsel %vm1769, %v1296, -inf
      %1810 = vmax.xlane.f32.xlu0 %v1809
      %v1811 = vpop.xlane.xlu0 %1810
      %v1812 = vsel %vm1769, %v1301, -inf
      %1813 = vmax.xlane.f32.xlu0 %v1812
      %v1814 = vpop.xlane.xlu0 %1813
      %v1815 = vsel %vm1769, %v1304, -inf
      %1816 = vmax.xlane.f32.xlu0 %v1815
      %v1817 = vpop.xlane.xlu0 %1816
      %v1818 = vsel %vm1769, %v1354, -inf
      %1819 = vmax.xlane.f32.xlu0 %v1818
      %v1820 = vpop.xlane.xlu0 %1819
      %v1821 = vsel %vm1769, %v1357, -inf
      %1822 = vmax.xlane.f32.xlu0 %v1821
      %v1823 = vpop.xlane.xlu0 %1822
      %v1824 = vsel %vm1769, %v1362, -inf
      %1825 = vmax.xlane.f32.xlu0 %v1824
      %v1826 = vpop.xlane.xlu0 %1825
      %v1827 = vsel %vm1769, %v1365, -inf
      %1828 = vmax.xlane.f32.xlu0 %v1827
      %v1829 = vpop.xlane.xlu0 %1828
      %v1830 = vsel %vm1769, %v1370, -inf
      %1831 = vmax.xlane.f32.xlu0 %v1830
      %v1832 = vpop.xlane.xlu0 %1831
      %v1833 = vsel %vm1769, %v1373, -inf
      %1834 = vmax.xlane.f32.xlu0 %v1833
      %v1835 = vpop.xlane.xlu0 %1834
      %v1836 = vsel %vm1769, %v1378, -inf
      %1837 = vmax.xlane.f32.xlu0 %v1836
      %v1838 = vpop.xlane.xlu0 %1837
      %v1839 = vsel %vm1769, %v1381, -inf
      %1840 = vmax.xlane.f32.xlu0 %v1839
      %v1841 = vpop.xlane.xlu0 %1840
      %v1842 = vsel %vm1769, %v1431, -inf
      %1843 = vmax.xlane.f32.xlu0 %v1842
      %v1844 = vpop.xlane.xlu0 %1843
      %v1845 = vsel %vm1769, %v1434, -inf
      %1846 = vmax.xlane.f32.xlu0 %v1845
      %v1847 = vpop.xlane.xlu0 %1846
      %v1848 = vsel %vm1769, %v1439, -inf
      %1849 = vmax.xlane.f32.xlu0 %v1848
      %v1850 = vpop.xlane.xlu0 %1849
      %v1851 = vsel %vm1769, %v1442, -inf
      %1852 = vmax.xlane.f32.xlu0 %v1851
      %v1853 = vpop.xlane.xlu0 %1852
      %v1854 = vsel %vm1769, %v1447, -inf
      %1855 = vmax.xlane.f32.xlu0 %v1854
      %v1856 = vpop.xlane.xlu0 %1855
      %v1857 = vsel %vm1769, %v1450, -inf
      %1858 = vmax.xlane.f32.xlu0 %v1857
      %v1859 = vpop.xlane.xlu0 %1858
      %v1860 = vsel %vm1769, %v1455, -inf
      %1861 = vmax.xlane.f32.xlu0 %v1860
      %v1862 = vpop.xlane.xlu0 %1861
      %v1863 = vsel %vm1769, %v1458, -inf
      %1864 = vmax.xlane.f32.xlu0 %v1863
      %v1865 = vpop.xlane.xlu0 %1864
      %v1866 = vsel %vm1769, %v1508, -inf
      %1867 = vmax.xlane.f32.xlu0 %v1866
      %v1868 = vpop.xlane.xlu0 %1867
      %v1869 = vsel %vm1769, %v1511, -inf
      %1870 = vmax.xlane.f32.xlu0 %v1869
      %v1871 = vpop.xlane.xlu0 %1870
      %v1872 = vsel %vm1769, %v1516, -inf
      %1873 = vmax.xlane.f32.xlu0 %v1872
      %v1874 = vpop.xlane.xlu0 %1873
      %v1875 = vsel %vm1769, %v1519, -inf
      %1876 = vmax.xlane.f32.xlu0 %v1875
      %v1877 = vpop.xlane.xlu0 %1876
      %v1878 = vsel %vm1769, %v1524, -inf
      %1879 = vmax.xlane.f32.xlu0 %v1878
      %v1880 = vpop.xlane.xlu0 %1879
      %v1881 = vsel %vm1769, %v1527, -inf
      %1882 = vmax.xlane.f32.xlu0 %v1881
      %v1883 = vpop.xlane.xlu0 %1882
      %v1884 = vsel %vm1769, %v1532, -inf
      %1885 = vmax.xlane.f32.xlu0 %v1884
      %v1886 = vpop.xlane.xlu0 %1885
      %v1887 = vsel %vm1769, %v1535, -inf
      %1888 = vmax.xlane.f32.xlu0 %v1887
      %v1889 = vpop.xlane.xlu0 %1888
      %v1890 = vsel %vm1769, %v1585, -inf
      %1891 = vmax.xlane.f32.xlu0 %v1890
      %v1892 = vpop.xlane.xlu0 %1891
      %v1893 = vsel %vm1769, %v1588, -inf
      %1894 = vmax.xlane.f32.xlu0 %v1893
      %v1895 = vpop.xlane.xlu0 %1894
      %v1896 = vsel %vm1769, %v1593, -inf
      %1897 = vmax.xlane.f32.xlu0 %v1896
      %v1898 = vpop.xlane.xlu0 %1897
      %v1899 = vsel %vm1769, %v1596, -inf
      %1900 = vmax.xlane.f32.xlu0 %v1899
      %v1901 = vpop.xlane.xlu0 %1900
      %v1902 = vsel %vm1769, %v1601, -inf
      %1903 = vmax.xlane.f32.xlu0 %v1902
      %v1904 = vpop.xlane.xlu0 %1903
      %v1905 = vsel %vm1769, %v1604, -inf
      %1906 = vmax.xlane.f32.xlu0 %v1905
      %v1907 = vpop.xlane.xlu0 %1906
      %v1908 = vsel %vm1769, %v1609, -inf
      %1909 = vmax.xlane.f32.xlu0 %v1908
      %v1910 = vpop.xlane.xlu0 %1909
      %v1911 = vsel %vm1769, %v1612, -inf
      %1912 = vmax.xlane.f32.xlu0 %v1911
      %v1913 = vpop.xlane.xlu0 %1912
      %v1914 = vsel %vm1769, %v1662, -inf
      %1915 = vmax.xlane.f32.xlu0 %v1914
      %v1916 = vpop.xlane.xlu0 %1915
      %v1917 = vsel %vm1769, %v1665, -inf
      %1918 = vmax.xlane.f32.xlu0 %v1917
      %v1919 = vpop.xlane.xlu0 %1918
      %v1920 = vsel %vm1769, %v1670, -inf
      %1921 = vmax.xlane.f32.xlu0 %v1920
      %v1922 = vpop.xlane.xlu0 %1921
      %v1923 = vsel %vm1769, %v1673, -inf
      %1924 = vmax.xlane.f32.xlu0 %v1923
      %v1925 = vpop.xlane.xlu0 %1924
      %v1926 = vsel %vm1769, %v1678, -inf
      %1927 = vmax.xlane.f32.xlu0 %v1926
      %v1928 = vpop.xlane.xlu0 %1927
      %v1929 = vsel %vm1769, %v1681, -inf
      %1930 = vmax.xlane.f32.xlu0 %v1929
      %v1931 = vpop.xlane.xlu0 %1930
      %v1932 = vsel %vm1769, %v1686, -inf
      %1933 = vmax.xlane.f32.xlu0 %v1932
      %v1934 = vpop.xlane.xlu0 %1933
      %v1935 = vsel %vm1769, %v1689, -inf
      %1936 = vmax.xlane.f32.xlu0 %v1935
      %v1937 = vpop.xlane.xlu0 %1936
      %v1938 = vsel %vm1769, %v1739, -inf
      %1939 = vmax.xlane.f32.xlu0 %v1938
      %v1940 = vpop.xlane.xlu0 %1939
      %v1941 = vsel %vm1769, %v1742, -inf
      %1942 = vmax.xlane.f32.xlu0 %v1941
      %v1943 = vpop.xlane.xlu0 %1942
      %v1944 = vsel %vm1769, %v1747, -inf
      %1945 = vmax.xlane.f32.xlu0 %v1944
      %v1946 = vpop.xlane.xlu0 %1945
      %v1947 = vsel %vm1769, %v1750, -inf
      %1948 = vmax.xlane.f32.xlu0 %v1947
      %v1949 = vpop.xlane.xlu0 %1948
      %v1950 = vsel %vm1769, %v1755, -inf
      %1951 = vmax.xlane.f32.xlu0 %v1950
      %v1952 = vpop.xlane.xlu0 %1951
      %v1953 = vsel %vm1769, %v1758, -inf
      %1954 = vmax.xlane.f32.xlu0 %v1953
      %v1955 = vpop.xlane.xlu0 %1954
      %v1956 = vsel %vm1769, %v1763, -inf
      %1957 = vmax.xlane.f32.xlu0 %v1956
      %v1958 = vpop.xlane.xlu0 %1957
      %v1959 = vsel %vm1769, %v1766, -inf
      %1960 = vmax.xlane.f32.xlu0 %v1959
      %v1961 = vpop.xlane.xlu0 %1960
      %v1962 = vsub.f32 %v1200, %v1772
      %v1963 = vsub.f32 %v1203, %v1775
      %v1964 = vsub.f32 %v1208, %v1778
      %v1965 = vsub.f32 %v1211, %v1781
      %v1966 = vsub.f32 %v1216, %v1784
      %v1967 = vsub.f32 %v1219, %v1787
      %v1968 = vsub.f32 %v1224, %v1790
      %v1969 = vsub.f32 %v1227, %v1793
      %v1970 = vsub.f32 %v1277, %v1796
      %v1971 = vsub.f32 %v1280, %v1799
      %v1972 = vsub.f32 %v1285, %v1802
      %v1973 = vsub.f32 %v1288, %v1805
      %v1974 = vsub.f32 %v1293, %v1808
      %v1975 = vsub.f32 %v1296, %v1811
      %v1976 = vsub.f32 %v1301, %v1814
      %v1977 = vsub.f32 %v1304, %v1817
      %v1978 = vsub.f32 %v1354, %v1820
      %v1979 = vsub.f32 %v1357, %v1823
      %v1980 = vsub.f32 %v1362, %v1826
      %v1981 = vsub.f32 %v1365, %v1829
      %v1982 = vsub.f32 %v1370, %v1832
      %v1983 = vsub.f32 %v1373, %v1835
      %v1984 = vsub.f32 %v1378, %v1838
      %v1985 = vsub.f32 %v1381, %v1841
      %v1986 = vsub.f32 %v1431, %v1844
      %v1987 = vsub.f32 %v1434, %v1847
      %v1988 = vsub.f32 %v1439, %v1850
      %v1989 = vsub.f32 %v1442, %v1853
      %v1990 = vsub.f32 %v1447, %v1856
      %v1991 = vsub.f32 %v1450, %v1859
      %v1992 = vsub.f32 %v1455, %v1862
      %v1993 = vsub.f32 %v1458, %v1865
      %v1994 = vsub.f32 %v1508, %v1868
      %v1995 = vsub.f32 %v1511, %v1871
      %v1996 = vsub.f32 %v1516, %v1874
      %v1997 = vsub.f32 %v1519, %v1877
      %v1998 = vsub.f32 %v1524, %v1880
      %v1999 = vsub.f32 %v1527, %v1883
      %v2000 = vsub.f32 %v1532, %v1886
      %v2001 = vsub.f32 %v1535, %v1889
      %v2002 = vsub.f32 %v1585, %v1892
      %v2003 = vsub.f32 %v1588, %v1895
      %v2004 = vsub.f32 %v1593, %v1898
      %v2005 = vsub.f32 %v1596, %v1901
      %v2006 = vsub.f32 %v1601, %v1904
      %v2007 = vsub.f32 %v1604, %v1907
      %v2008 = vsub.f32 %v1609, %v1910
      %v2009 = vsub.f32 %v1612, %v1913
      %v2010 = vsub.f32 %v1662, %v1916
      %v2011 = vsub.f32 %v1665, %v1919
      %v2012 = vsub.f32 %v1670, %v1922
      %v2013 = vsub.f32 %v1673, %v1925
      %v2014 = vsub.f32 %v1678, %v1928
      %v2015 = vsub.f32 %v1681, %v1931
      %v2016 = vsub.f32 %v1686, %v1934
      %v2017 = vsub.f32 %v1689, %v1937
      %v2018 = vsub.f32 %v1739, %v1940
      %v2019 = vsub.f32 %v1742, %v1943
      %v2020 = vsub.f32 %v1747, %v1946
      %v2021 = vsub.f32 %v1750, %v1949
      %v2022 = vsub.f32 %v1755, %v1952
      %v2023 = vsub.f32 %v1758, %v1955
      %v2024 = vsub.f32 %v1763, %v1958
      %v2025 = vsub.f32 %v1766, %v1961
      %v2026 = vmul.f32 %v1962, 1.442695
      %v2027 = vpow.pop %v2026
      %v2028 = vmul.f32 %v1963, 1.442695
      %v2029 = vpow.pop %v2028
      %v2030 = vmul.f32 %v1964, 1.442695
      %v2031 = vpow.pop %v2030
      %v2032 = vmul.f32 %v1965, 1.442695
      %v2033 = vpow.pop %v2032
      %v2034 = vmul.f32 %v1966, 1.442695
      %v2035 = vpow.pop %v2034
      %v2036 = vmul.f32 %v1967, 1.442695
      %v2037 = vpow.pop %v2036
      %v2038 = vmul.f32 %v1968, 1.442695
      %v2039 = vpow.pop %v2038
      %v2040 = vmul.f32 %v1969, 1.442695
      %v2041 = vpow.pop %v2040
      %v2042 = vmul.f32 %v1970, 1.442695
      %v2043 = vpow.pop %v2042
      %v2044 = vmul.f32 %v1971, 1.442695
      %v2045 = vpow.pop %v2044
      %v2046 = vmul.f32 %v1972, 1.442695
      %v2047 = vpow.pop %v2046
      %v2048 = vmul.f32 %v1973, 1.442695
      %v2049 = vpow.pop %v2048
      %v2050 = vmul.f32 %v1974, 1.442695
      %v2051 = vpow.pop %v2050
      %v2052 = vmul.f32 %v1975, 1.442695
      %v2053 = vpow.pop %v2052
      %v2054 = vmul.f32 %v1976, 1.442695
      %v2055 = vpow.pop %v2054
      %v2056 = vmul.f32 %v1977, 1.442695
      %v2057 = vpow.pop %v2056
      %v2058 = vmul.f32 %v1978, 1.442695
      %v2059 = vpow.pop %v2058
      %v2060 = vmul.f32 %v1979, 1.442695
      %v2061 = vpow.pop %v2060
      %v2062 = vmul.f32 %v1980, 1.442695
      %v2063 = vpow.pop %v2062
      %v2064 = vmul.f32 %v1981, 1.442695
      %v2065 = vpow.pop %v2064
      %v2066 = vmul.f32 %v1982, 1.442695
      %v2067 = vpow.pop %v2066
      %v2068 = vmul.f32 %v1983, 1.442695
      %v2069 = vpow.pop %v2068
      %v2070 = vmul.f32 %v1984, 1.442695
      %v2071 = vpow.pop %v2070
      %v2072 = vmul.f32 %v1985, 1.442695
      %v2073 = vpow.pop %v2072
      %v2074 = vmul.f32 %v1986, 1.442695
      %v2075 = vpow.pop %v2074
      %v2076 = vmul.f32 %v1987, 1.442695
      %v2077 = vpow.pop %v2076
      %v2078 = vmul.f32 %v1988, 1.442695
      %v2079 = vpow.pop %v2078
      %v2080 = vmul.f32 %v1989, 1.442695
      %v2081 = vpow.pop %v2080
      %v2082 = vmul.f32 %v1990, 1.442695
      %v2083 = vpow.pop %v2082
      %v2084 = vmul.f32 %v1991, 1.442695
      %v2085 = vpow.pop %v2084
      %v2086 = vmul.f32 %v1992, 1.442695
      %v2087 = vpow.pop %v2086
      %v2088 = vmul.f32 %v1993, 1.442695
      %v2089 = vpow.pop %v2088
      %v2090 = vmul.f32 %v1994, 1.442695
      %v2091 = vpow.pop %v2090
      %v2092 = vmul.f32 %v1995, 1.442695
      %v2093 = vpow.pop %v2092
      %v2094 = vmul.f32 %v1996, 1.442695
      %v2095 = vpow.pop %v2094
      %v2096 = vmul.f32 %v1997, 1.442695
      %v2097 = vpow.pop %v2096
      %v2098 = vmul.f32 %v1998, 1.442695
      %v2099 = vpow.pop %v2098
      %v2100 = vmul.f32 %v1999, 1.442695
      %v2101 = vpow.pop %v2100
      %v2102 = vmul.f32 %v2000, 1.442695
      %v2103 = vpow.pop %v2102
      %v2104 = vmul.f32 %v2001, 1.442695
      %v2105 = vpow.pop %v2104
      %v2106 = vmul.f32 %v2002, 1.442695
      %v2107 = vpow.pop %v2106
      %v2108 = vmul.f32 %v2003, 1.442695
      %v2109 = vpow.pop %v2108
      %v2110 = vmul.f32 %v2004, 1.442695
      %v2111 = vpow.pop %v2110
      %v2112 = vmul.f32 %v2005, 1.442695
      %v2113 = vpow.pop %v2112
      %v2114 = vmul.f32 %v2006, 1.442695
      %v2115 = vpow.pop %v2114
      %v2116 = vmul.f32 %v2007, 1.442695
      %v2117 = vpow.pop %v2116
      %v2118 = vmul.f32 %v2008, 1.442695
      %v2119 = vpow.pop %v2118
      %v2120 = vmul.f32 %v2009, 1.442695
      %v2121 = vpow.pop %v2120
      %v2122 = vmul.f32 %v2010, 1.442695
      %v2123 = vpow.pop %v2122
      %v2124 = vmul.f32 %v2011, 1.442695
      %v2125 = vpow.pop %v2124
      %v2126 = vmul.f32 %v2012, 1.442695
      %v2127 = vpow.pop %v2126
      %v2128 = vmul.f32 %v2013, 1.442695
      %v2129 = vpow.pop %v2128
      %v2130 = vmul.f32 %v2014, 1.442695
      %v2131 = vpow.pop %v2130
      %v2132 = vmul.f32 %v2015, 1.442695
      %v2133 = vpow.pop %v2132
      %v2134 = vmul.f32 %v2016, 1.442695
      %v2135 = vpow.pop %v2134
      %v2136 = vmul.f32 %v2017, 1.442695
      %v2137 = vpow.pop %v2136
      %v2138 = vmul.f32 %v2018, 1.442695
      %v2139 = vpow.pop %v2138
      %v2140 = vmul.f32 %v2019, 1.442695
      %v2141 = vpow.pop %v2140
      %v2142 = vmul.f32 %v2020, 1.442695
      %v2143 = vpow.pop %v2142
      %v2144 = vmul.f32 %v2021, 1.442695
      %v2145 = vpow.pop %v2144
      %v2146 = vmul.f32 %v2022, 1.442695
      %v2147 = vpow.pop %v2146
      %v2148 = vmul.f32 %v2023, 1.442695
      %v2149 = vpow.pop %v2148
      %v2150 = vmul.f32 %v2024, 1.442695
      %v2151 = vpow.pop %v2150
      %v2152 = vmul.f32 %v2025, 1.442695
      %v2153 = vpow.pop %v2152
      %v2154 = vsel %vm1769, %v2027, 0.0
      %2155 = vadd.xlane.f32.xlu0 %v2154
      %v2156 = vpop.xlane.xlu0 %2155
      %v2157 = vsel %vm1769, %v2029, 0.0
      %2158 = vadd.xlane.f32.xlu0 %v2157
      %v2159 = vpop.xlane.xlu0 %2158
      %v2160 = vsel %vm1769, %v2031, 0.0
      %2161 = vadd.xlane.f32.xlu0 %v2160
      %v2162 = vpop.xlane.xlu0 %2161
      %v2163 = vsel %vm1769, %v2033, 0.0
      %2164 = vadd.xlane.f32.xlu0 %v2163
      %v2165 = vpop.xlane.xlu0 %2164
      %v2166 = vsel %vm1769, %v2035, 0.0
      %2167 = vadd.xlane.f32.xlu0 %v2166
      %v2168 = vpop.xlane.xlu0 %2167
      %v2169 = vsel %vm1769, %v2037, 0.0
      %2170 = vadd.xlane.f32.xlu0 %v2169
      %v2171 = vpop.xlane.xlu0 %2170
      %v2172 = vsel %vm1769, %v2039, 0.0
      %2173 = vadd.xlane.f32.xlu0 %v2172
      %v2174 = vpop.xlane.xlu0 %2173
      %v2175 = vsel %vm1769, %v2041, 0.0
      %2176 = vadd.xlane.f32.xlu0 %v2175
      %v2177 = vpop.xlane.xlu0 %2176
      %v2178 = vsel %vm1769, %v2043, 0.0
      %2179 = vadd.xlane.f32.xlu0 %v2178
      %v2180 = vpop.xlane.xlu0 %2179
      %v2181 = vsel %vm1769, %v2045, 0.0
      %2182 = vadd.xlane.f32.xlu0 %v2181
      %v2183 = vpop.xlane.xlu0 %2182
      %v2184 = vsel %vm1769, %v2047, 0.0
      %2185 = vadd.xlane.f32.xlu0 %v2184
      %v2186 = vpop.xlane.xlu0 %2185
      %v2187 = vsel %vm1769, %v2049, 0.0
      %2188 = vadd.xlane.f32.xlu0 %v2187
      %v2189 = vpop.xlane.xlu0 %2188
      %v2190 = vsel %vm1769, %v2051, 0.0
      %2191 = vadd.xlane.f32.xlu0 %v2190
      %v2192 = vpop.xlane.xlu0 %2191
      %v2193 = vsel %vm1769, %v2053, 0.0
      %2194 = vadd.xlane.f32.xlu0 %v2193
      %v2195 = vpop.xlane.xlu0 %2194
      %v2196 = vsel %vm1769, %v2055, 0.0
      %2197 = vadd.xlane.f32.xlu0 %v2196
      %v2198 = vpop.xlane.xlu0 %2197
      %v2199 = vsel %vm1769, %v2057, 0.0
      %2200 = vadd.xlane.f32.xlu0 %v2199
      %v2201 = vpop.xlane.xlu0 %2200
      %v2202 = vsel %vm1769, %v2059, 0.0
      %2203 = vadd.xlane.f32.xlu0 %v2202
      %v2204 = vpop.xlane.xlu0 %2203
      %v2205 = vsel %vm1769, %v2061, 0.0
      %2206 = vadd.xlane.f32.xlu0 %v2205
      %v2207 = vpop.xlane.xlu0 %2206
      %v2208 = vsel %vm1769, %v2063, 0.0
      %2209 = vadd.xlane.f32.xlu0 %v2208
      %v2210 = vpop.xlane.xlu0 %2209
      %v2211 = vsel %vm1769, %v2065, 0.0
      %2212 = vadd.xlane.f32.xlu0 %v2211
      %v2213 = vpop.xlane.xlu0 %2212
      %v2214 = vsel %vm1769, %v2067, 0.0
      %2215 = vadd.xlane.f32.xlu0 %v2214
      %v2216 = vpop.xlane.xlu0 %2215
      %v2217 = vsel %vm1769, %v2069, 0.0
      %2218 = vadd.xlane.f32.xlu0 %v2217
      %v2219 = vpop.xlane.xlu0 %2218
      %v2220 = vsel %vm1769, %v2071, 0.0
      %2221 = vadd.xlane.f32.xlu0 %v2220
      %v2222 = vpop.xlane.xlu0 %2221
      %v2223 = vsel %vm1769, %v2073, 0.0
      %2224 = vadd.xlane.f32.xlu0 %v2223
      %v2225 = vpop.xlane.xlu0 %2224
      %v2226 = vsel %vm1769, %v2075, 0.0
      %2227 = vadd.xlane.f32.xlu0 %v2226
      %v2228 = vpop.xlane.xlu0 %2227
      %v2229 = vsel %vm1769, %v2077, 0.0
      %2230 = vadd.xlane.f32.xlu0 %v2229
      %v2231 = vpop.xlane.xlu0 %2230
      %v2232 = vsel %vm1769, %v2079, 0.0
      %2233 = vadd.xlane.f32.xlu0 %v2232
      %v2234 = vpop.xlane.xlu0 %2233
      %v2235 = vsel %vm1769, %v2081, 0.0
      %2236 = vadd.xlane.f32.xlu0 %v2235
      %v2237 = vpop.xlane.xlu0 %2236
      %v2238 = vsel %vm1769, %v2083, 0.0
      %2239 = vadd.xlane.f32.xlu0 %v2238
      %v2240 = vpop.xlane.xlu0 %2239
      %v2241 = vsel %vm1769, %v2085, 0.0
      %2242 = vadd.xlane.f32.xlu0 %v2241
      %v2243 = vpop.xlane.xlu0 %2242
      %v2244 = vsel %vm1769, %v2087, 0.0
      %2245 = vadd.xlane.f32.xlu0 %v2244
      %v2246 = vpop.xlane.xlu0 %2245
      %v2247 = vsel %vm1769, %v2089, 0.0
      %2248 = vadd.xlane.f32.xlu0 %v2247
      %v2249 = vpop.xlane.xlu0 %2248
      %v2250 = vsel %vm1769, %v2091, 0.0
      %2251 = vadd.xlane.f32.xlu0 %v2250
      %v2252 = vpop.xlane.xlu0 %2251
      %v2253 = vsel %vm1769, %v2093, 0.0
      %2254 = vadd.xlane.f32.xlu0 %v2253
      %v2255 = vpop.xlane.xlu0 %2254
      %v2256 = vsel %vm1769, %v2095, 0.0
      %2257 = vadd.xlane.f32.xlu0 %v2256
      %v2258 = vpop.xlane.xlu0 %2257
      %v2259 = vsel %vm1769, %v2097, 0.0
      %2260 = vadd.xlane.f32.xlu0 %v2259
      %v2261 = vpop.xlane.xlu0 %2260
      %v2262 = vsel %vm1769, %v2099, 0.0
      %2263 = vadd.xlane.f32.xlu0 %v2262
      %v2264 = vpop.xlane.xlu0 %2263
      %v2265 = vsel %vm1769, %v2101, 0.0
      %2266 = vadd.xlane.f32.xlu0 %v2265
      %v2267 = vpop.xlane.xlu0 %2266
      %v2268 = vsel %vm1769, %v2103, 0.0
      %2269 = vadd.xlane.f32.xlu0 %v2268
      %v2270 = vpop.xlane.xlu0 %2269
      %v2271 = vsel %vm1769, %v2105, 0.0
      %2272 = vadd.xlane.f32.xlu0 %v2271
      %v2273 = vpop.xlane.xlu0 %2272
      %v2274 = vsel %vm1769, %v2107, 0.0
      %2275 = vadd.xlane.f32.xlu0 %v2274
      %v2276 = vpop.xlane.xlu0 %2275
      %v2277 = vsel %vm1769, %v2109, 0.0
      %2278 = vadd.xlane.f32.xlu0 %v2277
      %v2279 = vpop.xlane.xlu0 %2278
      %v2280 = vsel %vm1769, %v2111, 0.0
      %2281 = vadd.xlane.f32.xlu0 %v2280
      %v2282 = vpop.xlane.xlu0 %2281
      %v2283 = vsel %vm1769, %v2113, 0.0
      %2284 = vadd.xlane.f32.xlu0 %v2283
      %v2285 = vpop.xlane.xlu0 %2284
      %v2286 = vsel %vm1769, %v2115, 0.0
      %2287 = vadd.xlane.f32.xlu0 %v2286
      %v2288 = vpop.xlane.xlu0 %2287
      %v2289 = vsel %vm1769, %v2117, 0.0
      %2290 = vadd.xlane.f32.xlu0 %v2289
      %v2291 = vpop.xlane.xlu0 %2290
      %v2292 = vsel %vm1769, %v2119, 0.0
      %2293 = vadd.xlane.f32.xlu0 %v2292
      %v2294 = vpop.xlane.xlu0 %2293
      %v2295 = vsel %vm1769, %v2121, 0.0
      %2296 = vadd.xlane.f32.xlu0 %v2295
      %v2297 = vpop.xlane.xlu0 %2296
      %v2298 = vsel %vm1769, %v2123, 0.0
      %2299 = vadd.xlane.f32.xlu0 %v2298
      %v2300 = vpop.xlane.xlu0 %2299
      %v2301 = vsel %vm1769, %v2125, 0.0
      %2302 = vadd.xlane.f32.xlu0 %v2301
      %v2303 = vpop.xlane.xlu0 %2302
      %v2304 = vsel %vm1769, %v2127, 0.0
      %2305 = vadd.xlane.f32.xlu0 %v2304
      %v2306 = vpop.xlane.xlu0 %2305
      %v2307 = vsel %vm1769, %v2129, 0.0
      %2308 = vadd.xlane.f32.xlu0 %v2307
      %v2309 = vpop.xlane.xlu0 %2308
      %v2310 = vsel %vm1769, %v2131, 0.0
      %2311 = vadd.xlane.f32.xlu0 %v2310
      %v2312 = vpop.xlane.xlu0 %2311
      %v2313 = vsel %vm1769, %v2133, 0.0
      %2314 = vadd.xlane.f32.xlu0 %v2313
      %v2315 = vpop.xlane.xlu0 %2314
      %v2316 = vsel %vm1769, %v2135, 0.0
      %2317 = vadd.xlane.f32.xlu0 %v2316
      %v2318 = vpop.xlane.xlu0 %2317
      %v2319 = vsel %vm1769, %v2137, 0.0
      %2320 = vadd.xlane.f32.xlu0 %v2319
      %v2321 = vpop.xlane.xlu0 %2320
      %v2322 = vsel %vm1769, %v2139, 0.0
      %2323 = vadd.xlane.f32.xlu0 %v2322
      %v2324 = vpop.xlane.xlu0 %2323
      %v2325 = vsel %vm1769, %v2141, 0.0
      %2326 = vadd.xlane.f32.xlu0 %v2325
      %v2327 = vpop.xlane.xlu0 %2326
      %v2328 = vsel %vm1769, %v2143, 0.0
      %2329 = vadd.xlane.f32.xlu0 %v2328
      %v2330 = vpop.xlane.xlu0 %2329
      %v2331 = vsel %vm1769, %v2145, 0.0
      %2332 = vadd.xlane.f32.xlu0 %v2331
      %v2333 = vpop.xlane.xlu0 %2332
      %v2334 = vsel %vm1769, %v2147, 0.0
      %2335 = vadd.xlane.f32.xlu0 %v2334
      %v2336 = vpop.xlane.xlu0 %2335
      %v2337 = vsel %vm1769, %v2149, 0.0
      %2338 = vadd.xlane.f32.xlu0 %v2337
      %v2339 = vpop.xlane.xlu0 %2338
      %v2340 = vsel %vm1769, %v2151, 0.0
      %2341 = vadd.xlane.f32.xlu0 %v2340
      %v2342 = vpop.xlane.xlu0 %2341
      %v2343 = vsel %vm1769, %v2153, 0.0
      %2344 = vadd.xlane.f32.xlu0 %v2343
      %v2345 = vpop.xlane.xlu0 %2344
      %v2346 = vrcp.pop %v2156
      %v2347 = vrcp.pop %v2159
      %v2348 = vrcp.pop %v2162
      %v2349 = vrcp.pop %v2165
      %v2350 = vrcp.pop %v2168
      %v2351 = vrcp.pop %v2171
      %v2352 = vrcp.pop %v2174
      %v2353 = vrcp.pop %v2177
      %v2354 = vrcp.pop %v2180
      %v2355 = vrcp.pop %v2183
      %v2356 = vrcp.pop %v2186
      %v2357 = vrcp.pop %v2189
      %v2358 = vrcp.pop %v2192
      %v2359 = vrcp.pop %v2195
      %v2360 = vrcp.pop %v2198
      %v2361 = vrcp.pop %v2201
      %v2362 = vrcp.pop %v2204
      %v2363 = vrcp.pop %v2207
      %v2364 = vrcp.pop %v2210
      %v2365 = vrcp.pop %v2213
      %v2366 = vrcp.pop %v2216
      %v2367 = vrcp.pop %v2219
      %v2368 = vrcp.pop %v2222
      %v2369 = vrcp.pop %v2225
      %v2370 = vrcp.pop %v2228
      %v2371 = vrcp.pop %v2231
      %v2372 = vrcp.pop %v2234
      %v2373 = vrcp.pop %v2237
      %v2374 = vrcp.pop %v2240
      %v2375 = vrcp.pop %v2243
      %v2376 = vrcp.pop %v2246
      %v2377 = vrcp.pop %v2249
      %v2378 = vrcp.pop %v2252
      %v2379 = vrcp.pop %v2255
      %v2380 = vrcp.pop %v2258
      %v2381 = vrcp.pop %v2261
      %v2382 = vrcp.pop %v2264
      %v2383 = vrcp.pop %v2267
      %v2384 = vrcp.pop %v2270
      %v2385 = vrcp.pop %v2273
      %v2386 = vrcp.pop %v2276
      %v2387 = vrcp.pop %v2279
      %v2388 = vrcp.pop %v2282
      %v2389 = vrcp.pop %v2285
      %v2390 = vrcp.pop %v2288
      %v2391 = vrcp.pop %v2291
      %v2392 = vrcp.pop %v2294
      %v2393 = vrcp.pop %v2297
      %v2394 = vrcp.pop %v2300
      %v2395 = vrcp.pop %v2303
      %v2396 = vrcp.pop %v2306
      %v2397 = vrcp.pop %v2309
      %v2398 = vrcp.pop %v2312
      %v2399 = vrcp.pop %v2315
      %v2400 = vrcp.pop %v2318
      %v2401 = vrcp.pop %v2321
      %v2402 = vrcp.pop %v2324
      %v2403 = vrcp.pop %v2327
      %v2404 = vrcp.pop %v2330
      %v2405 = vrcp.pop %v2333
      %v2406 = vrcp.pop %v2336
      %v2407 = vrcp.pop %v2339
      %v2408 = vrcp.pop %v2342
      %v2409 = vrcp.pop %v2345
      %v2410 = vmul.f32 %v2027, %v2346
      %v2411 = vmul.f32 %v2029, %v2347
      %v2412 = vmul.f32 %v2031, %v2348
      %v2413 = vmul.f32 %v2033, %v2349
      %v2414 = vmul.f32 %v2035, %v2350
      %v2415 = vmul.f32 %v2037, %v2351
      %v2416 = vmul.f32 %v2039, %v2352
      %v2417 = vmul.f32 %v2041, %v2353
      %v2418 = vmul.f32 %v2043, %v2354
      %v2419 = vmul.f32 %v2045, %v2355
      %v2420 = vmul.f32 %v2047, %v2356
      %v2421 = vmul.f32 %v2049, %v2357
      %v2422 = vmul.f32 %v2051, %v2358
      %v2423 = vmul.f32 %v2053, %v2359
      %v2424 = vmul.f32 %v2055, %v2360
      %v2425 = vmul.f32 %v2057, %v2361
      %v2426 = vmul.f32 %v2059, %v2362
      %v2427 = vmul.f32 %v2061, %v2363
      %v2428 = vmul.f32 %v2063, %v2364
      %v2429 = vmul.f32 %v2065, %v2365
      %v2430 = vmul.f32 %v2067, %v2366
      %v2431 = vmul.f32 %v2069, %v2367
      %v2432 = vmul.f32 %v2071, %v2368
      %v2433 = vmul.f32 %v2073, %v2369
      %v2434 = vmul.f32 %v2075, %v2370
      %v2435 = vmul.f32 %v2077, %v2371
      %v2436 = vmul.f32 %v2079, %v2372
      %v2437 = vmul.f32 %v2081, %v2373
      %v2438 = vmul.f32 %v2083, %v2374
      %v2439 = vmul.f32 %v2085, %v2375
      %v2440 = vmul.f32 %v2087, %v2376
      %v2441 = vmul.f32 %v2089, %v2377
      %v2442 = vmul.f32 %v2091, %v2378
      %v2443 = vmul.f32 %v2093, %v2379
      %v2444 = vmul.f32 %v2095, %v2380
      %v2445 = vmul.f32 %v2097, %v2381
      %v2446 = vmul.f32 %v2099, %v2382
      %v2447 = vmul.f32 %v2101, %v2383
      %v2448 = vmul.f32 %v2103, %v2384
      %v2449 = vmul.f32 %v2105, %v2385
      %v2450 = vmul.f32 %v2107, %v2386
      %v2451 = vmul.f32 %v2109, %v2387
      %v2452 = vmul.f32 %v2111, %v2388
      %v2453 = vmul.f32 %v2113, %v2389
      %v2454 = vmul.f32 %v2115, %v2390
      %v2455 = vmul.f32 %v2117, %v2391
      %v2456 = vmul.f32 %v2119, %v2392
      %v2457 = vmul.f32 %v2121, %v2393
      %v2458 = vmul.f32 %v2123, %v2394
      %v2459 = vmul.f32 %v2125, %v2395
      %v2460 = vmul.f32 %v2127, %v2396
      %v2461 = vmul.f32 %v2129, %v2397
      %v2462 = vmul.f32 %v2131, %v2398
      %v2463 = vmul.f32 %v2133, %v2399
      %v2464 = vmul.f32 %v2135, %v2400
      %v2465 = vmul.f32 %v2137, %v2401
      %v2466 = vmul.f32 %v2139, %v2402
      %v2467 = vmul.f32 %v2141, %v2403
      %v2468 = vmul.f32 %v2143, %v2404
      %v2469 = vmul.f32 %v2145, %v2405
      %v2470 = vmul.f32 %v2147, %v2406
      %v2471 = vmul.f32 %v2149, %v2407
      %v2472 = vmul.f32 %v2151, %v2408
      %v2473 = vmul.f32 %v2153, %v2409
      %v2474 = vpack.c.bf16 %v2411, %v2410
      %v2475 = vpack.c.bf16 %v2413, %v2412
      %v2476 = vpack.c.bf16 %v2415, %v2414
      %v2477 = vpack.c.bf16 %v2417, %v2416
      %v2478 = vpack.c.bf16 %v2419, %v2418
      %v2479 = vpack.c.bf16 %v2421, %v2420
      %v2480 = vpack.c.bf16 %v2423, %v2422
      %v2481 = vpack.c.bf16 %v2425, %v2424
      %v2482 = vpack.c.bf16 %v2427, %v2426
      %v2483 = vpack.c.bf16 %v2429, %v2428
      %v2484 = vpack.c.bf16 %v2431, %v2430
      %v2485 = vpack.c.bf16 %v2433, %v2432
      %v2486 = vpack.c.bf16 %v2435, %v2434
      %v2487 = vpack.c.bf16 %v2437, %v2436
      %v2488 = vpack.c.bf16 %v2439, %v2438
      %v2489 = vpack.c.bf16 %v2441, %v2440
      %v2490 = vpack.c.bf16 %v2443, %v2442
      %v2491 = vpack.c.bf16 %v2445, %v2444
      %v2492 = vpack.c.bf16 %v2447, %v2446
      %v2493 = vpack.c.bf16 %v2449, %v2448
      %v2494 = vpack.c.bf16 %v2451, %v2450
      %v2495 = vpack.c.bf16 %v2453, %v2452
      %v2496 = vpack.c.bf16 %v2455, %v2454
      %v2497 = vpack.c.bf16 %v2457, %v2456
      %v2498 = vpack.c.bf16 %v2459, %v2458
      %v2499 = vpack.c.bf16 %v2461, %v2460
      %v2500 = vpack.c.bf16 %v2463, %v2462
      %v2501 = vpack.c.bf16 %v2465, %v2464
      %v2502 = vpack.c.bf16 %v2467, %v2466
      %v2503 = vpack.c.bf16 %v2469, %v2468
      %v2504 = vpack.c.bf16 %v2471, %v2470
      %v2505 = vpack.c.bf16 %v2473, %v2472
      %v2507 = vsel %vm1769, %v2474, 0
      %v2510 = vsel %vm1769, %v2475, 0
      %v2513 = vsel %vm1769, %v2476, 0
      %v2516 = vsel %vm1769, %v2477, 0
      %2518 = vmatprep.subr.bf16.mxu0 0
      %2519 = vmatpush1.bf16.msra.mxu0 0
      %2520 = vmatprep.subr.bf16.mxu0 0
      %2521 = vmatpush1.bf16.msra.mxu0 0
      %2522 = vmatprep.subr.bf16.mxu0 0
      %2523 = vmatpush1.bf16.msra.mxu0 0
      %2524 = vmatprep.subr.bf16.mxu0 0
      %2525 = vmatpush1.bf16.msra.mxu0 0
      %2526 = vmatprep.subr.bf16.mxu0 0
      %2527 = vmatpush1.bf16.msra.mxu0 %v1108
      %2528 = vmatprep.subr.bf16.mxu0 0
      %2529 = vmatpush1.bf16.msra.mxu0 %v1107
      %2530 = vmatprep.subr.bf16.mxu0 0
      %2531 = vmatpush1.bf16.msra.mxu0 %v1106
      %2532 = vmatprep.subr.bf16.mxu0 0
      %2533 = vmatpush1.bf16.msra.mxu0 %v1105
      %2534 = vmatprep.subr.bf16.mxu0 0
      %2535 = vmatpush2.bf16.msra.mxu0 0
      %2536 = vmatprep.subr.bf16.mxu0 0
      %2537 = vmatpush2.bf16.msra.mxu0 0
      %2538 = vmatprep.subr.bf16.mxu0 0
      %2539 = vmatpush2.bf16.msra.mxu0 0
      %2540 = vmatprep.subr.bf16.mxu0 0
      %2541 = vmatpush2.bf16.msra.mxu0 0
      %2542 = vmatprep.subr.bf16.mxu0 0
      %2543 = vmatpush2.bf16.msra.mxu0 0
      %2544 = vmatprep.subr.bf16.mxu0 0
      %2545 = vmatpush2.bf16.msra.mxu0 0
      %2546 = vmatprep.subr.bf16.mxu0 0
      %2547 = vmatpush2.bf16.msra.mxu0 0
      %2548 = vmatprep.subr.bf16.mxu0 0
      %2549 = vmatpush2.bf16.msra.mxu0 0
      %2550 = vmatprep.mubr.bf16.mxu0 0
      %2551 = vmatmul.mubr.bf16.gmra.mxu0 %v2507
      %v2552 = vpop.f32.mrf.mxu0
      %v2553 = vadd.f32 0.0, %v2552
      %v2554 = vpop.f32.mrf.mxu0
      %v2555 = vpop.f32.mrf.mxu0
      %v2556 = vadd.f32 0.0, %v2555
      %v2557 = vpop.f32.mrf.mxu0
      %2558 = vmatprep.mubr.bf16.mxu0 0
      %2559 = vmatmul.mubr.bf16.gmra.mxu0 %v2510
      %v2560 = vpop.f32.mrf.mxu0
      %v2561 = vadd.f32 0.0, %v2560
      %v2562 = vpop.f32.mrf.mxu0
      %v2563 = vpop.f32.mrf.mxu0
      %v2564 = vadd.f32 0.0, %v2563
      %v2565 = vpop.f32.mrf.mxu0
      %2566 = vmatprep.mubr.bf16.mxu0 0
      %2567 = vmatmul.mubr.bf16.gmra.mxu0 %v2513
      %v2568 = vpop.f32.mrf.mxu0
      %v2569 = vadd.f32 0.0, %v2568
      %v2570 = vpop.f32.mrf.mxu0
      %v2571 = vpop.f32.mrf.mxu0
      %v2572 = vadd.f32 0.0, %v2571
      %v2573 = vpop.f32.mrf.mxu0
      %2574 = vmatprep.mubr.bf16.mxu0 0
      %2575 = vmatmul.mubr.bf16.gmra.mxu0 %v2516
      %v2576 = vpop.f32.mrf.mxu0
      %v2577 = vadd.f32 0.0, %v2576
      %v2578 = vpop.f32.mrf.mxu0
      %v2579 = vpop.f32.mrf.mxu0
      %v2580 = vadd.f32 0.0, %v2579
      %v2581 = vpop.f32.mrf.mxu0
      %2582 = vdwg.mxu0
      %v2584 = vsel %vm1769, %v2478, 0
      %v2587 = vsel %vm1769, %v2479, 0
      %v2590 = vsel %vm1769, %v2480, 0
      %v2593 = vsel %vm1769, %v2481, 0
      %2595 = vmatprep.subr.bf16.mxu0 0
      %2596 = vmatpush1.bf16.msra.mxu0 0
      %2597 = vmatprep.subr.bf16.mxu0 0
      %2598 = vmatpush1.bf16.msra.mxu0 0
      %2599 = vmatprep.subr.bf16.mxu0 0
      %2600 = vmatpush1.bf16.msra.mxu0 0
      %2601 = vmatprep.subr.bf16.mxu0 0
      %2602 = vmatpush1.bf16.msra.mxu0 0
      %2603 = vmatprep.subr.bf16.mxu0 0
      %2604 = vmatpush1.bf16.msra.mxu0 %v1112
      %2605 = vmatprep.subr.bf16.mxu0 0
      %2606 = vmatpush1.bf16.msra.mxu0 %v1111
      %2607 = vmatprep.subr.bf16.mxu0 0
      %2608 = vmatpush1.bf16.msra.mxu0 %v1110
      %2609 = vmatprep.subr.bf16.mxu0 0
      %2610 = vmatpush1.bf16.msra.mxu0 %v1109
      %2611 = vmatprep.subr.bf16.mxu0 0
      %2612 = vmatpush2.bf16.msra.mxu0 0
      %2613 = vmatprep.subr.bf16.mxu0 0
      %2614 = vmatpush2.bf16.msra.mxu0 0
      %2615 = vmatprep.subr.bf16.mxu0 0
      %2616 = vmatpush2.bf16.msra.mxu0 0
      %2617 = vmatprep.subr.bf16.mxu0 0
      %2618 = vmatpush2.bf16.msra.mxu0 0
      %2619 = vmatprep.subr.bf16.mxu0 0
      %2620 = vmatpush2.bf16.msra.mxu0 0
      %2621 = vmatprep.subr.bf16.mxu0 0
      %2622 = vmatpush2.bf16.msra.mxu0 0
      %2623 = vmatprep.subr.bf16.mxu0 0
      %2624 = vmatpush2.bf16.msra.mxu0 0
      %2625 = vmatprep.subr.bf16.mxu0 0
      %2626 = vmatpush2.bf16.msra.mxu0 0
      %2627 = vmatprep.mubr.bf16.mxu0 0
      %2628 = vmatmul.mubr.bf16.gmra.mxu0 %v2584
      %v2629 = vpop.f32.mrf.mxu0
      %v2630 = vadd.f32 0.0, %v2629
      %v2631 = vpop.f32.mrf.mxu0
      %v2632 = vpop.f32.mrf.mxu0
      %v2633 = vadd.f32 0.0, %v2632
      %v2634 = vpop.f32.mrf.mxu0
      %2635 = vmatprep.mubr.bf16.mxu0 0
      %2636 = vmatmul.mubr.bf16.gmra.mxu0 %v2587
      %v2637 = vpop.f32.mrf.mxu0
      %v2638 = vadd.f32 0.0, %v2637
      %v2639 = vpop.f32.mrf.mxu0
      %v2640 = vpop.f32.mrf.mxu0
      %v2641 = vadd.f32 0.0, %v2640
      %v2642 = vpop.f32.mrf.mxu0
      %2643 = vmatprep.mubr.bf16.mxu0 0
      %2644 = vmatmul.mubr.bf16.gmra.mxu0 %v2590
      %v2645 = vpop.f32.mrf.mxu0
      %v2646 = vadd.f32 0.0, %v2645
      %v2647 = vpop.f32.mrf.mxu0
      %v2648 = vpop.f32.mrf.mxu0
      %v2649 = vadd.f32 0.0, %v2648
      %v2650 = vpop.f32.mrf.mxu0
      %2651 = vmatprep.mubr.bf16.mxu0 0
      %2652 = vmatmul.mubr.bf16.gmra.mxu0 %v2593
      %v2653 = vpop.f32.mrf.mxu0
      %v2654 = vadd.f32 0.0, %v2653
      %v2655 = vpop.f32.mrf.mxu0
      %v2656 = vpop.f32.mrf.mxu0
      %v2657 = vadd.f32 0.0, %v2656
      %v2658 = vpop.f32.mrf.mxu0
      %2659 = vdwg.mxu0
      %v2661 = vsel %vm1769, %v2482, 0
      %v2664 = vsel %vm1769, %v2483, 0
      %v2667 = vsel %vm1769, %v2484, 0
      %v2670 = vsel %vm1769, %v2485, 0
      %2672 = vmatprep.subr.bf16.mxu0 0
      %2673 = vmatpush1.bf16.msra.mxu0 0
      %2674 = vmatprep.subr.bf16.mxu0 0
      %2675 = vmatpush1.bf16.msra.mxu0 0
      %2676 = vmatprep.subr.bf16.mxu0 0
      %2677 = vmatpush1.bf16.msra.mxu0 0
      %2678 = vmatprep.subr.bf16.mxu0 0
      %2679 = vmatpush1.bf16.msra.mxu0 0
      %2680 = vmatprep.subr.bf16.mxu0 0
      %2681 = vmatpush1.bf16.msra.mxu0 %v1116
      %2682 = vmatprep.subr.bf16.mxu0 0
      %2683 = vmatpush1.bf16.msra.mxu0 %v1115
      %2684 = vmatprep.subr.bf16.mxu0 0
      %2685 = vmatpush1.bf16.msra.mxu0 %v1114
      %2686 = vmatprep.subr.bf16.mxu0 0
      %2687 = vmatpush1.bf16.msra.mxu0 %v1113
      %2688 = vmatprep.subr.bf16.mxu0 0
      %2689 = vmatpush2.bf16.msra.mxu0 0
      %2690 = vmatprep.subr.bf16.mxu0 0
      %2691 = vmatpush2.bf16.msra.mxu0 0
      %2692 = vmatprep.subr.bf16.mxu0 0
      %2693 = vmatpush2.bf16.msra.mxu0 0
      %2694 = vmatprep.subr.bf16.mxu0 0
      %2695 = vmatpush2.bf16.msra.mxu0 0
      %2696 = vmatprep.subr.bf16.mxu0 0
      %2697 = vmatpush2.bf16.msra.mxu0 0
      %2698 = vmatprep.subr.bf16.mxu0 0
      %2699 = vmatpush2.bf16.msra.mxu0 0
      %2700 = vmatprep.subr.bf16.mxu0 0
      %2701 = vmatpush2.bf16.msra.mxu0 0
      %2702 = vmatprep.subr.bf16.mxu0 0
      %2703 = vmatpush2.bf16.msra.mxu0 0
      %2704 = vmatprep.mubr.bf16.mxu0 0
      %2705 = vmatmul.mubr.bf16.gmra.mxu0 %v2661
      %v2706 = vpop.f32.mrf.mxu0
      %v2707 = vadd.f32 0.0, %v2706
      %v2708 = vpop.f32.mrf.mxu0
      %v2709 = vpop.f32.mrf.mxu0
      %v2710 = vadd.f32 0.0, %v2709
      %v2711 = vpop.f32.mrf.mxu0
      %2712 = vmatprep.mubr.bf16.mxu0 0
      %2713 = vmatmul.mubr.bf16.gmra.mxu0 %v2664
      %v2714 = vpop.f32.mrf.mxu0
      %v2715 = vadd.f32 0.0, %v2714
      %v2716 = vpop.f32.mrf.mxu0
      %v2717 = vpop.f32.mrf.mxu0
      %v2718 = vadd.f32 0.0, %v2717
      %v2719 = vpop.f32.mrf.mxu0
      %2720 = vmatprep.mubr.bf16.mxu0 0
      %2721 = vmatmul.mubr.bf16.gmra.mxu0 %v2667
      %v2722 = vpop.f32.mrf.mxu0
      %v2723 = vadd.f32 0.0, %v2722
      %v2724 = vpop.f32.mrf.mxu0
      %v2725 = vpop.f32.mrf.mxu0
      %v2726 = vadd.f32 0.0, %v2725
      %v2727 = vpop.f32.mrf.mxu0
      %2728 = vmatprep.mubr.bf16.mxu0 0
      %2729 = vmatmul.mubr.bf16.gmra.mxu0 %v2670
      %v2730 = vpop.f32.mrf.mxu0
      %v2731 = vadd.f32 0.0, %v2730
      %v2732 = vpop.f32.mrf.mxu0
      %v2733 = vpop.f32.mrf.mxu0
      %v2734 = vadd.f32 0.0, %v2733
      %v2735 = vpop.f32.mrf.mxu0
      %2736 = vdwg.mxu0
      %v2738 = vsel %vm1769, %v2486, 0
      %v2741 = vsel %vm1769, %v2487, 0
      %v2744 = vsel %vm1769, %v2488, 0
      %v2747 = vsel %vm1769, %v2489, 0
      %2749 = vmatprep.subr.bf16.mxu0 0
      %2750 = vmatpush1.bf16.msra.mxu0 0
      %2751 = vmatprep.subr.bf16.mxu0 0
      %2752 = vmatpush1.bf16.msra.mxu0 0
      %2753 = vmatprep.subr.bf16.mxu0 0
      %2754 = vmatpush1.bf16.msra.mxu0 0
      %2755 = vmatprep.subr.bf16.mxu0 0
      %2756 = vmatpush1.bf16.msra.mxu0 0
      %2757 = vmatprep.subr.bf16.mxu0 0
      %2758 = vmatpush1.bf16.msra.mxu0 %v1120
      %2759 = vmatprep.subr.bf16.mxu0 0
      %2760 = vmatpush1.bf16.msra.mxu0 %v1119
      %2761 = vmatprep.subr.bf16.mxu0 0
      %2762 = vmatpush1.bf16.msra.mxu0 %v1118
      %2763 = vmatprep.subr.bf16.mxu0 0
      %2764 = vmatpush1.bf16.msra.mxu0 %v1117
      %2765 = vmatprep.subr.bf16.mxu0 0
      %2766 = vmatpush2.bf16.msra.mxu0 0
      %2767 = vmatprep.subr.bf16.mxu0 0
      %2768 = vmatpush2.bf16.msra.mxu0 0
      %2769 = vmatprep.subr.bf16.mxu0 0
      %2770 = vmatpush2.bf16.msra.mxu0 0
      %2771 = vmatprep.subr.bf16.mxu0 0
      %2772 = vmatpush2.bf16.msra.mxu0 0
      %2773 = vmatprep.subr.bf16.mxu0 0
      %2774 = vmatpush2.bf16.msra.mxu0 0
      %2775 = vmatprep.subr.bf16.mxu0 0
      %2776 = vmatpush2.bf16.msra.mxu0 0
      %2777 = vmatprep.subr.bf16.mxu0 0
      %2778 = vmatpush2.bf16.msra.mxu0 0
      %2779 = vmatprep.subr.bf16.mxu0 0
      %2780 = vmatpush2.bf16.msra.mxu0 0
      %2781 = vmatprep.mubr.bf16.mxu0 0
      %2782 = vmatmul.mubr.bf16.gmra.mxu0 %v2738
      %v2783 = vpop.f32.mrf.mxu0
      %v2784 = vadd.f32 0.0, %v2783
      %v2785 = vpop.f32.mrf.mxu0
      %v2786 = vpop.f32.mrf.mxu0
      %v2787 = vadd.f32 0.0, %v2786
      %v2788 = vpop.f32.mrf.mxu0
      %2789 = vmatprep.mubr.bf16.mxu0 0
      %2790 = vmatmul.mubr.bf16.gmra.mxu0 %v2741
      %v2791 = vpop.f32.mrf.mxu0
      %v2792 = vadd.f32 0.0, %v2791
      %v2793 = vpop.f32.mrf.mxu0
      %v2794 = vpop.f32.mrf.mxu0
      %v2795 = vadd.f32 0.0, %v2794
      %v2796 = vpop.f32.mrf.mxu0
      %2797 = vmatprep.mubr.bf16.mxu0 0
      %2798 = vmatmul.mubr.bf16.gmra.mxu0 %v2744
      %v2799 = vpop.f32.mrf.mxu0
      %v2800 = vadd.f32 0.0, %v2799
      %v2801 = vpop.f32.mrf.mxu0
      %v2802 = vpop.f32.mrf.mxu0
      %v2803 = vadd.f32 0.0, %v2802
      %v2804 = vpop.f32.mrf.mxu0
      %2805 = vmatprep.mubr.bf16.mxu0 0
      %2806 = vmatmul.mubr.bf16.gmra.mxu0 %v2747
      %v2807 = vpop.f32.mrf.mxu0
      %v2808 = vadd.f32 0.0, %v2807
      %v2809 = vpop.f32.mrf.mxu0
      %v2810 = vpop.f32.mrf.mxu0
      %v2811 = vadd.f32 0.0, %v2810
      %v2812 = vpop.f32.mrf.mxu0
      %2813 = vdwg.mxu0
      %v2815 = vsel %vm1769, %v2490, 0
      %v2818 = vsel %vm1769, %v2491, 0
      %v2821 = vsel %vm1769, %v2492, 0
      %v2824 = vsel %vm1769, %v2493, 0
      %2826 = vmatprep.subr.bf16.mxu0 0
      %2827 = vmatpush1.bf16.msra.mxu0 0
      %2828 = vmatprep.subr.bf16.mxu0 0
      %2829 = vmatpush1.bf16.msra.mxu0 0
      %2830 = vmatprep.subr.bf16.mxu0 0
      %2831 = vmatpush1.bf16.msra.mxu0 0
      %2832 = vmatprep.subr.bf16.mxu0 0
      %2833 = vmatpush1.bf16.msra.mxu0 0
      %2834 = vmatprep.subr.bf16.mxu0 0
      %2835 = vmatpush1.bf16.msra.mxu0 %v1124
      %2836 = vmatprep.subr.bf16.mxu0 0
      %2837 = vmatpush1.bf16.msra.mxu0 %v1123
      %2838 = vmatprep.subr.bf16.mxu0 0
      %2839 = vmatpush1.bf16.msra.mxu0 %v1122
      %2840 = vmatprep.subr.bf16.mxu0 0
      %2841 = vmatpush1.bf16.msra.mxu0 %v1121
      %2842 = vmatprep.subr.bf16.mxu0 0
      %2843 = vmatpush2.bf16.msra.mxu0 0
      %2844 = vmatprep.subr.bf16.mxu0 0
      %2845 = vmatpush2.bf16.msra.mxu0 0
      %2846 = vmatprep.subr.bf16.mxu0 0
      %2847 = vmatpush2.bf16.msra.mxu0 0
      %2848 = vmatprep.subr.bf16.mxu0 0
      %2849 = vmatpush2.bf16.msra.mxu0 0
      %2850 = vmatprep.subr.bf16.mxu0 0
      %2851 = vmatpush2.bf16.msra.mxu0 0
      %2852 = vmatprep.subr.bf16.mxu0 0
      %2853 = vmatpush2.bf16.msra.mxu0 0
      %2854 = vmatprep.subr.bf16.mxu0 0
      %2855 = vmatpush2.bf16.msra.mxu0 0
      %2856 = vmatprep.subr.bf16.mxu0 0
      %2857 = vmatpush2.bf16.msra.mxu0 0
      %2858 = vmatprep.mubr.bf16.mxu0 0
      %2859 = vmatmul.mubr.bf16.gmra.mxu0 %v2815
      %v2860 = vpop.f32.mrf.mxu0
      %v2861 = vadd.f32 0.0, %v2860
      %v2862 = vpop.f32.mrf.mxu0
      %v2863 = vpop.f32.mrf.mxu0
      %v2864 = vadd.f32 0.0, %v2863
      %v2865 = vpop.f32.mrf.mxu0
      %2866 = vmatprep.mubr.bf16.mxu0 0
      %2867 = vmatmul.mubr.bf16.gmra.mxu0 %v2818
      %v2868 = vpop.f32.mrf.mxu0
      %v2869 = vadd.f32 0.0, %v2868
      %v2870 = vpop.f32.mrf.mxu0
      %v2871 = vpop.f32.mrf.mxu0
      %v2872 = vadd.f32 0.0, %v2871
      %v2873 = vpop.f32.mrf.mxu0
      %2874 = vmatprep.mubr.bf16.mxu0 0
      %2875 = vmatmul.mubr.bf16.gmra.mxu0 %v2821
      %v2876 = vpop.f32.mrf.mxu0
      %v2877 = vadd.f32 0.0, %v2876
      %v2878 = vpop.f32.mrf.mxu0
      %v2879 = vpop.f32.mrf.mxu0
      %v2880 = vadd.f32 0.0, %v2879
      %v2881 = vpop.f32.mrf.mxu0
      %2882 = vmatprep.mubr.bf16.mxu0 0
      %2883 = vmatmul.mubr.bf16.gmra.mxu0 %v2824
      %v2884 = vpop.f32.mrf.mxu0
      %v2885 = vadd.f32 0.0, %v2884
      %v2886 = vpop.f32.mrf.mxu0
      %v2887 = vpop.f32.mrf.mxu0
      %v2888 = vadd.f32 0.0, %v2887
      %v2889 = vpop.f32.mrf.mxu0
      %2890 = vdwg.mxu0
      %v2892 = vsel %vm1769, %v2494, 0
      %v2895 = vsel %vm1769, %v2495, 0
      %v2898 = vsel %vm1769, %v2496, 0
      %v2901 = vsel %vm1769, %v2497, 0
      %2903 = vmatprep.subr.bf16.mxu0 0
      %2904 = vmatpush1.bf16.msra.mxu0 0
      %2905 = vmatprep.subr.bf16.mxu0 0
      %2906 = vmatpush1.bf16.msra.mxu0 0
      %2907 = vmatprep.subr.bf16.mxu0 0
      %2908 = vmatpush1.bf16.msra.mxu0 0
      %2909 = vmatprep.subr.bf16.mxu0 0
      %2910 = vmatpush1.bf16.msra.mxu0 0
      %2911 = vmatprep.subr.bf16.mxu0 0
      %2912 = vmatpush1.bf16.msra.mxu0 %v1128
      %2913 = vmatprep.subr.bf16.mxu0 0
      %2914 = vmatpush1.bf16.msra.mxu0 %v1127
      %2915 = vmatprep.subr.bf16.mxu0 0
      %2916 = vmatpush1.bf16.msra.mxu0 %v1126
      %2917 = vmatprep.subr.bf16.mxu0 0
      %2918 = vmatpush1.bf16.msra.mxu0 %v1125
      %2919 = vmatprep.subr.bf16.mxu0 0
      %2920 = vmatpush2.bf16.msra.mxu0 0
      %2921 = vmatprep.subr.bf16.mxu0 0
      %2922 = vmatpush2.bf16.msra.mxu0 0
      %2923 = vmatprep.subr.bf16.mxu0 0
      %2924 = vmatpush2.bf16.msra.mxu0 0
      %2925 = vmatprep.subr.bf16.mxu0 0
      %2926 = vmatpush2.bf16.msra.mxu0 0
      %2927 = vmatprep.subr.bf16.mxu0 0
      %2928 = vmatpush2.bf16.msra.mxu0 0
      %2929 = vmatprep.subr.bf16.mxu0 0
      %2930 = vmatpush2.bf16.msra.mxu0 0
      %2931 = vmatprep.subr.bf16.mxu0 0
      %2932 = vmatpush2.bf16.msra.mxu0 0
      %2933 = vmatprep.subr.bf16.mxu0 0
      %2934 = vmatpush2.bf16.msra.mxu0 0
      %2935 = vmatprep.mubr.bf16.mxu0 0
      %2936 = vmatmul.mubr.bf16.gmra.mxu0 %v2892
      %v2937 = vpop.f32.mrf.mxu0
      %v2938 = vadd.f32 0.0, %v2937
      %v2939 = vpop.f32.mrf.mxu0
      %v2940 = vpop.f32.mrf.mxu0
      %v2941 = vadd.f32 0.0, %v2940
      %v2942 = vpop.f32.mrf.mxu0
      %2943 = vmatprep.mubr.bf16.mxu0 0
      %2944 = vmatmul.mubr.bf16.gmra.mxu0 %v2895
      %v2945 = vpop.f32.mrf.mxu0
      %v2946 = vadd.f32 0.0, %v2945
      %v2947 = vpop.f32.mrf.mxu0
      %v2948 = vpop.f32.mrf.mxu0
      %v2949 = vadd.f32 0.0, %v2948
      %v2950 = vpop.f32.mrf.mxu0
      %2951 = vmatprep.mubr.bf16.mxu0 0
      %2952 = vmatmul.mubr.bf16.gmra.mxu0 %v2898
      %v2953 = vpop.f32.mrf.mxu0
      %v2954 = vadd.f32 0.0, %v2953
      %v2955 = vpop.f32.mrf.mxu0
      %v2956 = vpop.f32.mrf.mxu0
      %v2957 = vadd.f32 0.0, %v2956
      %v2958 = vpop.f32.mrf.mxu0
      %2959 = vmatprep.mubr.bf16.mxu0 0
      %2960 = vmatmul.mubr.bf16.gmra.mxu0 %v2901
      %v2961 = vpop.f32.mrf.mxu0
      %v2962 = vadd.f32 0.0, %v2961
      %v2963 = vpop.f32.mrf.mxu0
      %v2964 = vpop.f32.mrf.mxu0
      %v2965 = vadd.f32 0.0, %v2964
      %v2966 = vpop.f32.mrf.mxu0
      %2967 = vdwg.mxu0
      %v2969 = vsel %vm1769, %v2498, 0
      %v2972 = vsel %vm1769, %v2499, 0
      %v2975 = vsel %vm1769, %v2500, 0
      %v2978 = vsel %vm1769, %v2501, 0
      %2980 = vmatprep.subr.bf16.mxu0 0
      %2981 = vmatpush1.bf16.msra.mxu0 0
      %2982 = vmatprep.subr.bf16.mxu0 0
      %2983 = vmatpush1.bf16.msra.mxu0 0
      %2984 = vmatprep.subr.bf16.mxu0 0
      %2985 = vmatpush1.bf16.msra.mxu0 0
      %2986 = vmatprep.subr.bf16.mxu0 0
      %2987 = vmatpush1.bf16.msra.mxu0 0
      %2988 = vmatprep.subr.bf16.mxu0 0
      %2989 = vmatpush1.bf16.msra.mxu0 %v1132
      %2990 = vmatprep.subr.bf16.mxu0 0
      %2991 = vmatpush1.bf16.msra.mxu0 %v1131
      %2992 = vmatprep.subr.bf16.mxu0 0
      %2993 = vmatpush1.bf16.msra.mxu0 %v1130
      %2994 = vmatprep.subr.bf16.mxu0 0
      %2995 = vmatpush1.bf16.msra.mxu0 %v1129
      %2996 = vmatprep.subr.bf16.mxu0 0
      %2997 = vmatpush2.bf16.msra.mxu0 0
      %2998 = vmatprep.subr.bf16.mxu0 0
      %2999 = vmatpush2.bf16.msra.mxu0 0
      %3000 = vmatprep.subr.bf16.mxu0 0
      %3001 = vmatpush2.bf16.msra.mxu0 0
      %3002 = vmatprep.subr.bf16.mxu0 0
      %3003 = vmatpush2.bf16.msra.mxu0 0
      %3004 = vmatprep.subr.bf16.mxu0 0
      %3005 = vmatpush2.bf16.msra.mxu0 0
      %3006 = vmatprep.subr.bf16.mxu0 0
      %3007 = vmatpush2.bf16.msra.mxu0 0
      %3008 = vmatprep.subr.bf16.mxu0 0
      %3009 = vmatpush2.bf16.msra.mxu0 0
      %3010 = vmatprep.subr.bf16.mxu0 0
      %3011 = vmatpush2.bf16.msra.mxu0 0
      %3012 = vmatprep.mubr.bf16.mxu0 0
      %3013 = vmatmul.mubr.bf16.gmra.mxu0 %v2969
      %v3014 = vpop.f32.mrf.mxu0
      %v3015 = vadd.f32 0.0, %v3014
      %v3016 = vpop.f32.mrf.mxu0
      %v3017 = vpop.f32.mrf.mxu0
      %v3018 = vadd.f32 0.0, %v3017
      %v3019 = vpop.f32.mrf.mxu0
      %3020 = vmatprep.mubr.bf16.mxu0 0
      %3021 = vmatmul.mubr.bf16.gmra.mxu0 %v2972
      %v3022 = vpop.f32.mrf.mxu0
      %v3023 = vadd.f32 0.0, %v3022
      %v3024 = vpop.f32.mrf.mxu0
      %v3025 = vpop.f32.mrf.mxu0
      %v3026 = vadd.f32 0.0, %v3025
      %v3027 = vpop.f32.mrf.mxu0
      %3028 = vmatprep.mubr.bf16.mxu0 0
      %3029 = vmatmul.mubr.bf16.gmra.mxu0 %v2975
      %v3030 = vpop.f32.mrf.mxu0
      %v3031 = vadd.f32 0.0, %v3030
      %v3032 = vpop.f32.mrf.mxu0
      %v3033 = vpop.f32.mrf.mxu0
      %v3034 = vadd.f32 0.0, %v3033
      %v3035 = vpop.f32.mrf.mxu0
      %3036 = vmatprep.mubr.bf16.mxu0 0
      %3037 = vmatmul.mubr.bf16.gmra.mxu0 %v2978
      %v3038 = vpop.f32.mrf.mxu0
      %v3039 = vadd.f32 0.0, %v3038
      %v3040 = vpop.f32.mrf.mxu0
      %v3041 = vpop.f32.mrf.mxu0
      %v3042 = vadd.f32 0.0, %v3041
      %v3043 = vpop.f32.mrf.mxu0
      %3044 = vdwg.mxu0
      %v3046 = vsel %vm1769, %v2502, 0
      %v3049 = vsel %vm1769, %v2503, 0
      %v3052 = vsel %vm1769, %v2504, 0
      %v3055 = vsel %vm1769, %v2505, 0
      %3057 = vmatprep.subr.bf16.mxu0 0
      %3058 = vmatpush1.bf16.msra.mxu0 0
      %3059 = vmatprep.subr.bf16.mxu0 0
      %3060 = vmatpush1.bf16.msra.mxu0 0
      %3061 = vmatprep.subr.bf16.mxu0 0
      %3062 = vmatpush1.bf16.msra.mxu0 0
      %3063 = vmatprep.subr.bf16.mxu0 0
      %3064 = vmatpush1.bf16.msra.mxu0 0
      %3065 = vmatprep.subr.bf16.mxu0 0
      %3066 = vmatpush1.bf16.msra.mxu0 %v1136
      %3067 = vmatprep.subr.bf16.mxu0 0
      %3068 = vmatpush1.bf16.msra.mxu0 %v1135
      %3069 = vmatprep.subr.bf16.mxu0 0
      %3070 = vmatpush1.bf16.msra.mxu0 %v1134
      %3071 = vmatprep.subr.bf16.mxu0 0
      %3072 = vmatpush1.bf16.msra.mxu0 %v1133
      %3073 = vmatprep.subr.bf16.mxu0 0
      %3074 = vmatpush2.bf16.msra.mxu0 0
      %3075 = vmatprep.subr.bf16.mxu0 0
      %3076 = vmatpush2.bf16.msra.mxu0 0
      %3077 = vmatprep.subr.bf16.mxu0 0
      %3078 = vmatpush2.bf16.msra.mxu0 0
      %3079 = vmatprep.subr.bf16.mxu0 0
      %3080 = vmatpush2.bf16.msra.mxu0 0
      %3081 = vmatprep.subr.bf16.mxu0 0
      %3082 = vmatpush2.bf16.msra.mxu0 0
      %3083 = vmatprep.subr.bf16.mxu0 0
      %3084 = vmatpush2.bf16.msra.mxu0 0
      %3085 = vmatprep.subr.bf16.mxu0 0
      %3086 = vmatpush2.bf16.msra.mxu0 0
      %3087 = vmatprep.subr.bf16.mxu0 0
      %3088 = vmatpush2.bf16.msra.mxu0 0
      %3089 = vmatprep.mubr.bf16.mxu0 0
      %3090 = vmatmul.mubr.bf16.gmra.mxu0 %v3046
      %v3091 = vpop.f32.mrf.mxu0
      %v3092 = vadd.f32 0.0, %v3091
      %v3093 = vpop.f32.mrf.mxu0
      %v3094 = vpop.f32.mrf.mxu0
      %v3095 = vadd.f32 0.0, %v3094
      %v3096 = vpop.f32.mrf.mxu0
      %3097 = vmatprep.mubr.bf16.mxu0 0
      %3098 = vmatmul.mubr.bf16.gmra.mxu0 %v3049
      %v3099 = vpop.f32.mrf.mxu0
      %v3100 = vadd.f32 0.0, %v3099
      %v3101 = vpop.f32.mrf.mxu0
      %v3102 = vpop.f32.mrf.mxu0
      %v3103 = vadd.f32 0.0, %v3102
      %v3104 = vpop.f32.mrf.mxu0
      %3105 = vmatprep.mubr.bf16.mxu0 0
      %3106 = vmatmul.mubr.bf16.gmra.mxu0 %v3052
      %v3107 = vpop.f32.mrf.mxu0
      %v3108 = vadd.f32 0.0, %v3107
      %v3109 = vpop.f32.mrf.mxu0
      %v3110 = vpop.f32.mrf.mxu0
      %v3111 = vadd.f32 0.0, %v3110
      %v3112 = vpop.f32.mrf.mxu0
      %3113 = vmatprep.mubr.bf16.mxu0 0
      %3114 = vmatmul.mubr.bf16.gmra.mxu0 %v3055
      %v3115 = vpop.f32.mrf.mxu0
      %v3116 = vadd.f32 0.0, %v3115
      %v3117 = vpop.f32.mrf.mxu0
      %v3118 = vpop.f32.mrf.mxu0
      %v3119 = vadd.f32 0.0, %v3118
      %v3120 = vpop.f32.mrf.mxu0
      %3121 = vdwg.mxu0
      %v3122 = vsel %vm587, %v2553, 0.0
      %v3123 = vsel %vm587, %v2630, 0.0
      %v3124 = vadd.f32 %v3122, %v3123
      %v3125 = vsel %vm587, %v2707, 0.0
      %v3126 = vadd.f32 %v3124, %v3125
      %v3127 = vsel %vm587, %v2784, 0.0
      %v3128 = vadd.f32 %v3126, %v3127
      %v3129 = vsel %vm587, %v2861, 0.0
      %v3130 = vadd.f32 %v3128, %v3129
      %v3131 = vsel %vm587, %v2938, 0.0
      %v3132 = vadd.f32 %v3130, %v3131
      %v3133 = vsel %vm587, %v3015, 0.0
      %v3134 = vadd.f32 %v3132, %v3133
      %v3135 = vsel %vm587, %v3092, 0.0
      %v3136 = vadd.f32 %v3134, %v3135
      %v3137 = vsel %vm587, %v2556, 0.0
      %v3138 = vsel %vm587, %v2633, 0.0
      %v3139 = vadd.f32 %v3137, %v3138
      %v3140 = vsel %vm587, %v2710, 0.0
      %v3141 = vadd.f32 %v3139, %v3140
      %v3142 = vsel %vm587, %v2787, 0.0
      %v3143 = vadd.f32 %v3141, %v3142
      %v3144 = vsel %vm587, %v2864, 0.0
      %v3145 = vadd.f32 %v3143, %v3144
      %v3146 = vsel %vm587, %v2941, 0.0
      %v3147 = vadd.f32 %v3145, %v3146
      %v3148 = vsel %vm587, %v3018, 0.0
      %v3149 = vadd.f32 %v3147, %v3148
      %v3150 = vsel %vm587, %v3095, 0.0
      %v3151 = vadd.f32 %v3149, %v3150
      %v3152 = vsel %vm587, %v2561, 0.0
      %v3153 = vsel %vm587, %v2638, 0.0
      %v3154 = vadd.f32 %v3152, %v3153
      %v3155 = vsel %vm587, %v2715, 0.0
      %v3156 = vadd.f32 %v3154, %v3155
      %v3157 = vsel %vm587, %v2792, 0.0
      %v3158 = vadd.f32 %v3156, %v3157
      %v3159 = vsel %vm587, %v2869, 0.0
      %v3160 = vadd.f32 %v3158, %v3159
      %v3161 = vsel %vm587, %v2946, 0.0
      %v3162 = vadd.f32 %v3160, %v3161
      %v3163 = vsel %vm587, %v3023, 0.0
      %v3164 = vadd.f32 %v3162, %v3163
      %v3165 = vsel %vm587, %v3100, 0.0
      %v3166 = vadd.f32 %v3164, %v3165
      %v3167 = vsel %vm587, %v2564, 0.0
      %v3168 = vsel %vm587, %v2641, 0.0
      %v3169 = vadd.f32 %v3167, %v3168
      %v3170 = vsel %vm587, %v2718, 0.0
      %v3171 = vadd.f32 %v3169, %v3170
      %v3172 = vsel %vm587, %v2795, 0.0
      %v3173 = vadd.f32 %v3171, %v3172
      %v3174 = vsel %vm587, %v2872, 0.0
      %v3175 = vadd.f32 %v3173, %v3174
      %v3176 = vsel %vm587, %v2949, 0.0
      %v3177 = vadd.f32 %v3175, %v3176
      %v3178 = vsel %vm587, %v3026, 0.0
      %v3179 = vadd.f32 %v3177, %v3178
      %v3180 = vsel %vm587, %v3103, 0.0
      %v3181 = vadd.f32 %v3179, %v3180
      %v3182 = vsel %vm587, %v2569, 0.0
      %v3183 = vsel %vm587, %v2646, 0.0
      %v3184 = vadd.f32 %v3182, %v3183
      %v3185 = vsel %vm587, %v2723, 0.0
      %v3186 = vadd.f32 %v3184, %v3185
      %v3187 = vsel %vm587, %v2800, 0.0
      %v3188 = vadd.f32 %v3186, %v3187
      %v3189 = vsel %vm587, %v2877, 0.0
      %v3190 = vadd.f32 %v3188, %v3189
      %v3191 = vsel %vm587, %v2954, 0.0
      %v3192 = vadd.f32 %v3190, %v3191
      %v3193 = vsel %vm587, %v3031, 0.0
      %v3194 = vadd.f32 %v3192, %v3193
      %v3195 = vsel %vm587, %v3108, 0.0
      %v3196 = vadd.f32 %v3194, %v3195
      %v3197 = vsel %vm587, %v2572, 0.0
      %v3198 = vsel %vm587, %v2649, 0.0
      %v3199 = vadd.f32 %v3197, %v3198
      %v3200 = vsel %vm587, %v2726, 0.0
      %v3201 = vadd.f32 %v3199, %v3200
      %v3202 = vsel %vm587, %v2803, 0.0
      %v3203 = vadd.f32 %v3201, %v3202
      %v3204 = vsel %vm587, %v2880, 0.0
      %v3205 = vadd.f32 %v3203, %v3204
      %v3206 = vsel %vm587, %v2957, 0.0
      %v3207 = vadd.f32 %v3205, %v3206
      %v3208 = vsel %vm587, %v3034, 0.0
      %v3209 = vadd.f32 %v3207, %v3208
      %v3210 = vsel %vm587, %v3111, 0.0
      %v3211 = vadd.f32 %v3209, %v3210
      %v3212 = vsel %vm587, %v2577, 0.0
      %v3213 = vsel %vm587, %v2654, 0.0
      %v3214 = vadd.f32 %v3212, %v3213
      %v3215 = vsel %vm587, %v2731, 0.0
      %v3216 = vadd.f32 %v3214, %v3215
      %v3217 = vsel %vm587, %v2808, 0.0
      %v3218 = vadd.f32 %v3216, %v3217
      %v3219 = vsel %vm587, %v2885, 0.0
      %v3220 = vadd.f32 %v3218, %v3219
      %v3221 = vsel %vm587, %v2962, 0.0
      %v3222 = vadd.f32 %v3220, %v3221
      %v3223 = vsel %vm587, %v3039, 0.0
      %v3224 = vadd.f32 %v3222, %v3223
      %v3225 = vsel %vm587, %v3116, 0.0
      %v3226 = vadd.f32 %v3224, %v3225
      %v3227 = vsel %vm587, %v2580, 0.0
      %v3228 = vsel %vm587, %v2657, 0.0
      %v3229 = vadd.f32 %v3227, %v3228
      %v3230 = vsel %vm587, %v2734, 0.0
      %v3231 = vadd.f32 %v3229, %v3230
      %v3232 = vsel %vm587, %v2811, 0.0
      %v3233 = vadd.f32 %v3231, %v3232
      %v3234 = vsel %vm587, %v2888, 0.0
      %v3235 = vadd.f32 %v3233, %v3234
      %v3236 = vsel %vm587, %v2965, 0.0
      %v3237 = vadd.f32 %v3235, %v3236
      %v3238 = vsel %vm587, %v3042, 0.0
      %v3239 = vadd.f32 %v3237, %v3238
      %v3240 = vsel %vm587, %v3119, 0.0
      %v3241 = vadd.f32 %v3239, %v3240
      %v3242 = vpack.c.bf16 %v3151, %v3136
      %v3243 = vpack.c.bf16 %v3181, %v3166
      %v3244 = vpack.c.bf16 %v3211, %v3196
      %v3245 = vpack.c.bf16 %v3241, %v3226
      %v3246 = vld [vmem:[%s10] sm:$0xf]
      %v3247 = vld [vmem:[%s10 + $0x4] sm:$0xf]
      %v3248 = vld [vmem:[%s10 + $0x8] sm:$0xf]
      %v3249 = vld [vmem:[%s10 + $0xc] sm:$0xf]
      %v3250 = vld [vmem:[%s11] sm:$0x1]
      %v3252 = vlaneseq
      %v3253 = vshrl.u32 %v3252, 7
      %v3254 = vsub.s32 0, %v3253
      %v3255 = vrot.slane %v3250, %v3254
      %v3261 = vunpack.c.l.b16 %v3246
      %v3262 = vunpack.c.l.b16 %v3247
      %v3263 = vunpack.c.l.b16 %v3248
      %v3264 = vunpack.c.l.b16 %v3249
      %v3265 = vpack.c.b16 %v3262, %v3261
      %v3266 = vpack.c.b16 %v3264, %v3263
      %v3270 = vsel %vm587, %v3242, 0
      %v3273 = vsel %vm587, %v3243, 0
      %v3276 = vsel %vm587, %v3244, 0
      %v3279 = vsel %vm587, %v3245, 0
      %3281 = vmatprep.subr.bf16.mxu0 0
      %3282 = vmatpush1.bf16.msra.mxu0 0
      %3283 = vmatprep.subr.bf16.mxu0 0
      %3284 = vmatpush1.bf16.msra.mxu0 0
      %3285 = vmatprep.subr.bf16.mxu0 0
      %3286 = vmatpush1.bf16.msra.mxu0 0
      %3287 = vmatprep.subr.bf16.mxu0 0
      %3288 = vmatpush1.bf16.msra.mxu0 0
      %3289 = vmatprep.subr.bf16.mxu0 0
      %3290 = vmatpush1.bf16.msra.mxu0 0
      %3291 = vmatprep.subr.bf16.mxu0 0
      %3292 = vmatpush1.bf16.msra.mxu0 0
      %3293 = vmatprep.subr.bf16.mxu0 0
      %3294 = vmatpush1.bf16.msra.mxu0 %v3266
      %3295 = vmatprep.subr.bf16.mxu0 0
      %3296 = vmatpush1.bf16.msra.mxu0 %v3265
      %3297 = vmatprep.subr.bf16.mxu0 0
      %3298 = vmatpush2.bf16.msra.mxu0 0
      %3299 = vmatprep.subr.bf16.mxu0 0
      %3300 = vmatpush2.bf16.msra.mxu0 0
      %3301 = vmatprep.subr.bf16.mxu0 0
      %3302 = vmatpush2.bf16.msra.mxu0 0
      %3303 = vmatprep.subr.bf16.mxu0 0
      %3304 = vmatpush2.bf16.msra.mxu0 0
      %3305 = vmatprep.subr.bf16.mxu0 0
      %3306 = vmatpush2.bf16.msra.mxu0 0
      %3307 = vmatprep.subr.bf16.mxu0 0
      %3308 = vmatpush2.bf16.msra.mxu0 0
      %3309 = vmatprep.subr.bf16.mxu0 0
      %3310 = vmatpush2.bf16.msra.mxu0 0
      %3311 = vmatprep.subr.bf16.mxu0 0
      %3312 = vmatpush2.bf16.msra.mxu0 0
      %3313 = vmatprep.mubr.bf16.mxu0 0
      %3314 = vmatmul.mubr.bf16.gmra.mxu0 %v3270
      %v3315 = vpop.f32.mrf.mxu0
      %v3316 = vadd.f32 %v3255, %v3315
      %v3317 = vpop.f32.mrf.mxu0
      %v3318 = vpop.f32.mrf.mxu0
      %v3319 = vadd.f32 %v3255, %v3318
      %v3320 = vpop.f32.mrf.mxu0
      %3321 = vmatprep.mubr.bf16.mxu0 0
      %3322 = vmatmul.mubr.bf16.gmra.mxu0 %v3273
      %v3323 = vpop.f32.mrf.mxu0
      %v3324 = vadd.f32 %v3255, %v3323
      %v3325 = vpop.f32.mrf.mxu0
      %v3326 = vpop.f32.mrf.mxu0
      %v3327 = vadd.f32 %v3255, %v3326
      %v3328 = vpop.f32.mrf.mxu0
      %3329 = vmatprep.mubr.bf16.mxu0 0
      %3330 = vmatmul.mubr.bf16.gmra.mxu0 %v3276
      %v3331 = vpop.f32.mrf.mxu0
      %v3332 = vadd.f32 %v3255, %v3331
      %v3333 = vpop.f32.mrf.mxu0
      %v3334 = vpop.f32.mrf.mxu0
      %v3335 = vadd.f32 %v3255, %v3334
      %v3336 = vpop.f32.mrf.mxu0
      %3337 = vmatprep.mubr.bf16.mxu0 0
      %3338 = vmatmul.mubr.bf16.gmra.mxu0 %v3279
      %v3339 = vpop.f32.mrf.mxu0
      %v3340 = vadd.f32 %v3255, %v3339
      %v3341 = vpop.f32.mrf.mxu0
      %v3342 = vpop.f32.mrf.mxu0
      %v3343 = vadd.f32 %v3255, %v3342
      %v3344 = vpop.f32.mrf.mxu0
      %3345 = vdwg.mxu0
      %v3346 = vadd.f32 %v3316, %v577
      %v3347 = vadd.f32 %v3319, %v578
      %v3348 = vadd.f32 %v3324, %v579
      %v3349 = vadd.f32 %v3327, %v580
      %v3350 = vadd.f32 %v3332, %v581
      %v3351 = vadd.f32 %v3335, %v582
      %v3352 = vadd.f32 %v3340, %v583
      %v3353 = vadd.f32 %v3343, %v584
      %v3354 = vld [vmem:[%s12] sm:$0x1]
      %v3355 = vld [vmem:[%s13] sm:$0x1]
      %v3356 = vsel %vm587, %v3346, 0.0
      %3357 = vadd.xlane.f32.xlu0 %v3356
      %v3358 = vpop.xlane.xlu0 %3357
      %v3359 = vsel %vm587, %v3347, 0.0
      %3360 = vadd.xlane.f32.xlu0 %v3359
      %v3361 = vpop.xlane.xlu0 %3360
      %v3362 = vsel %vm587, %v3348, 0.0
      %3363 = vadd.xlane.f32.xlu0 %v3362
      %v3364 = vpop.xlane.xlu0 %3363
      %v3365 = vsel %vm587, %v3349, 0.0
      %3366 = vadd.xlane.f32.xlu0 %v3365
      %v3367 = vpop.xlane.xlu0 %3366
      %v3368 = vsel %vm587, %v3350, 0.0
      %3369 = vadd.xlane.f32.xlu0 %v3368
      %v3370 = vpop.xlane.xlu0 %3369
      %v3371 = vsel %vm587, %v3351, 0.0
      %3372 = vadd.xlane.f32.xlu0 %v3371
      %v3373 = vpop.xlane.xlu0 %3372
      %v3374 = vsel %vm587, %v3352, 0.0
      %3375 = vadd.xlane.f32.xlu0 %v3374
      %v3376 = vpop.xlane.xlu0 %3375
      %v3377 = vsel %vm587, %v3353, 0.0
      %3378 = vadd.xlane.f32.xlu0 %v3377
      %v3379 = vpop.xlane.xlu0 %3378
      %v3380 = vmul.f32 %v3358, %v612
      %v3381 = vmul.f32 %v3361, %v612
      %v3382 = vmul.f32 %v3364, %v612
      %v3383 = vmul.f32 %v3367, %v612
      %v3384 = vmul.f32 %v3370, %v612
      %v3385 = vmul.f32 %v3373, %v612
      %v3386 = vmul.f32 %v3376, %v612
      %v3387 = vmul.f32 %v3379, %v612
      %v3388 = vsub.f32 %v3346, %v3380
      %v3389 = vsub.f32 %v3347, %v3381
      %v3390 = vsub.f32 %v3348, %v3382
      %v3391 = vsub.f32 %v3349, %v3383
      %v3392 = vsub.f32 %v3350, %v3384
      %v3393 = vsub.f32 %v3351, %v3385
      %v3394 = vsub.f32 %v3352, %v3386
      %v3395 = vsub.f32 %v3353, %v3387
      %v3396 = vmul.f32 %v3388, %v3388
      %v3397 = vmul.f32 %v3389, %v3389
      %v3398 = vmul.f32 %v3390, %v3390
      %v3399 = vmul.f32 %v3391, %v3391
      %v3400 = vmul.f32 %v3392, %v3392
      %v3401 = vmul.f32 %v3393, %v3393
      %v3402 = vmul.f32 %v3394, %v3394
      %v3403 = vmul.f32 %v3395, %v3395
      %v3404 = vsel %vm587, %v3396, 0.0
      %3405 = vadd.xlane.f32.xlu0 %v3404
      %v3406 = vpop.xlane.xlu0 %3405
      %v3407 = vsel %vm587, %v3397, 0.0
      %3408 = vadd.xlane.f32.xlu0 %v3407
      %v3409 = vpop.xlane.xlu0 %3408
      %v3410 = vsel %vm587, %v3398, 0.0
      %3411 = vadd.xlane.f32.xlu0 %v3410
      %v3412 = vpop.xlane.xlu0 %3411
      %v3413 = vsel %vm587, %v3399, 0.0
      %3414 = vadd.xlane.f32.xlu0 %v3413
      %v3415 = vpop.xlane.xlu0 %3414
      %v3416 = vsel %vm587, %v3400, 0.0
      %3417 = vadd.xlane.f32.xlu0 %v3416
      %v3418 = vpop.xlane.xlu0 %3417
      %v3419 = vsel %vm587, %v3401, 0.0
      %3420 = vadd.xlane.f32.xlu0 %v3419
      %v3421 = vpop.xlane.xlu0 %3420
      %v3422 = vsel %vm587, %v3402, 0.0
      %3423 = vadd.xlane.f32.xlu0 %v3422
      %v3424 = vpop.xlane.xlu0 %3423
      %v3425 = vsel %vm587, %v3403, 0.0
      %3426 = vadd.xlane.f32.xlu0 %v3425
      %v3427 = vpop.xlane.xlu0 %3426
      %v3428 = vmul.f32 %v3406, %v612
      %v3429 = vmul.f32 %v3409, %v612
      %v3430 = vmul.f32 %v3412, %v612
      %v3431 = vmul.f32 %v3415, %v612
      %v3432 = vmul.f32 %v3418, %v612
      %v3433 = vmul.f32 %v3421, %v612
      %v3434 = vmul.f32 %v3424, %v612
      %v3435 = vmul.f32 %v3427, %v612
      %v3436 = vadd.f32 %v3428, 1e-05
      %v3437 = vadd.f32 %v3429, 1e-05
      %v3438 = vadd.f32 %v3430, 1e-05
      %v3439 = vadd.f32 %v3431, 1e-05
      %v3440 = vadd.f32 %v3432, 1e-05
      %v3441 = vadd.f32 %v3433, 1e-05
      %v3442 = vadd.f32 %v3434, 1e-05
      %v3443 = vadd.f32 %v3435, 1e-05
      %v3444 = vrsqrt.pop %v3436
      %v3445 = vrsqrt.pop %v3437
      %v3446 = vrsqrt.pop %v3438
      %v3447 = vrsqrt.pop %v3439
      %v3448 = vrsqrt.pop %v3440
      %v3449 = vrsqrt.pop %v3441
      %v3450 = vrsqrt.pop %v3442
      %v3451 = vrsqrt.pop %v3443
      %v3452 = vmul.f32 %v3388, %v3444
      %v3453 = vmul.f32 %v3389, %v3445
      %v3454 = vmul.f32 %v3390, %v3446
      %v3455 = vmul.f32 %v3391, %v3447
      %v3456 = vmul.f32 %v3392, %v3448
      %v3457 = vmul.f32 %v3393, %v3449
      %v3458 = vmul.f32 %v3394, %v3450
      %v3459 = vmul.f32 %v3395, %v3451
      %v3461 = vlaneseq
      %v3462 = vshrl.u32 %v3461, 7
      %v3463 = vsub.s32 0, %v3462
      %v3464 = vrot.slane %v3354, %v3463
      %v3466 = vmul.f32 %v3452, %v3464
      %v3467 = vmul.f32 %v3453, %v3464
      %v3468 = vmul.f32 %v3454, %v3464
      %v3469 = vmul.f32 %v3455, %v3464
      %v3470 = vmul.f32 %v3456, %v3464
      %v3471 = vmul.f32 %v3457, %v3464
      %v3472 = vmul.f32 %v3458, %v3464
      %v3473 = vmul.f32 %v3459, %v3464
      %v3475 = vlaneseq
      %v3476 = vshrl.u32 %v3475, 7
      %v3477 = vsub.s32 0, %v3476
      %v3478 = vrot.slane %v3355, %v3477
      %v3480 = vadd.f32 %v3466, %v3478
      %v3481 = vadd.f32 %v3467, %v3478
      %v3482 = vadd.f32 %v3468, %v3478
      %v3483 = vadd.f32 %v3469, %v3478
      %v3484 = vadd.f32 %v3470, %v3478
      %v3485 = vadd.f32 %v3471, %v3478
      %v3486 = vadd.f32 %v3472, %v3478
      %v3487 = vadd.f32 %v3473, %v3478
      %v3488 = vpack.c.bf16 %v3481, %v3480
      %v3489 = vpack.c.bf16 %v3483, %v3482
      %v3490 = vpack.c.bf16 %v3485, %v3484
      %v3491 = vpack.c.bf16 %v3487, %v3486
      %v3492 = vld [vmem:[%s14] sm:$0xf]
      %v3493 = vld [vmem:[%s14 + $0x4] sm:$0xf]
      %v3494 = vld [vmem:[%s14 + $0x8] sm:$0xf]
      %v3495 = vld [vmem:[%s14 + $0xc] sm:$0xf]
      %v3496 = vld [vmem:[%s15] sm:$0x1]
      %v3498 = vlaneseq
      %v3499 = vshrl.u32 %v3498, 7
      %v3500 = vsub.s32 0, %v3499
      %v3501 = vrot.slane %v3496, %v3500
      %v3507 = vunpack.c.l.b16 %v3492
      %v3508 = vunpack.c.l.b16 %v3493
      %v3509 = vunpack.c.l.b16 %v3494
      %v3510 = vunpack.c.l.b16 %v3495
      %v3511 = vpack.c.b16 %v3508, %v3507
      %v3512 = vpack.c.b16 %v3510, %v3509
      %v3516 = vsel %vm587, %v3488, 0
      %v3519 = vsel %vm587, %v3489, 0
      %v3522 = vsel %vm587, %v3490, 0
      %v3525 = vsel %vm587, %v3491, 0
      %3527 = vmatprep.subr.bf16.mxu0 0
      %3528 = vmatpush1.bf16.msra.mxu0 0
      %3529 = vmatprep.subr.bf16.mxu0 0
      %3530 = vmatpush1.bf16.msra.mxu0 0
      %3531 = vmatprep.subr.bf16.mxu0 0
      %3532 = vmatpush1.bf16.msra.mxu0 0
      %3533 = vmatprep.subr.bf16.mxu0 0
      %3534 = vmatpush1.bf16.msra.mxu0 0
      %3535 = vmatprep.subr.bf16.mxu0 0
      %3536 = vmatpush1.bf16.msra.mxu0 0
      %3537 = vmatprep.subr.bf16.mxu0 0
      %3538 = vmatpush1.bf16.msra.mxu0 0
      %3539 = vmatprep.subr.bf16.mxu0 0
      %3540 = vmatpush1.bf16.msra.mxu0 %v3512
      %3541 = vmatprep.subr.bf16.mxu0 0
      %3542 = vmatpush1.bf16.msra.mxu0 %v3511
      %3543 = vmatprep.subr.bf16.mxu0 0
      %3544 = vmatpush2.bf16.msra.mxu0 0
      %3545 = vmatprep.subr.bf16.mxu0 0
      %3546 = vmatpush2.bf16.msra.mxu0 0
      %3547 = vmatprep.subr.bf16.mxu0 0
      %3548 = vmatpush2.bf16.msra.mxu0 0
      %3549 = vmatprep.subr.bf16.mxu0 0
      %3550 = vmatpush2.bf16.msra.mxu0 0
      %3551 = vmatprep.subr.bf16.mxu0 0
      %3552 = vmatpush2.bf16.msra.mxu0 0
      %3553 = vmatprep.subr.bf16.mxu0 0
      %3554 = vmatpush2.bf16.msra.mxu0 0
      %3555 = vmatprep.subr.bf16.mxu0 0
      %3556 = vmatpush2.bf16.msra.mxu0 0
      %3557 = vmatprep.subr.bf16.mxu0 0
      %3558 = vmatpush2.bf16.msra.mxu0 0
      %3559 = vmatprep.mubr.bf16.mxu0 0
      %3560 = vmatmul.mubr.bf16.gmra.mxu0 %v3516
      %v3561 = vpop.f32.mrf.mxu0
      %v3562 = vadd.f32 %v3501, %v3561
      %v3563 = vpop.f32.mrf.mxu0
      %v3564 = vpop.f32.mrf.mxu0
      %v3565 = vadd.f32 %v3501, %v3564
      %v3566 = vpop.f32.mrf.mxu0
      %3567 = vmatprep.mubr.bf16.mxu0 0
      %3568 = vmatmul.mubr.bf16.gmra.mxu0 %v3519
      %v3569 = vpop.f32.mrf.mxu0
      %v3570 = vadd.f32 %v3501, %v3569
      %v3571 = vpop.f32.mrf.mxu0
      %v3572 = vpop.f32.mrf.mxu0
      %v3573 = vadd.f32 %v3501, %v3572
      %v3574 = vpop.f32.mrf.mxu0
      %3575 = vmatprep.mubr.bf16.mxu0 0
      %3576 = vmatmul.mubr.bf16.gmra.mxu0 %v3522
      %v3577 = vpop.f32.mrf.mxu0
      %v3578 = vadd.f32 %v3501, %v3577
      %v3579 = vpop.f32.mrf.mxu0
      %v3580 = vpop.f32.mrf.mxu0
      %v3581 = vadd.f32 %v3501, %v3580
      %v3582 = vpop.f32.mrf.mxu0
      %3583 = vmatprep.mubr.bf16.mxu0 0
      %3584 = vmatmul.mubr.bf16.gmra.mxu0 %v3525
      %v3585 = vpop.f32.mrf.mxu0
      %v3586 = vadd.f32 %v3501, %v3585
      %v3587 = vpop.f32.mrf.mxu0
      %v3588 = vpop.f32.mrf.mxu0
      %v3589 = vadd.f32 %v3501, %v3588
      %v3590 = vpop.f32.mrf.mxu0
      %3591 = vdwg.mxu0
      %v3592 = vmul.f32 %v3562, 0.5
      %v3593 = vmul.f32 %v3565, 0.5
      %v3594 = vmul.f32 %v3570, 0.5
      %v3595 = vmul.f32 %v3573, 0.5
      %v3596 = vmul.f32 %v3578, 0.5
      %v3597 = vmul.f32 %v3581, 0.5
      %v3598 = vmul.f32 %v3586, 0.5
      %v3599 = vmul.f32 %v3589, 0.5
      %v3600 = vmul.f32 %v3562, 0.70710677
      %v3601 = vmul.f32 %v3565, 0.70710677
      %v3602 = vmul.f32 %v3570, 0.70710677
      %v3603 = vmul.f32 %v3573, 0.70710677
      %v3604 = vmul.f32 %v3578, 0.70710677
      %v3605 = vmul.f32 %v3581, 0.70710677
      %v3606 = vmul.f32 %v3586, 0.70710677
      %v3607 = vmul.f32 %v3589, 0.70710677
      %v3608 = verf.f32.pop %v3600
      %v3609 = verf.f32.pop %v3601
      %v3610 = verf.f32.pop %v3602
      %v3611 = verf.f32.pop %v3603
      %v3612 = verf.f32.pop %v3604
      %v3613 = verf.f32.pop %v3605
      %v3614 = verf.f32.pop %v3606
      %v3615 = verf.f32.pop %v3607
      %v3616 = vadd.f32 %v3608, 1.0
      %v3617 = vadd.f32 %v3609, 1.0
      %v3618 = vadd.f32 %v3610, 1.0
      %v3619 = vadd.f32 %v3611, 1.0
      %v3620 = vadd.f32 %v3612, 1.0
      %v3621 = vadd.f32 %v3613, 1.0
      %v3622 = vadd.f32 %v3614, 1.0
      %v3623 = vadd.f32 %v3615, 1.0
      %v3624 = vmul.f32 %v3592, %v3616
      %v3625 = vmul.f32 %v3593, %v3617
      %v3626 = vmul.f32 %v3594, %v3618
      %v3627 = vmul.f32 %v3595, %v3619
      %v3628 = vmul.f32 %v3596, %v3620
      %v3629 = vmul.f32 %v3597, %v3621
      %v3630 = vmul.f32 %v3598, %v3622
      %v3631 = vmul.f32 %v3599, %v3623
      %v3632 = vpack.c.bf16 %v3625, %v3624
      %v3633 = vpack.c.bf16 %v3627, %v3626
      %v3634 = vpack.c.bf16 %v3629, %v3628
      %v3635 = vpack.c.bf16 %v3631, %v3630
      %v3636 = vld [vmem:[%s16] sm:$0xf]
      %v3637 = vld [vmem:[%s16 + $0x4] sm:$0xf]
      %v3638 = vld [vmem:[%s16 + $0x8] sm:$0xf]
      %v3639 = vld [vmem:[%s16 + $0xc] sm:$0xf]
      %v3640 = vld [vmem:[%s17] sm:$0x1]
      %v3642 = vlaneseq
      %v3643 = vshrl.u32 %v3642, 7
      %v3644 = vsub.s32 0, %v3643
      %v3645 = vrot.slane %v3640, %v3644
      %v3651 = vunpack.c.l.b16 %v3636
      %v3652 = vunpack.c.l.b16 %v3637
      %v3653 = vunpack.c.l.b16 %v3638
      %v3654 = vunpack.c.l.b16 %v3639
      %v3655 = vpack.c.b16 %v3652, %v3651
      %v3656 = vpack.c.b16 %v3654, %v3653
      %v3660 = vsel %vm587, %v3632, 0
      %v3663 = vsel %vm587, %v3633, 0
      %v3666 = vsel %vm587, %v3634, 0
      %v3669 = vsel %vm587, %v3635, 0
      %3671 = vmatprep.subr.bf16.mxu0 0
      %3672 = vmatpush1.bf16.msra.mxu0 0
      %3673 = vmatprep.subr.bf16.mxu0 0
      %3674 = vmatpush1.bf16.msra.mxu0 0
      %3675 = vmatprep.subr.bf16.mxu0 0
      %3676 = vmatpush1.bf16.msra.mxu0 0
      %3677 = vmatprep.subr.bf16.mxu0 0
      %3678 = vmatpush1.bf16.msra.mxu0 0
      %3679 = vmatprep.subr.bf16.mxu0 0
      %3680 = vmatpush1.bf16.msra.mxu0 0
      %3681 = vmatprep.subr.bf16.mxu0 0
      %3682 = vmatpush1.bf16.msra.mxu0 0
      %3683 = vmatprep.subr.bf16.mxu0 0
      %3684 = vmatpush1.bf16.msra.mxu0 %v3656
      %3685 = vmatprep.subr.bf16.mxu0 0
      %3686 = vmatpush1.bf16.msra.mxu0 %v3655
      %3687 = vmatprep.subr.bf16.mxu0 0
      %3688 = vmatpush2.bf16.msra.mxu0 0
      %3689 = vmatprep.subr.bf16.mxu0 0
      %3690 = vmatpush2.bf16.msra.mxu0 0
      %3691 = vmatprep.subr.bf16.mxu0 0
      %3692 = vmatpush2.bf16.msra.mxu0 0
      %3693 = vmatprep.subr.bf16.mxu0 0
      %3694 = vmatpush2.bf16.msra.mxu0 0
      %3695 = vmatprep.subr.bf16.mxu0 0
      %3696 = vmatpush2.bf16.msra.mxu0 0
      %3697 = vmatprep.subr.bf16.mxu0 0
      %3698 = vmatpush2.bf16.msra.mxu0 0
      %3699 = vmatprep.subr.bf16.mxu0 0
      %3700 = vmatpush2.bf16.msra.mxu0 0
      %3701 = vmatprep.subr.bf16.mxu0 0
      %3702 = vmatpush2.bf16.msra.mxu0 0
      %3703 = vmatprep.mubr.bf16.mxu0 0
      %3704 = vmatmul.mubr.bf16.gmra.mxu0 %v3660
      %v3705 = vpop.f32.mrf.mxu0
      %v3706 = vadd.f32 %v3645, %v3705
      %v3707 = vpop.f32.mrf.mxu0
      %v3708 = vpop.f32.mrf.mxu0
      %v3709 = vadd.f32 %v3645, %v3708
      %v3710 = vpop.f32.mrf.mxu0
      %3711 = vmatprep.mubr.bf16.mxu0 0
      %3712 = vmatmul.mubr.bf16.gmra.mxu0 %v3663
      %v3713 = vpop.f32.mrf.mxu0
      %v3714 = vadd.f32 %v3645, %v3713
      %v3715 = vpop.f32.mrf.mxu0
      %v3716 = vpop.f32.mrf.mxu0
      %v3717 = vadd.f32 %v3645, %v3716
      %v3718 = vpop.f32.mrf.mxu0
      %3719 = vmatprep.mubr.bf16.mxu0 0
      %3720 = vmatmul.mubr.bf16.gmra.mxu0 %v3666
      %v3721 = vpop.f32.mrf.mxu0
      %v3722 = vadd.f32 %v3645, %v3721
      %v3723 = vpop.f32.mrf.mxu0
      %v3724 = vpop.f32.mrf.mxu0
      %v3725 = vadd.f32 %v3645, %v3724
      %v3726 = vpop.f32.mrf.mxu0
      %3727 = vmatprep.mubr.bf16.mxu0 0
      %3728 = vmatmul.mubr.bf16.gmra.mxu0 %v3669
      %v3729 = vpop.f32.mrf.mxu0
      %v3730 = vadd.f32 %v3645, %v3729
      %v3731 = vpop.f32.mrf.mxu0
      %v3732 = vpop.f32.mrf.mxu0
      %v3733 = vadd.f32 %v3645, %v3732
      %v3734 = vpop.f32.mrf.mxu0
      %3735 = vdwg.mxu0
      %v3736 = vadd.f32 %v3706, %v3346
      %v3737 = vadd.f32 %v3709, %v3347
      %v3738 = vadd.f32 %v3714, %v3348
      %v3739 = vadd.f32 %v3717, %v3349
      %v3740 = vadd.f32 %v3722, %v3350
      %v3741 = vadd.f32 %v3725, %v3351
      %v3742 = vadd.f32 %v3730, %v3352
      %v3743 = vadd.f32 %v3733, %v3353
      %3744 = vst.msk [vmem:[%s575] sm:$0xff] %vm587, %v3736
      %3745 = vst.msk [vmem:[%s575 + $0x8] sm:$0xff] %vm587, %v3737
      %3746 = vst.msk [vmem:[%s575 + $0x10] sm:$0xff] %vm587, %v3738
      %3747 = vst.msk [vmem:[%s575 + $0x18] sm:$0xff] %vm587, %v3739
      %3748 = vst.msk [vmem:[%s575 + $0x20] sm:$0xff] %vm587, %v3740
      %3749 = vst.msk [vmem:[%s575 + $0x28] sm:$0xff] %vm587, %v3741
      %3750 = vst.msk [vmem:[%s575 + $0x30] sm:$0xff] %vm587, %v3742
      %3751 = vst.msk [vmem:[%s575 + $0x38] sm:$0xff] %vm587, %v3743
      %p3752 = scmp.lt.s32.totalorder %s29, 1
      %s3753 = scalar_select %p3752, %s29, 1
      %s3754 = smul.addr %s3753, 8
      %s3755 = smul.addr %s3754, 8
      %s3756 = scalar_lea.vmem %s18, %s3755
      // Predicated region
      $region93: #{tpu_custom_call.1} parent=91 // pred_check
        %p3757 = pneg %p430
      $region94: #{tpu_custom_call.1} parent=91 // pred_check_branch
        %3759 = sbr.rel (%p3757) target = $region96
      $region95: #{tpu_custom_call.1} parent=91 // pred_region
        _
      $region96: #{tpu_custom_call.1} parent=91 // pred_fallthru
        _
    $region92: #{tpu_custom_call.1} parent=5 // pred_fallthru
      _
    %p3760 = scmp.le.s32.totalorder 2, %s24
    // Predicated region
    $region97: #{tpu_custom_call.1} parent=5 // pred_check
      %p3761 = pneg %p3760
    $region98: #{tpu_custom_call.1} parent=5 // pred_check_branch
      %3763 = sbr.rel (%p3761) target = $region100
    $region99: #{tpu_custom_call.1} parent=5 // pred_region
      %s3764 = ssub.s32 %s24, 2
      // Predicated region
      $region101: #{tpu_custom_call.1} parent=99 // pred_check
        %p3765 = pneg %p436
      $region102: #{tpu_custom_call.1} parent=99 // pred_check_branch
        %3767 = sbr.rel (%p3765) target = $region104
      $region103: #{tpu_custom_call.1} parent=99 // pred_region
        %p3768 = scmp.lt.s32.totalorder %s30, 1
        %s3769 = scalar_select %p3768, %s30, 1
        %s3770 = smul.addr %s3769, 8
        %s3771 = smul.addr %s3770, 8
        %s3772 = scalar_lea.vmem %s18, %s3771
      $region104: #{tpu_custom_call.1} parent=99 // pred_fallthru
        _
    $region100: #{tpu_custom_call.1} parent=5 // pred_fallthru
      _
  $region6: #{tpu_custom_call.1} parent=0 // loop_footer
    %s28 = sadd.s32 1, %s24
  $region7: #{tpu_custom_call.1} parent=0 // loop_footer_branch
    %23 = sbr.rel target = $region3
  $region8: #{tpu_custom_call.1} parent=0 // loop_exit
    _

</llo_original>
